<compile_context>
chip_gen: v7x
topology: tpu7x:2x2x1
jax: 0.10.0
libtpu: 0.0.40
codegen_flags: <defaults>
</compile_context>

<pallas_src>
import functools
import math

import jax
import jax.numpy as jnp
from jax import lax
from jax.experimental import pallas as pl
from jax.experimental.pallas import tpu as pltpu

# ----------------------------- model dims -----------------------------------
INPUT_DIM = 16
MLP_DIM = 64          # mlp=[64]
HIDDEN = 128          # fc[0]
OUT_DIM = 40          # fc[1]
NUM_LAYERS = 2
MAXOUT = 1
BN_EPS = 1e-5

VMEM_SPEC = pl.BlockSpec(memory_space=pltpu.MemorySpace.VMEM)


# ----------------------------- fused kernel ----------------------------------
def fused_kernel(x_ref,                 # (T*B, D_in)  time-major flattened input
                 conv_w_ref,            # (D_in, MLP_DIM)
                 conv_b_ref,            # (1, MLP_DIM)
                 gamma_ref, beta_ref,   # (1, MLP_DIM)
                 wih0_ref,              # (MLP_DIM, 4H)
                 whh0_ref,              # (H, 4H)
                 b0_ref,                # (1, 4H)   b_ih0 + b_hh0
                 w1cat_ref,             # (2H, 4H)  [Wih1^T ; Whh1^T]
                 b1_ref,                # (1, 4H)   b_ih1 + b_hh1
                 fcw_ref,               # (H, OUT_DIM)
                 fcb_ref,               # (1, OUT_DIM)
                 o_ref,                 # (B, OUT_DIM)
                 *, batch, seq_len, maxout):
    B, T, H = batch, seq_len, HIDDEN

    # --- MLP: Conv1d(k=1) + BatchNorm1d(train-mode batch stats) + ReLU ----------
    y = jnp.dot(x_ref[...], conv_w_ref[...],
                preferred_element_type=jnp.float32) + conv_b_ref[...]      # (T*B, C)
    mean = jnp.mean(y, axis=0, keepdims=True)
    mean_sq = jnp.mean(y * y, axis=0, keepdims=True)
    var = mean_sq - mean * mean                       # biased variance (one pass)
    scale = gamma_ref[...] * lax.rsqrt(var + BN_EPS)  # fold gamma into scale
    shift = beta_ref[...] - mean * scale
    feat = jnp.maximum(y * scale + shift, 0.0)        # (T*B, MLP_DIM)

    # --- layer-0 input GEMM hoisted off the serial recurrence -------------------
    gin0 = jnp.dot(feat, wih0_ref[...],
                   preferred_element_type=jnp.float32) + b0_ref[...]       # (T*B, 4H)

    whh0 = whh0_ref[...]                               # (H, 4H)
    w1cat = w1cat_ref[...]                             # (2H, 4H)
    b1b = jnp.broadcast_to(b1_ref[...], (B, 4 * H))    # hoisted bias broadcast

    def gate_nonlin(g, c):
        # PyTorch gate order (i, f, g, o)
        i = jax.nn.sigmoid(g[:, 0:H])
        f = jax.nn.sigmoid(g[:, H:2 * H])
        gg = jnp.tanh(g[:, 2 * H:3 * H])
        o = jax.nn.sigmoid(g[:, 3 * H:4 * H])
        c_new = f * c + i * gg
        h_new = o * jnp.tanh(c_new)
        return h_new, c_new

    h0 = jnp.zeros((B, H), jnp.float32)
    c0 = jnp.zeros((B, H), jnp.float32)
    h1 = jnp.zeros((B, H), jnp.float32)
    c1 = jnp.zeros((B, H), jnp.float32)
    mx = jnp.full((B, H), -jnp.inf, jnp.float32)

    # fully unrolled recurrence (T is small & static) -> static slices, LLO overlap
    for t in range(T):
        g0 = gin0[t * B:(t + 1) * B, :] + jnp.dot(
            h0, whh0, preferred_element_type=jnp.float32)
        h0, c0 = gate_nonlin(g0, c0)

        # single fused matmul for layer 1: [h0_new, h1_prev] @ [Wih1; Whh1]
        inp1 = jnp.concatenate([h0, h1], axis=-1)                     # (B, 2H)
        g1 = jnp.dot(inp1, w1cat, preferred_element_type=jnp.float32) + b1b
        h1, c1 = gate_nonlin(g1, c1)

        mx = jnp.maximum(mx, h1)                       # running max-over-time

    head_in = mx if maxout == 1 else h1                # maxout==0 -> last timestep
    o_ref[...] = (jnp.dot(head_in, fcw_ref[...],
                          preferred_element_type=jnp.float32) + fcb_ref[...])


# ----------------------------- wrapper ---------------------------------------
def lstm_mlp_forward(x, params, maxout=MAXOUT):
    B, T, D = x.shape
    f32 = jnp.float32

    # transpose the *raw* (tiny) input to time-major once; everything else fused
    x_tm = x.transpose(1, 0, 2).reshape(T * B, D)

    out = pl.pallas_call(
        functools.partial(fused_kernel, batch=B, seq_len=T, maxout=maxout),
        out_shape=jax.ShapeDtypeStruct((B, OUT_DIM), f32),
        in_specs=[VMEM_SPEC] * 12,
        out_specs=VMEM_SPEC,
        compiler_params=pltpu.CompilerParams(),
    )(x_tm,
      params["conv_w_t"], params["conv_b"], params["bn_gamma"], params["bn_beta"],
      params["wih0_t"], params["whh0_t"], params["b0"],
      params["w1_cat"], params["b1"],
      params["fc_w_t"], params["fc_b"])
    return out


# ----------------------------- params ----------------------------------------
def init_params(key):
    f32 = jnp.float32

    def uniform(key, shape, fan_in):
        k = 1.0 / math.sqrt(fan_in)
        return jax.random.uniform(key, shape, dtype=f32, minval=-k, maxval=k)

    keys = jax.random.split(key, 12)
    p = {}
    # Conv1d(INPUT_DIM, MLP_DIM, 1): weight (MLP_DIM, INPUT_DIM, 1) -> transposed (INPUT_DIM, MLP_DIM)
    p["conv_w_t"] = uniform(keys[0], (INPUT_DIM, MLP_DIM), INPUT_DIM)
    p["conv_b"] = uniform(keys[1], (1, MLP_DIM), INPUT_DIM)
    # BatchNorm1d(MLP_DIM)
    p["bn_gamma"] = jnp.ones((1, MLP_DIM), f32)
    p["bn_beta"] = jnp.zeros((1, MLP_DIM), f32)
    # LSTM layer 0: weight_ih (4H, MLP_DIM), weight_hh (4H, H), biases (4H,)
    p["wih0_t"] = uniform(keys[2], (MLP_DIM, 4 * HIDDEN), HIDDEN)
    p["whh0_t"] = uniform(keys[3], (HIDDEN, 4 * HIDDEN), HIDDEN)
    p["b0"] = (uniform(keys[4], (1, 4 * HIDDEN), HIDDEN)
               + uniform(keys[5], (1, 4 * HIDDEN), HIDDEN))    # b_ih + b_hh combined
    # LSTM layer 1 (input and recurrent weights pre-concatenated -> one matmul/step)
    wih1_t = uniform(keys[6], (HIDDEN, 4 * HIDDEN), HIDDEN)
    whh1_t = uniform(keys[7], (HIDDEN, 4 * HIDDEN), HIDDEN)
    p["w1_cat"] = jnp.concatenate([wih1_t, whh1_t], axis=0)     # (2H, 4H)
    p["b1"] = (uniform(keys[8], (1, 4 * HIDDEN), HIDDEN)
               + uniform(keys[9], (1, 4 * HIDDEN), HIDDEN))
    # Linear(HIDDEN, OUT_DIM)
    p["fc_w_t"] = uniform(keys[10], (HIDDEN, OUT_DIM), HIDDEN)
    p["fc_b"] = uniform(keys[11], (1, OUT_DIM), HIDDEN)
    return p


# ----------------------------- main -------------------------------------------
if __name__ == "__main__":
    key = jax.random.PRNGKey(0)
    k_x, k_p = jax.random.split(key)

    B, T = 2, 8
    x = jax.random.normal(k_x, (B, T, INPUT_DIM), dtype=jnp.float32)
    params = init_params(k_p)

    fwd = jax.jit(functools.partial(lstm_mlp_forward, maxout=MAXOUT))
    out = fwd(x, params)
    out = jax.block_until_ready(out)

    assert out.shape == (B, OUT_DIM), out.shape
    assert jnp.all(jnp.isfinite(out))
    print("KERNEL_OK")
</pallas_src>

<mosaic_0001>
module attributes {stable_mosaic.version = 11 : i64} {
  func.func @fused_kernel(%arg0: memref<16x16xf32, #tpu.memory_space<vmem>>, %arg1: memref<16x64xf32, #tpu.memory_space<vmem>>, %arg2: memref<1x64xf32, #tpu.memory_space<vmem>>, %arg3: memref<1x64xf32, #tpu.memory_space<vmem>>, %arg4: memref<1x64xf32, #tpu.memory_space<vmem>>, %arg5: memref<64x512xf32, #tpu.memory_space<vmem>>, %arg6: memref<128x512xf32, #tpu.memory_space<vmem>>, %arg7: memref<1x512xf32, #tpu.memory_space<vmem>>, %arg8: memref<256x512xf32, #tpu.memory_space<vmem>>, %arg9: memref<1x512xf32, #tpu.memory_space<vmem>>, %arg10: memref<128x40xf32, #tpu.memory_space<vmem>>, %arg11: memref<1x40xf32, #tpu.memory_space<vmem>>, %arg12: memref<2x40xf32, #tpu.memory_space<vmem>>) attributes {dimension_semantics = [], scalar_prefetch = 0 : i64, scratch_operands = 0 : i64, tpu.core_type = #tpu.core_type<tc>} {
    %c0 = arith.constant 0 : index
    %c0_0 = arith.constant 0 : index
    %0 = vector.load %arg0[%c0, %c0_0] : memref<16x16xf32, #tpu.memory_space<vmem>>, vector<16x16xf32>
    %c0_1 = arith.constant 0 : index
    %c0_2 = arith.constant 0 : index
    %1 = vector.load %arg1[%c0_1, %c0_2] : memref<16x64xf32, #tpu.memory_space<vmem>>, vector<16x64xf32>
    %cst = arith.constant dense<0.000000e+00> : vector<16x64xf32>
    %2 = tpu.matmul %0, %1, %cst {dimension_numbers = #tpu.dot_dimension_numbers<[1], [0], [0], [1], [0, 0, 1, 1], [], []>} : vector<16x16xf32>, vector<16x64xf32>, vector<16x64xf32> -> vector<16x64xf32>
    %c0_3 = arith.constant 0 : index
    %c0_4 = arith.constant 0 : index
    %3 = vector.load %arg2[%c0_3, %c0_4] : memref<1x64xf32, #tpu.memory_space<vmem>>, vector<1x64xf32>
    %4 = vector.broadcast %3 : vector<1x64xf32> to vector<16x64xf32>
    %5 = arith.addf %2, %4 : vector<16x64xf32>
    %cst_5 = arith.constant dense<0.000000e+00> : vector<64xf32>
    %6 = vector.multi_reduction <add>, %5, %cst_5 [0] : vector<16x64xf32> to vector<64xf32>
    %7 = vector.shape_cast %6 : vector<64xf32> to vector<1x64xf32>
    %cst_6 = arith.constant 1.600000e+01 : f32
    %8 = vector.broadcast %cst_6 : f32 to vector<1x64xf32>
    %9 = arith.divf %7, %8 : vector<1x64xf32>
    %10 = arith.mulf %5, %5 : vector<16x64xf32>
    %cst_7 = arith.constant dense<0.000000e+00> : vector<64xf32>
    %11 = vector.multi_reduction <add>, %10, %cst_7 [0] : vector<16x64xf32> to vector<64xf32>
    %12 = vector.shape_cast %11 : vector<64xf32> to vector<1x64xf32>
    %cst_8 = arith.constant 1.600000e+01 : f32
    %13 = vector.broadcast %cst_8 : f32 to vector<1x64xf32>
    %14 = arith.divf %12, %13 : vector<1x64xf32>
    %15 = arith.mulf %9, %9 : vector<1x64xf32>
    %16 = arith.subf %14, %15 : vector<1x64xf32>
    %c0_9 = arith.constant 0 : index
    %c0_10 = arith.constant 0 : index
    %17 = vector.load %arg3[%c0_9, %c0_10] : memref<1x64xf32, #tpu.memory_space<vmem>>, vector<1x64xf32>
    %cst_11 = arith.constant 9.99999974E-6 : f32
    %18 = vector.broadcast %cst_11 : f32 to vector<1x64xf32>
    %19 = arith.addf %16, %18 : vector<1x64xf32>
    %20 = math.rsqrt %19 : vector<1x64xf32>
    %21 = arith.mulf %17, %20 : vector<1x64xf32>
    %c0_12 = arith.constant 0 : index
    %c0_13 = arith.constant 0 : index
    %22 = vector.load %arg4[%c0_12, %c0_13] : memref<1x64xf32, #tpu.memory_space<vmem>>, vector<1x64xf32>
    %23 = arith.mulf %9, %21 : vector<1x64xf32>
    %24 = arith.subf %22, %23 : vector<1x64xf32>
    %25 = vector.broadcast %21 : vector<1x64xf32> to vector<16x64xf32>
    %26 = arith.mulf %5, %25 : vector<16x64xf32>
    %27 = vector.broadcast %24 : vector<1x64xf32> to vector<16x64xf32>
    %28 = arith.addf %26, %27 : vector<16x64xf32>
    %cst_14 = arith.constant 0.000000e+00 : f32
    %29 = vector.broadcast %cst_14 : f32 to vector<16x64xf32>
    %30 = arith.maximumf %28, %29 : vector<16x64xf32>
    %c0_15 = arith.constant 0 : index
    %c0_16 = arith.constant 0 : index
    %31 = vector.load %arg5[%c0_15, %c0_16] : memref<64x512xf32, #tpu.memory_space<vmem>>, vector<64x512xf32>
    %cst_17 = arith.constant dense<0.000000e+00> : vector<16x512xf32>
    %32 = tpu.matmul %30, %31, %cst_17 {dimension_numbers = #tpu.dot_dimension_numbers<[1], [0], [0], [1], [0, 0, 1, 1], [], []>} : vector<16x64xf32>, vector<64x512xf32>, vector<16x512xf32> -> vector<16x512xf32>
    %c0_18 = arith.constant 0 : index
    %c0_19 = arith.constant 0 : index
    %33 = vector.load %arg7[%c0_18, %c0_19] : memref<1x512xf32, #tpu.memory_space<vmem>>, vector<1x512xf32>
    %34 = vector.broadcast %33 : vector<1x512xf32> to vector<16x512xf32>
    %35 = arith.addf %32, %34 : vector<16x512xf32>
    %c0_20 = arith.constant 0 : index
    %c0_21 = arith.constant 0 : index
    %36 = vector.load %arg6[%c0_20, %c0_21] : memref<128x512xf32, #tpu.memory_space<vmem>>, vector<128x512xf32>
    %c0_22 = arith.constant 0 : index
    %c0_23 = arith.constant 0 : index
    %37 = vector.load %arg8[%c0_22, %c0_23] : memref<256x512xf32, #tpu.memory_space<vmem>>, vector<256x512xf32>
    %c0_24 = arith.constant 0 : index
    %c0_25 = arith.constant 0 : index
    %38 = vector.load %arg9[%c0_24, %c0_25] : memref<1x512xf32, #tpu.memory_space<vmem>>, vector<1x512xf32>
    %39 = vector.shape_cast %38 : vector<1x512xf32> to vector<1x512xf32>
    %40 = vector.broadcast %39 : vector<1x512xf32> to vector<2x512xf32>
    %cst_26 = arith.constant 0.000000e+00 : f32
    %41 = vector.broadcast %cst_26 : f32 to vector<2x128xf32>
    %cst_27 = arith.constant 0.000000e+00 : f32
    %42 = vector.broadcast %cst_27 : f32 to vector<2x128xf32>
    %cst_28 = arith.constant 0.000000e+00 : f32
    %43 = vector.broadcast %cst_28 : f32 to vector<2x128xf32>
    %cst_29 = arith.constant 0.000000e+00 : f32
    %44 = vector.broadcast %cst_29 : f32 to vector<2x128xf32>
    %cst_30 = arith.constant 0xFF800000 : f32
    %45 = vector.broadcast %cst_30 : f32 to vector<2x128xf32>
    %46 = vector.extract_strided_slice %35 {offsets = [0, 0], sizes = [2, 512], strides = [1, 1]} : vector<16x512xf32> to vector<2x512xf32>
    %cst_31 = arith.constant dense<0.000000e+00> : vector<2x512xf32>
    %47 = tpu.matmul %41, %36, %cst_31 {dimension_numbers = #tpu.dot_dimension_numbers<[1], [0], [0], [1], [0, 0, 1, 1], [], []>} : vector<2x128xf32>, vector<128x512xf32>, vector<2x512xf32> -> vector<2x512xf32>
    %48 = arith.addf %46, %47 : vector<2x512xf32>
    %49 = vector.extract_strided_slice %48 {offsets = [0, 0], sizes = [2, 128], strides = [1, 1]} : vector<2x512xf32> to vector<2x128xf32>
    %50 = arith.negf %49 : vector<2x128xf32>
    %51 = math.exp %50 : vector<2x128xf32>
    %cst_32 = arith.constant 1.000000e+00 : f32
    %52 = vector.broadcast %cst_32 : f32 to vector<2x128xf32>
    %53 = arith.addf %52, %51 : vector<2x128xf32>
    %54 = arith.divf %52, %53 : vector<2x128xf32>
    %55 = vector.extract_strided_slice %48 {offsets = [0, 128], sizes = [2, 128], strides = [1, 1]} : vector<2x512xf32> to vector<2x128xf32>
    %56 = arith.negf %55 : vector<2x128xf32>
    %57 = math.exp %56 : vector<2x128xf32>
    %cst_33 = arith.constant 1.000000e+00 : f32
    %58 = vector.broadcast %cst_33 : f32 to vector<2x128xf32>
    %59 = arith.addf %58, %57 : vector<2x128xf32>
    %60 = arith.divf %58, %59 : vector<2x128xf32>
    %61 = vector.extract_strided_slice %48 {offsets = [0, 256], sizes = [2, 128], strides = [1, 1]} : vector<2x512xf32> to vector<2x128xf32>
    %62 = math.tanh %61 : vector<2x128xf32>
    %63 = vector.extract_strided_slice %48 {offsets = [0, 384], sizes = [2, 128], strides = [1, 1]} : vector<2x512xf32> to vector<2x128xf32>
    %64 = arith.negf %63 : vector<2x128xf32>
    %65 = math.exp %64 : vector<2x128xf32>
    %cst_34 = arith.constant 1.000000e+00 : f32
    %66 = vector.broadcast %cst_34 : f32 to vector<2x128xf32>
    %67 = arith.addf %66, %65 : vector<2x128xf32>
    %68 = arith.divf %66, %67 : vector<2x128xf32>
    %69 = arith.mulf %60, %42 : vector<2x128xf32>
    %70 = arith.mulf %54, %62 : vector<2x128xf32>
    %71 = arith.addf %69, %70 : vector<2x128xf32>
    %72 = math.tanh %71 : vector<2x128xf32>
    %73 = arith.mulf %68, %72 : vector<2x128xf32>
    %74 = tpu.concatenate %73, %43 in 1 : vector<2x128xf32>, vector<2x128xf32> -> vector<2x256xf32>
    %cst_35 = arith.constant dense<0.000000e+00> : vector<2x512xf32>
    %75 = tpu.matmul %74, %37, %cst_35 {dimension_numbers = #tpu.dot_dimension_numbers<[1], [0], [0], [1], [0, 0, 1, 1], [], []>} : vector<2x256xf32>, vector<256x512xf32>, vector<2x512xf32> -> vector<2x512xf32>
    %76 = arith.addf %75, %40 : vector<2x512xf32>
    %77 = vector.extract_strided_slice %76 {offsets = [0, 0], sizes = [2, 128], strides = [1, 1]} : vector<2x512xf32> to vector<2x128xf32>
    %78 = arith.negf %77 : vector<2x128xf32>
    %79 = math.exp %78 : vector<2x128xf32>
    %cst_36 = arith.constant 1.000000e+00 : f32
    %80 = vector.broadcast %cst_36 : f32 to vector<2x128xf32>
    %81 = arith.addf %80, %79 : vector<2x128xf32>
    %82 = arith.divf %80, %81 : vector<2x128xf32>
    %83 = vector.extract_strided_slice %76 {offsets = [0, 128], sizes = [2, 128], strides = [1, 1]} : vector<2x512xf32> to vector<2x128xf32>
    %84 = arith.negf %83 : vector<2x128xf32>
    %85 = math.exp %84 : vector<2x128xf32>
    %cst_37 = arith.constant 1.000000e+00 : f32
    %86 = vector.broadcast %cst_37 : f32 to vector<2x128xf32>
    %87 = arith.addf %86, %85 : vector<2x128xf32>
    %88 = arith.divf %86, %87 : vector<2x128xf32>
    %89 = vector.extract_strided_slice %76 {offsets = [0, 256], sizes = [2, 128], strides = [1, 1]} : vector<2x512xf32> to vector<2x128xf32>
    %90 = math.tanh %89 : vector<2x128xf32>
    %91 = vector.extract_strided_slice %76 {offsets = [0, 384], sizes = [2, 128], strides = [1, 1]} : vector<2x512xf32> to vector<2x128xf32>
    %92 = arith.negf %91 : vector<2x128xf32>
    %93 = math.exp %92 : vector<2x128xf32>
    %cst_38 = arith.constant 1.000000e+00 : f32
    %94 = vector.broadcast %cst_38 : f32 to vector<2x128xf32>
    %95 = arith.addf %94, %93 : vector<2x128xf32>
    %96 = arith.divf %94, %95 : vector<2x128xf32>
    %97 = arith.mulf %88, %44 : vector<2x128xf32>
    %98 = arith.mulf %82, %90 : vector<2x128xf32>
    %99 = arith.addf %97, %98 : vector<2x128xf32>
    %100 = math.tanh %99 : vector<2x128xf32>
    %101 = arith.mulf %96, %100 : vector<2x128xf32>
    %102 = arith.maximumf %45, %101 : vector<2x128xf32>
    %103 = vector.extract_strided_slice %35 {offsets = [2, 0], sizes = [2, 512], strides = [1, 1]} : vector<16x512xf32> to vector<2x512xf32>
    %cst_39 = arith.constant dense<0.000000e+00> : vector<2x512xf32>
    %104 = tpu.matmul %73, %36, %cst_39 {dimension_numbers = #tpu.dot_dimension_numbers<[1], [0], [0], [1], [0, 0, 1, 1], [], []>} : vector<2x128xf32>, vector<128x512xf32>, vector<2x512xf32> -> vector<2x512xf32>
    %105 = arith.addf %103, %104 : vector<2x512xf32>
    %106 = vector.extract_strided_slice %105 {offsets = [0, 0], sizes = [2, 128], strides = [1, 1]} : vector<2x512xf32> to vector<2x128xf32>
    %107 = arith.negf %106 : vector<2x128xf32>
    %108 = math.exp %107 : vector<2x128xf32>
    %cst_40 = arith.constant 1.000000e+00 : f32
    %109 = vector.broadcast %cst_40 : f32 to vector<2x128xf32>
    %110 = arith.addf %109, %108 : vector<2x128xf32>
    %111 = arith.divf %109, %110 : vector<2x128xf32>
    %112 = vector.extract_strided_slice %105 {offsets = [0, 128], sizes = [2, 128], strides = [1, 1]} : vector<2x512xf32> to vector<2x128xf32>
    %113 = arith.negf %112 : vector<2x128xf32>
    %114 = math.exp %113 : vector<2x128xf32>
    %cst_41 = arith.constant 1.000000e+00 : f32
    %115 = vector.broadcast %cst_41 : f32 to vector<2x128xf32>
    %116 = arith.addf %115, %114 : vector<2x128xf32>
    %117 = arith.divf %115, %116 : vector<2x128xf32>
    %118 = vector.extract_strided_slice %105 {offsets = [0, 256], sizes = [2, 128], strides = [1, 1]} : vector<2x512xf32> to vector<2x128xf32>
    %119 = math.tanh %118 : vector<2x128xf32>
    %120 = vector.extract_strided_slice %105 {offsets = [0, 384], sizes = [2, 128], strides = [1, 1]} : vector<2x512xf32> to vector<2x128xf32>
    %121 = arith.negf %120 : vector<2x128xf32>
    %122 = math.exp %121 : vector<2x128xf32>
    %cst_42 = arith.constant 1.000000e+00 : f32
    %123 = vector.broadcast %cst_42 : f32 to vector<2x128xf32>
    %124 = arith.addf %123, %122 : vector<2x128xf32>
    %125 = arith.divf %123, %124 : vector<2x128xf32>
    %126 = arith.mulf %117, %71 : vector<2x128xf32>
    %127 = arith.mulf %111, %119 : vector<2x128xf32>
    %128 = arith.addf %126, %127 : vector<2x128xf32>
    %129 = math.tanh %128 : vector<2x128xf32>
    %130 = arith.mulf %125, %129 : vector<2x128xf32>
    %131 = tpu.concatenate %130, %101 in 1 : vector<2x128xf32>, vector<2x128xf32> -> vector<2x256xf32>
    %cst_43 = arith.constant dense<0.000000e+00> : vector<2x512xf32>
    %132 = tpu.matmul %131, %37, %cst_43 {dimension_numbers = #tpu.dot_dimension_numbers<[1], [0], [0], [1], [0, 0, 1, 1], [], []>} : vector<2x256xf32>, vector<256x512xf32>, vector<2x512xf32> -> vector<2x512xf32>
    %133 = arith.addf %132, %40 : vector<2x512xf32>
    %134 = vector.extract_strided_slice %133 {offsets = [0, 0], sizes = [2, 128], strides = [1, 1]} : vector<2x512xf32> to vector<2x128xf32>
    %135 = arith.negf %134 : vector<2x128xf32>
    %136 = math.exp %135 : vector<2x128xf32>
    %cst_44 = arith.constant 1.000000e+00 : f32
    %137 = vector.broadcast %cst_44 : f32 to vector<2x128xf32>
    %138 = arith.addf %137, %136 : vector<2x128xf32>
    %139 = arith.divf %137, %138 : vector<2x128xf32>
    %140 = vector.extract_strided_slice %133 {offsets = [0, 128], sizes = [2, 128], strides = [1, 1]} : vector<2x512xf32> to vector<2x128xf32>
    %141 = arith.negf %140 : vector<2x128xf32>
    %142 = math.exp %141 : vector<2x128xf32>
    %cst_45 = arith.constant 1.000000e+00 : f32
    %143 = vector.broadcast %cst_45 : f32 to vector<2x128xf32>
    %144 = arith.addf %143, %142 : vector<2x128xf32>
    %145 = arith.divf %143, %144 : vector<2x128xf32>
    %146 = vector.extract_strided_slice %133 {offsets = [0, 256], sizes = [2, 128], strides = [1, 1]} : vector<2x512xf32> to vector<2x128xf32>
    %147 = math.tanh %146 : vector<2x128xf32>
    %148 = vector.extract_strided_slice %133 {offsets = [0, 384], sizes = [2, 128], strides = [1, 1]} : vector<2x512xf32> to vector<2x128xf32>
    %149 = arith.negf %148 : vector<2x128xf32>
    %150 = math.exp %149 : vector<2x128xf32>
    %cst_46 = arith.constant 1.000000e+00 : f32
    %151 = vector.broadcast %cst_46 : f32 to vector<2x128xf32>
    %152 = arith.addf %151, %150 : vector<2x128xf32>
    %153 = arith.divf %151, %152 : vector<2x128xf32>
    %154 = arith.mulf %145, %99 : vector<2x128xf32>
    %155 = arith.mulf %139, %147 : vector<2x128xf32>
    %156 = arith.addf %154, %155 : vector<2x128xf32>
    %157 = math.tanh %156 : vector<2x128xf32>
    %158 = arith.mulf %153, %157 : vector<2x128xf32>
    %159 = arith.maximumf %102, %158 : vector<2x128xf32>
    %160 = vector.extract_strided_slice %35 {offsets = [4, 0], sizes = [2, 512], strides = [1, 1]} : vector<16x512xf32> to vector<2x512xf32>
    %cst_47 = arith.constant dense<0.000000e+00> : vector<2x512xf32>
    %161 = tpu.matmul %130, %36, %cst_47 {dimension_numbers = #tpu.dot_dimension_numbers<[1], [0], [0], [1], [0, 0, 1, 1], [], []>} : vector<2x128xf32>, vector<128x512xf32>, vector<2x512xf32> -> vector<2x512xf32>
    %162 = arith.addf %160, %161 : vector<2x512xf32>
    %163 = vector.extract_strided_slice %162 {offsets = [0, 0], sizes = [2, 128], strides = [1, 1]} : vector<2x512xf32> to vector<2x128xf32>
    %164 = arith.negf %163 : vector<2x128xf32>
    %165 = math.exp %164 : vector<2x128xf32>
    %cst_48 = arith.constant 1.000000e+00 : f32
    %166 = vector.broadcast %cst_48 : f32 to vector<2x128xf32>
    %167 = arith.addf %166, %165 : vector<2x128xf32>
    %168 = arith.divf %166, %167 : vector<2x128xf32>
    %169 = vector.extract_strided_slice %162 {offsets = [0, 128], sizes = [2, 128], strides = [1, 1]} : vector<2x512xf32> to vector<2x128xf32>
    %170 = arith.negf %169 : vector<2x128xf32>
    %171 = math.exp %170 : vector<2x128xf32>
    %cst_49 = arith.constant 1.000000e+00 : f32
    %172 = vector.broadcast %cst_49 : f32 to vector<2x128xf32>
    %173 = arith.addf %172, %171 : vector<2x128xf32>
    %174 = arith.divf %172, %173 : vector<2x128xf32>
    %175 = vector.extract_strided_slice %162 {offsets = [0, 256], sizes = [2, 128], strides = [1, 1]} : vector<2x512xf32> to vector<2x128xf32>
    %176 = math.tanh %175 : vector<2x128xf32>
    %177 = vector.extract_strided_slice %162 {offsets = [0, 384], sizes = [2, 128], strides = [1, 1]} : vector<2x512xf32> to vector<2x128xf32>
    %178 = arith.negf %177 : vector<2x128xf32>
    %179 = math.exp %178 : vector<2x128xf32>
    %cst_50 = arith.constant 1.000000e+00 : f32
    %180 = vector.broadcast %cst_50 : f32 to vector<2x128xf32>
    %181 = arith.addf %180, %179 : vector<2x128xf32>
    %182 = arith.divf %180, %181 : vector<2x128xf32>
    %183 = arith.mulf %174, %128 : vector<2x128xf32>
    %184 = arith.mulf %168, %176 : vector<2x128xf32>
    %185 = arith.addf %183, %184 : vector<2x128xf32>
    %186 = math.tanh %185 : vector<2x128xf32>
    %187 = arith.mulf %182, %186 : vector<2x128xf32>
    %188 = tpu.concatenate %187, %158 in 1 : vector<2x128xf32>, vector<2x128xf32> -> vector<2x256xf32>
    %cst_51 = arith.constant dense<0.000000e+00> : vector<2x512xf32>
    %189 = tpu.matmul %188, %37, %cst_51 {dimension_numbers = #tpu.dot_dimension_numbers<[1], [0], [0], [1], [0, 0, 1, 1], [], []>} : vector<2x256xf32>, vector<256x512xf32>, vector<2x512xf32> -> vector<2x512xf32>
    %190 = arith.addf %189, %40 : vector<2x512xf32>
    %191 = vector.extract_strided_slice %190 {offsets = [0, 0], sizes = [2, 128], strides = [1, 1]} : vector<2x512xf32> to vector<2x128xf32>
    %192 = arith.negf %191 : vector<2x128xf32>
    %193 = math.exp %192 : vector<2x128xf32>
    %cst_52 = arith.constant 1.000000e+00 : f32
    %194 = vector.broadcast %cst_52 : f32 to vector<2x128xf32>
    %195 = arith.addf %194, %193 : vector<2x128xf32>
    %196 = arith.divf %194, %195 : vector<2x128xf32>
    %197 = vector.extract_strided_slice %190 {offsets = [0, 128], sizes = [2, 128], strides = [1, 1]} : vector<2x512xf32> to vector<2x128xf32>
    %198 = arith.negf %197 : vector<2x128xf32>
    %199 = math.exp %198 : vector<2x128xf32>
    %cst_53 = arith.constant 1.000000e+00 : f32
    %200 = vector.broadcast %cst_53 : f32 to vector<2x128xf32>
    %201 = arith.addf %200, %199 : vector<2x128xf32>
    %202 = arith.divf %200, %201 : vector<2x128xf32>
    %203 = vector.extract_strided_slice %190 {offsets = [0, 256], sizes = [2, 128], strides = [1, 1]} : vector<2x512xf32> to vector<2x128xf32>
    %204 = math.tanh %203 : vector<2x128xf32>
    %205 = vector.extract_strided_slice %190 {offsets = [0, 384], sizes = [2, 128], strides = [1, 1]} : vector<2x512xf32> to vector<2x128xf32>
    %206 = arith.negf %205 : vector<2x128xf32>
    %207 = math.exp %206 : vector<2x128xf32>
    %cst_54 = arith.constant 1.000000e+00 : f32
    %208 = vector.broadcast %cst_54 : f32 to vector<2x128xf32>
    %209 = arith.addf %208, %207 : vector<2x128xf32>
    %210 = arith.divf %208, %209 : vector<2x128xf32>
    %211 = arith.mulf %202, %156 : vector<2x128xf32>
    %212 = arith.mulf %196, %204 : vector<2x128xf32>
    %213 = arith.addf %211, %212 : vector<2x128xf32>
    %214 = math.tanh %213 : vector<2x128xf32>
    %215 = arith.mulf %210, %214 : vector<2x128xf32>
    %216 = arith.maximumf %159, %215 : vector<2x128xf32>
    %217 = vector.extract_strided_slice %35 {offsets = [6, 0], sizes = [2, 512], strides = [1, 1]} : vector<16x512xf32> to vector<2x512xf32>
    %cst_55 = arith.constant dense<0.000000e+00> : vector<2x512xf32>
    %218 = tpu.matmul %187, %36, %cst_55 {dimension_numbers = #tpu.dot_dimension_numbers<[1], [0], [0], [1], [0, 0, 1, 1], [], []>} : vector<2x128xf32>, vector<128x512xf32>, vector<2x512xf32> -> vector<2x512xf32>
    %219 = arith.addf %217, %218 : vector<2x512xf32>
    %220 = vector.extract_strided_slice %219 {offsets = [0, 0], sizes = [2, 128], strides = [1, 1]} : vector<2x512xf32> to vector<2x128xf32>
    %221 = arith.negf %220 : vector<2x128xf32>
    %222 = math.exp %221 : vector<2x128xf32>
    %cst_56 = arith.constant 1.000000e+00 : f32
    %223 = vector.broadcast %cst_56 : f32 to vector<2x128xf32>
    %224 = arith.addf %223, %222 : vector<2x128xf32>
    %225 = arith.divf %223, %224 : vector<2x128xf32>
    %226 = vector.extract_strided_slice %219 {offsets = [0, 128], sizes = [2, 128], strides = [1, 1]} : vector<2x512xf32> to vector<2x128xf32>
    %227 = arith.negf %226 : vector<2x128xf32>
    %228 = math.exp %227 : vector<2x128xf32>
    %cst_57 = arith.constant 1.000000e+00 : f32
    %229 = vector.broadcast %cst_57 : f32 to vector<2x128xf32>
    %230 = arith.addf %229, %228 : vector<2x128xf32>
    %231 = arith.divf %229, %230 : vector<2x128xf32>
    %232 = vector.extract_strided_slice %219 {offsets = [0, 256], sizes = [2, 128], strides = [1, 1]} : vector<2x512xf32> to vector<2x128xf32>
    %233 = math.tanh %232 : vector<2x128xf32>
    %234 = vector.extract_strided_slice %219 {offsets = [0, 384], sizes = [2, 128], strides = [1, 1]} : vector<2x512xf32> to vector<2x128xf32>
    %235 = arith.negf %234 : vector<2x128xf32>
    %236 = math.exp %235 : vector<2x128xf32>
    %cst_58 = arith.constant 1.000000e+00 : f32
    %237 = vector.broadcast %cst_58 : f32 to vector<2x128xf32>
    %238 = arith.addf %237, %236 : vector<2x128xf32>
    %239 = arith.divf %237, %238 : vector<2x128xf32>
    %240 = arith.mulf %231, %185 : vector<2x128xf32>
    %241 = arith.mulf %225, %233 : vector<2x128xf32>
    %242 = arith.addf %240, %241 : vector<2x128xf32>
    %243 = math.tanh %242 : vector<2x128xf32>
    %244 = arith.mulf %239, %243 : vector<2x128xf32>
    %245 = tpu.concatenate %244, %215 in 1 : vector<2x128xf32>, vector<2x128xf32> -> vector<2x256xf32>
    %cst_59 = arith.constant dense<0.000000e+00> : vector<2x512xf32>
    %246 = tpu.matmul %245, %37, %cst_59 {dimension_numbers = #tpu.dot_dimension_numbers<[1], [0], [0], [1], [0, 0, 1, 1], [], []>} : vector<2x256xf32>, vector<256x512xf32>, vector<2x512xf32> -> vector<2x512xf32>
    %247 = arith.addf %246, %40 : vector<2x512xf32>
    %248 = vector.extract_strided_slice %247 {offsets = [0, 0], sizes = [2, 128], strides = [1, 1]} : vector<2x512xf32> to vector<2x128xf32>
    %249 = arith.negf %248 : vector<2x128xf32>
    %250 = math.exp %249 : vector<2x128xf32>
    %cst_60 = arith.constant 1.000000e+00 : f32
    %251 = vector.broadcast %cst_60 : f32 to vector<2x128xf32>
    %252 = arith.addf %251, %250 : vector<2x128xf32>
    %253 = arith.divf %251, %252 : vector<2x128xf32>
    %254 = vector.extract_strided_slice %247 {offsets = [0, 128], sizes = [2, 128], strides = [1, 1]} : vector<2x512xf32> to vector<2x128xf32>
    %255 = arith.negf %254 : vector<2x128xf32>
    %256 = math.exp %255 : vector<2x128xf32>
    %cst_61 = arith.constant 1.000000e+00 : f32
    %257 = vector.broadcast %cst_61 : f32 to vector<2x128xf32>
    %258 = arith.addf %257, %256 : vector<2x128xf32>
    %259 = arith.divf %257, %258 : vector<2x128xf32>
    %260 = vector.extract_strided_slice %247 {offsets = [0, 256], sizes = [2, 128], strides = [1, 1]} : vector<2x512xf32> to vector<2x128xf32>
    %261 = math.tanh %260 : vector<2x128xf32>
    %262 = vector.extract_strided_slice %247 {offsets = [0, 384], sizes = [2, 128], strides = [1, 1]} : vector<2x512xf32> to vector<2x128xf32>
    %263 = arith.negf %262 : vector<2x128xf32>
    %264 = math.exp %263 : vector<2x128xf32>
    %cst_62 = arith.constant 1.000000e+00 : f32
    %265 = vector.broadcast %cst_62 : f32 to vector<2x128xf32>
    %266 = arith.addf %265, %264 : vector<2x128xf32>
    %267 = arith.divf %265, %266 : vector<2x128xf32>
    %268 = arith.mulf %259, %213 : vector<2x128xf32>
    %269 = arith.mulf %253, %261 : vector<2x128xf32>
    %270 = arith.addf %268, %269 : vector<2x128xf32>
    %271 = math.tanh %270 : vector<2x128xf32>
    %272 = arith.mulf %267, %271 : vector<2x128xf32>
    %273 = arith.maximumf %216, %272 : vector<2x128xf32>
    %274 = vector.extract_strided_slice %35 {offsets = [8, 0], sizes = [2, 512], strides = [1, 1]} : vector<16x512xf32> to vector<2x512xf32>
    %cst_63 = arith.constant dense<0.000000e+00> : vector<2x512xf32>
    %275 = tpu.matmul %244, %36, %cst_63 {dimension_numbers = #tpu.dot_dimension_numbers<[1], [0], [0], [1], [0, 0, 1, 1], [], []>} : vector<2x128xf32>, vector<128x512xf32>, vector<2x512xf32> -> vector<2x512xf32>
    %276 = arith.addf %274, %275 : vector<2x512xf32>
    %277 = vector.extract_strided_slice %276 {offsets = [0, 0], sizes = [2, 128], strides = [1, 1]} : vector<2x512xf32> to vector<2x128xf32>
    %278 = arith.negf %277 : vector<2x128xf32>
    %279 = math.exp %278 : vector<2x128xf32>
    %cst_64 = arith.constant 1.000000e+00 : f32
    %280 = vector.broadcast %cst_64 : f32 to vector<2x128xf32>
    %281 = arith.addf %280, %279 : vector<2x128xf32>
    %282 = arith.divf %280, %281 : vector<2x128xf32>
    %283 = vector.extract_strided_slice %276 {offsets = [0, 128], sizes = [2, 128], strides = [1, 1]} : vector<2x512xf32> to vector<2x128xf32>
    %284 = arith.negf %283 : vector<2x128xf32>
    %285 = math.exp %284 : vector<2x128xf32>
    %cst_65 = arith.constant 1.000000e+00 : f32
    %286 = vector.broadcast %cst_65 : f32 to vector<2x128xf32>
    %287 = arith.addf %286, %285 : vector<2x128xf32>
    %288 = arith.divf %286, %287 : vector<2x128xf32>
    %289 = vector.extract_strided_slice %276 {offsets = [0, 256], sizes = [2, 128], strides = [1, 1]} : vector<2x512xf32> to vector<2x128xf32>
    %290 = math.tanh %289 : vector<2x128xf32>
    %291 = vector.extract_strided_slice %276 {offsets = [0, 384], sizes = [2, 128], strides = [1, 1]} : vector<2x512xf32> to vector<2x128xf32>
    %292 = arith.negf %291 : vector<2x128xf32>
    %293 = math.exp %292 : vector<2x128xf32>
    %cst_66 = arith.constant 1.000000e+00 : f32
    %294 = vector.broadcast %cst_66 : f32 to vector<2x128xf32>
    %295 = arith.addf %294, %293 : vector<2x128xf32>
    %296 = arith.divf %294, %295 : vector<2x128xf32>
    %297 = arith.mulf %288, %242 : vector<2x128xf32>
    %298 = arith.mulf %282, %290 : vector<2x128xf32>
    %299 = arith.addf %297, %298 : vector<2x128xf32>
    %300 = math.tanh %299 : vector<2x128xf32>
    %301 = arith.mulf %296, %300 : vector<2x128xf32>
    %302 = tpu.concatenate %301, %272 in 1 : vector<2x128xf32>, vector<2x128xf32> -> vector<2x256xf32>
    %cst_67 = arith.constant dense<0.000000e+00> : vector<2x512xf32>
    %303 = tpu.matmul %302, %37, %cst_67 {dimension_numbers = #tpu.dot_dimension_numbers<[1], [0], [0], [1], [0, 0, 1, 1], [], []>} : vector<2x256xf32>, vector<256x512xf32>, vector<2x512xf32> -> vector<2x512xf32>
    %304 = arith.addf %303, %40 : vector<2x512xf32>
    %305 = vector.extract_strided_slice %304 {offsets = [0, 0], sizes = [2, 128], strides = [1, 1]} : vector<2x512xf32> to vector<2x128xf32>
    %306 = arith.negf %305 : vector<2x128xf32>
    %307 = math.exp %306 : vector<2x128xf32>
    %cst_68 = arith.constant 1.000000e+00 : f32
    %308 = vector.broadcast %cst_68 : f32 to vector<2x128xf32>
    %309 = arith.addf %308, %307 : vector<2x128xf32>
    %310 = arith.divf %308, %309 : vector<2x128xf32>
    %311 = vector.extract_strided_slice %304 {offsets = [0, 128], sizes = [2, 128], strides = [1, 1]} : vector<2x512xf32> to vector<2x128xf32>
    %312 = arith.negf %311 : vector<2x128xf32>
    %313 = math.exp %312 : vector<2x128xf32>
    %cst_69 = arith.constant 1.000000e+00 : f32
    %314 = vector.broadcast %cst_69 : f32 to vector<2x128xf32>
    %315 = arith.addf %314, %313 : vector<2x128xf32>
    %316 = arith.divf %314, %315 : vector<2x128xf32>
    %317 = vector.extract_strided_slice %304 {offsets = [0, 256], sizes = [2, 128], strides = [1, 1]} : vector<2x512xf32> to vector<2x128xf32>
    %318 = math.tanh %317 : vector<2x128xf32>
    %319 = vector.extract_strided_slice %304 {offsets = [0, 384], sizes = [2, 128], strides = [1, 1]} : vector<2x512xf32> to vector<2x128xf32>
    %320 = arith.negf %319 : vector<2x128xf32>
    %321 = math.exp %320 : vector<2x128xf32>
    %cst_70 = arith.constant 1.000000e+00 : f32
    %322 = vector.broadcast %cst_70 : f32 to vector<2x128xf32>
    %323 = arith.addf %322, %321 : vector<2x128xf32>
    %324 = arith.divf %322, %323 : vector<2x128xf32>
    %325 = arith.mulf %316, %270 : vector<2x128xf32>
    %326 = arith.mulf %310, %318 : vector<2x128xf32>
    %327 = arith.addf %325, %326 : vector<2x128xf32>
    %328 = math.tanh %327 : vector<2x128xf32>
    %329 = arith.mulf %324, %328 : vector<2x128xf32>
    %330 = arith.maximumf %273, %329 : vector<2x128xf32>
    %331 = vector.extract_strided_slice %35 {offsets = [10, 0], sizes = [2, 512], strides = [1, 1]} : vector<16x512xf32> to vector<2x512xf32>
    %cst_71 = arith.constant dense<0.000000e+00> : vector<2x512xf32>
    %332 = tpu.matmul %301, %36, %cst_71 {dimension_numbers = #tpu.dot_dimension_numbers<[1], [0], [0], [1], [0, 0, 1, 1], [], []>} : vector<2x128xf32>, vector<128x512xf32>, vector<2x512xf32> -> vector<2x512xf32>
    %333 = arith.addf %331, %332 : vector<2x512xf32>
    %334 = vector.extract_strided_slice %333 {offsets = [0, 0], sizes = [2, 128], strides = [1, 1]} : vector<2x512xf32> to vector<2x128xf32>
    %335 = arith.negf %334 : vector<2x128xf32>
    %336 = math.exp %335 : vector<2x128xf32>
    %cst_72 = arith.constant 1.000000e+00 : f32
    %337 = vector.broadcast %cst_72 : f32 to vector<2x128xf32>
    %338 = arith.addf %337, %336 : vector<2x128xf32>
    %339 = arith.divf %337, %338 : vector<2x128xf32>
    %340 = vector.extract_strided_slice %333 {offsets = [0, 128], sizes = [2, 128], strides = [1, 1]} : vector<2x512xf32> to vector<2x128xf32>
    %341 = arith.negf %340 : vector<2x128xf32>
    %342 = math.exp %341 : vector<2x128xf32>
    %cst_73 = arith.constant 1.000000e+00 : f32
    %343 = vector.broadcast %cst_73 : f32 to vector<2x128xf32>
    %344 = arith.addf %343, %342 : vector<2x128xf32>
    %345 = arith.divf %343, %344 : vector<2x128xf32>
    %346 = vector.extract_strided_slice %333 {offsets = [0, 256], sizes = [2, 128], strides = [1, 1]} : vector<2x512xf32> to vector<2x128xf32>
    %347 = math.tanh %346 : vector<2x128xf32>
    %348 = vector.extract_strided_slice %333 {offsets = [0, 384], sizes = [2, 128], strides = [1, 1]} : vector<2x512xf32> to vector<2x128xf32>
    %349 = arith.negf %348 : vector<2x128xf32>
    %350 = math.exp %349 : vector<2x128xf32>
    %cst_74 = arith.constant 1.000000e+00 : f32
    %351 = vector.broadcast %cst_74 : f32 to vector<2x128xf32>
    %352 = arith.addf %351, %350 : vector<2x128xf32>
    %353 = arith.divf %351, %352 : vector<2x128xf32>
    %354 = arith.mulf %345, %299 : vector<2x128xf32>
    %355 = arith.mulf %339, %347 : vector<2x128xf32>
    %356 = arith.addf %354, %355 : vector<2x128xf32>
    %357 = math.tanh %356 : vector<2x128xf32>
    %358 = arith.mulf %353, %357 : vector<2x128xf32>
    %359 = tpu.concatenate %358, %329 in 1 : vector<2x128xf32>, vector<2x128xf32> -> vector<2x256xf32>
    %cst_75 = arith.constant dense<0.000000e+00> : vector<2x512xf32>
    %360 = tpu.matmul %359, %37, %cst_75 {dimension_numbers = #tpu.dot_dimension_numbers<[1], [0], [0], [1], [0, 0, 1, 1], [], []>} : vector<2x256xf32>, vector<256x512xf32>, vector<2x512xf32> -> vector<2x512xf32>
    %361 = arith.addf %360, %40 : vector<2x512xf32>
    %362 = vector.extract_strided_slice %361 {offsets = [0, 0], sizes = [2, 128], strides = [1, 1]} : vector<2x512xf32> to vector<2x128xf32>
    %363 = arith.negf %362 : vector<2x128xf32>
    %364 = math.exp %363 : vector<2x128xf32>
    %cst_76 = arith.constant 1.000000e+00 : f32
    %365 = vector.broadcast %cst_76 : f32 to vector<2x128xf32>
    %366 = arith.addf %365, %364 : vector<2x128xf32>
    %367 = arith.divf %365, %366 : vector<2x128xf32>
    %368 = vector.extract_strided_slice %361 {offsets = [0, 128], sizes = [2, 128], strides = [1, 1]} : vector<2x512xf32> to vector<2x128xf32>
    %369 = arith.negf %368 : vector<2x128xf32>
    %370 = math.exp %369 : vector<2x128xf32>
    %cst_77 = arith.constant 1.000000e+00 : f32
    %371 = vector.broadcast %cst_77 : f32 to vector<2x128xf32>
    %372 = arith.addf %371, %370 : vector<2x128xf32>
    %373 = arith.divf %371, %372 : vector<2x128xf32>
    %374 = vector.extract_strided_slice %361 {offsets = [0, 256], sizes = [2, 128], strides = [1, 1]} : vector<2x512xf32> to vector<2x128xf32>
    %375 = math.tanh %374 : vector<2x128xf32>
    %376 = vector.extract_strided_slice %361 {offsets = [0, 384], sizes = [2, 128], strides = [1, 1]} : vector<2x512xf32> to vector<2x128xf32>
    %377 = arith.negf %376 : vector<2x128xf32>
    %378 = math.exp %377 : vector<2x128xf32>
    %cst_78 = arith.constant 1.000000e+00 : f32
    %379 = vector.broadcast %cst_78 : f32 to vector<2x128xf32>
    %380 = arith.addf %379, %378 : vector<2x128xf32>
    %381 = arith.divf %379, %380 : vector<2x128xf32>
    %382 = arith.mulf %373, %327 : vector<2x128xf32>
    %383 = arith.mulf %367, %375 : vector<2x128xf32>
    %384 = arith.addf %382, %383 : vector<2x128xf32>
    %385 = math.tanh %384 : vector<2x128xf32>
    %386 = arith.mulf %381, %385 : vector<2x128xf32>
    %387 = arith.maximumf %330, %386 : vector<2x128xf32>
    %388 = vector.extract_strided_slice %35 {offsets = [12, 0], sizes = [2, 512], strides = [1, 1]} : vector<16x512xf32> to vector<2x512xf32>
    %cst_79 = arith.constant dense<0.000000e+00> : vector<2x512xf32>
    %389 = tpu.matmul %358, %36, %cst_79 {dimension_numbers = #tpu.dot_dimension_numbers<[1], [0], [0], [1], [0, 0, 1, 1], [], []>} : vector<2x128xf32>, vector<128x512xf32>, vector<2x512xf32> -> vector<2x512xf32>
    %390 = arith.addf %388, %389 : vector<2x512xf32>
    %391 = vector.extract_strided_slice %390 {offsets = [0, 0], sizes = [2, 128], strides = [1, 1]} : vector<2x512xf32> to vector<2x128xf32>
    %392 = arith.negf %391 : vector<2x128xf32>
    %393 = math.exp %392 : vector<2x128xf32>
    %cst_80 = arith.constant 1.000000e+00 : f32
    %394 = vector.broadcast %cst_80 : f32 to vector<2x128xf32>
    %395 = arith.addf %394, %393 : vector<2x128xf32>
    %396 = arith.divf %394, %395 : vector<2x128xf32>
    %397 = vector.extract_strided_slice %390 {offsets = [0, 128], sizes = [2, 128], strides = [1, 1]} : vector<2x512xf32> to vector<2x128xf32>
    %398 = arith.negf %397 : vector<2x128xf32>
    %399 = math.exp %398 : vector<2x128xf32>
    %cst_81 = arith.constant 1.000000e+00 : f32
    %400 = vector.broadcast %cst_81 : f32 to vector<2x128xf32>
    %401 = arith.addf %400, %399 : vector<2x128xf32>
    %402 = arith.divf %400, %401 : vector<2x128xf32>
    %403 = vector.extract_strided_slice %390 {offsets = [0, 256], sizes = [2, 128], strides = [1, 1]} : vector<2x512xf32> to vector<2x128xf32>
    %404 = math.tanh %403 : vector<2x128xf32>
    %405 = vector.extract_strided_slice %390 {offsets = [0, 384], sizes = [2, 128], strides = [1, 1]} : vector<2x512xf32> to vector<2x128xf32>
    %406 = arith.negf %405 : vector<2x128xf32>
    %407 = math.exp %406 : vector<2x128xf32>
    %cst_82 = arith.constant 1.000000e+00 : f32
    %408 = vector.broadcast %cst_82 : f32 to vector<2x128xf32>
    %409 = arith.addf %408, %407 : vector<2x128xf32>
    %410 = arith.divf %408, %409 : vector<2x128xf32>
    %411 = arith.mulf %402, %356 : vector<2x128xf32>
    %412 = arith.mulf %396, %404 : vector<2x128xf32>
    %413 = arith.addf %411, %412 : vector<2x128xf32>
    %414 = math.tanh %413 : vector<2x128xf32>
    %415 = arith.mulf %410, %414 : vector<2x128xf32>
    %416 = tpu.concatenate %415, %386 in 1 : vector<2x128xf32>, vector<2x128xf32> -> vector<2x256xf32>
    %cst_83 = arith.constant dense<0.000000e+00> : vector<2x512xf32>
    %417 = tpu.matmul %416, %37, %cst_83 {dimension_numbers = #tpu.dot_dimension_numbers<[1], [0], [0], [1], [0, 0, 1, 1], [], []>} : vector<2x256xf32>, vector<256x512xf32>, vector<2x512xf32> -> vector<2x512xf32>
    %418 = arith.addf %417, %40 : vector<2x512xf32>
    %419 = vector.extract_strided_slice %418 {offsets = [0, 0], sizes = [2, 128], strides = [1, 1]} : vector<2x512xf32> to vector<2x128xf32>
    %420 = arith.negf %419 : vector<2x128xf32>
    %421 = math.exp %420 : vector<2x128xf32>
    %cst_84 = arith.constant 1.000000e+00 : f32
    %422 = vector.broadcast %cst_84 : f32 to vector<2x128xf32>
    %423 = arith.addf %422, %421 : vector<2x128xf32>
    %424 = arith.divf %422, %423 : vector<2x128xf32>
    %425 = vector.extract_strided_slice %418 {offsets = [0, 128], sizes = [2, 128], strides = [1, 1]} : vector<2x512xf32> to vector<2x128xf32>
    %426 = arith.negf %425 : vector<2x128xf32>
    %427 = math.exp %426 : vector<2x128xf32>
    %cst_85 = arith.constant 1.000000e+00 : f32
    %428 = vector.broadcast %cst_85 : f32 to vector<2x128xf32>
    %429 = arith.addf %428, %427 : vector<2x128xf32>
    %430 = arith.divf %428, %429 : vector<2x128xf32>
    %431 = vector.extract_strided_slice %418 {offsets = [0, 256], sizes = [2, 128], strides = [1, 1]} : vector<2x512xf32> to vector<2x128xf32>
    %432 = math.tanh %431 : vector<2x128xf32>
    %433 = vector.extract_strided_slice %418 {offsets = [0, 384], sizes = [2, 128], strides = [1, 1]} : vector<2x512xf32> to vector<2x128xf32>
    %434 = arith.negf %433 : vector<2x128xf32>
    %435 = math.exp %434 : vector<2x128xf32>
    %cst_86 = arith.constant 1.000000e+00 : f32
    %436 = vector.broadcast %cst_86 : f32 to vector<2x128xf32>
    %437 = arith.addf %436, %435 : vector<2x128xf32>
    %438 = arith.divf %436, %437 : vector<2x128xf32>
    %439 = arith.mulf %430, %384 : vector<2x128xf32>
    %440 = arith.mulf %424, %432 : vector<2x128xf32>
    %441 = arith.addf %439, %440 : vector<2x128xf32>
    %442 = math.tanh %441 : vector<2x128xf32>
    %443 = arith.mulf %438, %442 : vector<2x128xf32>
    %444 = arith.maximumf %387, %443 : vector<2x128xf32>
    %445 = vector.extract_strided_slice %35 {offsets = [14, 0], sizes = [2, 512], strides = [1, 1]} : vector<16x512xf32> to vector<2x512xf32>
    %cst_87 = arith.constant dense<0.000000e+00> : vector<2x512xf32>
    %446 = tpu.matmul %415, %36, %cst_87 {dimension_numbers = #tpu.dot_dimension_numbers<[1], [0], [0], [1], [0, 0, 1, 1], [], []>} : vector<2x128xf32>, vector<128x512xf32>, vector<2x512xf32> -> vector<2x512xf32>
    %447 = arith.addf %445, %446 : vector<2x512xf32>
    %448 = vector.extract_strided_slice %447 {offsets = [0, 0], sizes = [2, 128], strides = [1, 1]} : vector<2x512xf32> to vector<2x128xf32>
    %449 = arith.negf %448 : vector<2x128xf32>
    %450 = math.exp %449 : vector<2x128xf32>
    %cst_88 = arith.constant 1.000000e+00 : f32
    %451 = vector.broadcast %cst_88 : f32 to vector<2x128xf32>
    %452 = arith.addf %451, %450 : vector<2x128xf32>
    %453 = arith.divf %451, %452 : vector<2x128xf32>
    %454 = vector.extract_strided_slice %447 {offsets = [0, 128], sizes = [2, 128], strides = [1, 1]} : vector<2x512xf32> to vector<2x128xf32>
    %455 = arith.negf %454 : vector<2x128xf32>
    %456 = math.exp %455 : vector<2x128xf32>
    %cst_89 = arith.constant 1.000000e+00 : f32
    %457 = vector.broadcast %cst_89 : f32 to vector<2x128xf32>
    %458 = arith.addf %457, %456 : vector<2x128xf32>
    %459 = arith.divf %457, %458 : vector<2x128xf32>
    %460 = vector.extract_strided_slice %447 {offsets = [0, 256], sizes = [2, 128], strides = [1, 1]} : vector<2x512xf32> to vector<2x128xf32>
    %461 = math.tanh %460 : vector<2x128xf32>
    %462 = vector.extract_strided_slice %447 {offsets = [0, 384], sizes = [2, 128], strides = [1, 1]} : vector<2x512xf32> to vector<2x128xf32>
    %463 = arith.negf %462 : vector<2x128xf32>
    %464 = math.exp %463 : vector<2x128xf32>
    %cst_90 = arith.constant 1.000000e+00 : f32
    %465 = vector.broadcast %cst_90 : f32 to vector<2x128xf32>
    %466 = arith.addf %465, %464 : vector<2x128xf32>
    %467 = arith.divf %465, %466 : vector<2x128xf32>
    %468 = arith.mulf %459, %413 : vector<2x128xf32>
    %469 = arith.mulf %453, %461 : vector<2x128xf32>
    %470 = arith.addf %468, %469 : vector<2x128xf32>
    %471 = math.tanh %470 : vector<2x128xf32>
    %472 = arith.mulf %467, %471 : vector<2x128xf32>
    %473 = tpu.concatenate %472, %443 in 1 : vector<2x128xf32>, vector<2x128xf32> -> vector<2x256xf32>
    %cst_91 = arith.constant dense<0.000000e+00> : vector<2x512xf32>
    %474 = tpu.matmul %473, %37, %cst_91 {dimension_numbers = #tpu.dot_dimension_numbers<[1], [0], [0], [1], [0, 0, 1, 1], [], []>} : vector<2x256xf32>, vector<256x512xf32>, vector<2x512xf32> -> vector<2x512xf32>
    %475 = arith.addf %474, %40 : vector<2x512xf32>
    %476 = vector.extract_strided_slice %475 {offsets = [0, 0], sizes = [2, 128], strides = [1, 1]} : vector<2x512xf32> to vector<2x128xf32>
    %477 = arith.negf %476 : vector<2x128xf32>
    %478 = math.exp %477 : vector<2x128xf32>
    %cst_92 = arith.constant 1.000000e+00 : f32
    %479 = vector.broadcast %cst_92 : f32 to vector<2x128xf32>
    %480 = arith.addf %479, %478 : vector<2x128xf32>
    %481 = arith.divf %479, %480 : vector<2x128xf32>
    %482 = vector.extract_strided_slice %475 {offsets = [0, 128], sizes = [2, 128], strides = [1, 1]} : vector<2x512xf32> to vector<2x128xf32>
    %483 = arith.negf %482 : vector<2x128xf32>
    %484 = math.exp %483 : vector<2x128xf32>
    %cst_93 = arith.constant 1.000000e+00 : f32
    %485 = vector.broadcast %cst_93 : f32 to vector<2x128xf32>
    %486 = arith.addf %485, %484 : vector<2x128xf32>
    %487 = arith.divf %485, %486 : vector<2x128xf32>
    %488 = vector.extract_strided_slice %475 {offsets = [0, 256], sizes = [2, 128], strides = [1, 1]} : vector<2x512xf32> to vector<2x128xf32>
    %489 = math.tanh %488 : vector<2x128xf32>
    %490 = vector.extract_strided_slice %475 {offsets = [0, 384], sizes = [2, 128], strides = [1, 1]} : vector<2x512xf32> to vector<2x128xf32>
    %491 = arith.negf %490 : vector<2x128xf32>
    %492 = math.exp %491 : vector<2x128xf32>
    %cst_94 = arith.constant 1.000000e+00 : f32
    %493 = vector.broadcast %cst_94 : f32 to vector<2x128xf32>
    %494 = arith.addf %493, %492 : vector<2x128xf32>
    %495 = arith.divf %493, %494 : vector<2x128xf32>
    %496 = arith.mulf %487, %441 : vector<2x128xf32>
    %497 = arith.mulf %481, %489 : vector<2x128xf32>
    %498 = arith.addf %496, %497 : vector<2x128xf32>
    %499 = math.tanh %498 : vector<2x128xf32>
    %500 = arith.mulf %495, %499 : vector<2x128xf32>
    %501 = arith.maximumf %444, %500 : vector<2x128xf32>
    %c0_95 = arith.constant 0 : index
    %c0_96 = arith.constant 0 : index
    %502 = vector.load %arg10[%c0_95, %c0_96] : memref<128x40xf32, #tpu.memory_space<vmem>>, vector<128x40xf32>
    %cst_97 = arith.constant dense<0.000000e+00> : vector<2x40xf32>
    %503 = tpu.matmul %501, %502, %cst_97 {dimension_numbers = #tpu.dot_dimension_numbers<[1], [0], [0], [1], [0, 0, 1, 1], [], []>} : vector<2x128xf32>, vector<128x40xf32>, vector<2x40xf32> -> vector<2x40xf32>
    %c0_98 = arith.constant 0 : index
    %c0_99 = arith.constant 0 : index
    %504 = vector.load %arg11[%c0_98, %c0_99] : memref<1x40xf32, #tpu.memory_space<vmem>>, vector<1x40xf32>
    %505 = vector.broadcast %504 : vector<1x40xf32> to vector<2x40xf32>
    %506 = arith.addf %503, %505 : vector<2x40xf32>
    %c0_100 = arith.constant 0 : index
    %c0_101 = arith.constant 0 : index
    %507 = vector.load %arg12[%c0_100, %c0_101] : memref<2x40xf32, #tpu.memory_space<vmem>>, vector<2x40xf32>
    tpu.vector_store %arg12[%c0_100, %c0_101], %506 {strides = array<i32>} : memref<2x40xf32, #tpu.memory_space<vmem>>, vector<2x40xf32>,
    return
  }
}

</mosaic_0001>

<llo_original>
// kernel: lstm_mlp_forward.1
$region0: #{lstm_mlp_forward.1}
  #allocation0 [shape = 'u32[]', space=smem, size = 0x4, offset = 0x4, fixed_abs, tag = 'smem constant byte address 0x4 - core index']
  #allocation1 [shape = 'u32[144,128]{1,0:T(1,128)}', space=vmem, size = 0x12000, scoped, tag = 'internal scratch']
  %s0 = inlined_call_operand.vmem [shape: f32[16,16], index: 0, kind: input, shape index: {}]
  %s1 = inlined_call_operand.vmem [shape: f32[16,64], index: 1, kind: input, shape index: {}]
  %s2 = inlined_call_operand.vmem [shape: f32[1,64], index: 2, kind: input, shape index: {}]
  %s3 = inlined_call_operand.vmem [shape: f32[1,64], index: 3, kind: input, shape index: {}]
  %s4 = inlined_call_operand.vmem [shape: f32[1,64], index: 4, kind: input, shape index: {}]
  %s5 = inlined_call_operand.hbm [shape: f32[64,512], index: 5, kind: input, shape index: {}]
  %s6 = inlined_call_operand.hbm [shape: f32[128,512], index: 6, kind: input, shape index: {}]
  %s7 = inlined_call_operand.vmem [shape: f32[1,512], index: 7, kind: input, shape index: {}]
  %s8 = inlined_call_operand.hbm [shape: f32[256,512], index: 8, kind: input, shape index: {}]
  %s9 = inlined_call_operand.vmem [shape: f32[1,512], index: 9, kind: input, shape index: {}]
  %s10 = inlined_call_operand.vmem [shape: f32[128,40], index: 10, kind: input, shape index: {}]
  %s11 = inlined_call_operand.vmem [shape: f32[1,40], index: 11, kind: input, shape index: {}]
  %s12 = inlined_call_operand.hbm [shape: f32[2,40], index: 12, kind: output, shape index: {}]
  %s13 = sld [smem:[#allocation0]]
  $region70: #{lstm_mlp_forward.1} parent=0
    _
  %s15 = ssub.s32 1, %s13
  %s16 = scalar_select 0, %s15, %s13
  $region1: #{lstm_mlp_forward.1} parent=0
    #allocation2 [shape = 'u8[131072]{0}', space=vmem, size = 0x20000, scoped, tag = 'input window, operand 5, single buffered']
    #allocation3 [shape = 's32[1]{0}', space=sflag, size = 0x4, scoped, tag = 'scoped memory for lstm_mlp_forward.1']
    #allocation4 [shape = 's32[1]{0}', space=sflag, size = 0x4, scoped, tag = 'scoped memory for lstm_mlp_forward.1']
    #allocation5 [shape = 'u8[262144]{0}', space=vmem, size = 0x40000, scoped, tag = 'input window, operand 6, single buffered']
    #allocation6 [shape = 's32[1]{0}', space=sflag, size = 0x4, scoped, tag = 'scoped memory for lstm_mlp_forward.1']
    #allocation7 [shape = 'u8[524288]{0}', space=vmem, size = 0x80000, scoped, tag = 'input window, operand 8, single buffered']
    #allocation8 [shape = 'u8[1024]{0}', space=vmem, size = 0x400, scoped, tag = 'output window, operand 0, single buffered']
    %17 = vsyncpa [#allocation3], 0
    %18 = vsyncpa [#allocation6], 0
    %19 = vsyncpa [#allocation4], 0
    // Predicated region
    $region2: #{lstm_mlp_forward.1} parent=1 // pred_check
      _
    $region3: #{lstm_mlp_forward.1} parent=1 // pred_check_branch
      %21 = sbr.rel (0) target = $region5
    $region4: #{lstm_mlp_forward.1} parent=1 // pred_region
      _
    $region5: #{lstm_mlp_forward.1} parent=1 // pred_fallthru
      _
    // Predicated region
    $region6: #{lstm_mlp_forward.1} parent=1 // pred_check
      _
    $region7: #{lstm_mlp_forward.1} parent=1 // pred_check_branch
      %23 = sbr.rel (0) target = $region9
    $region8: #{lstm_mlp_forward.1} parent=1 // pred_region
      _
    $region9: #{lstm_mlp_forward.1} parent=1 // pred_fallthru
      _
    // Predicated region
    $region10: #{lstm_mlp_forward.1} parent=1 // pred_check
      _
    $region11: #{lstm_mlp_forward.1} parent=1 // pred_check_branch
      %25 = sbr.rel (0) target = $region13
    $region12: #{lstm_mlp_forward.1} parent=1 // pred_region
      _
    $region13: #{lstm_mlp_forward.1} parent=1 // pred_fallthru
      _
    // Predicated region
    $region14: #{lstm_mlp_forward.1} parent=1 // pred_check
      _
    $region15: #{lstm_mlp_forward.1} parent=1 // pred_check_branch
      %27 = sbr.rel (0) target = $region17
    $region16: #{lstm_mlp_forward.1} parent=1 // pred_region
      _
    $region17: #{lstm_mlp_forward.1} parent=1 // pred_fallthru
      _
    // Predicated region
    $region18: #{lstm_mlp_forward.1} parent=1 // pred_check
      _
    $region19: #{lstm_mlp_forward.1} parent=1 // pred_check_branch
      %29 = sbr.rel (0) target = $region21
    $region20: #{lstm_mlp_forward.1} parent=1 // pred_region
      _
    $region21: #{lstm_mlp_forward.1} parent=1 // pred_fallthru
      _
    // Predicated region
    $region22: #{lstm_mlp_forward.1} parent=1 // pred_check
      _
    $region23: #{lstm_mlp_forward.1} parent=1 // pred_check_branch
      %31 = sbr.rel (0) target = $region25
    $region24: #{lstm_mlp_forward.1} parent=1 // pred_region
      %s33 = ssub.s32 4096, 4096
      %34 = vsyncadd [#allocation3], %s33
      %s35 = sshll.u32 [#allocation2], 4
      %s36 = int_to_ptr.vmem [resolvable:$true] %s35
      %41 = dma.hbm_to_vmem [thread:$0]  %s5, 4096, %s36, [#allocation3], 512, 512, 32
    $region25: #{lstm_mlp_forward.1} parent=1 // pred_fallthru
      _
    // Predicated region
    $region26: #{lstm_mlp_forward.1} parent=1 // pred_check
      _
    $region27: #{lstm_mlp_forward.1} parent=1 // pred_check_branch
      %43 = sbr.rel (0) target = $region29
    $region28: #{lstm_mlp_forward.1} parent=1 // pred_region
      %s45 = ssub.s32 8192, 8192
      %46 = vsyncadd [#allocation6], %s45
      %s47 = sshll.u32 [#allocation5], 4
      %s48 = int_to_ptr.vmem [resolvable:$true] %s47
      %53 = dma.hbm_to_vmem [thread:$0]  %s6, 8192, %s48, [#allocation6], 512, 512, 32
    $region29: #{lstm_mlp_forward.1} parent=1 // pred_fallthru
      _
    // Predicated region
    $region30: #{lstm_mlp_forward.1} parent=1 // pred_check
      _
    $region31: #{lstm_mlp_forward.1} parent=1 // pred_check_branch
      %55 = sbr.rel (0) target = $region33
    $region32: #{lstm_mlp_forward.1} parent=1 // pred_region
      _
    $region33: #{lstm_mlp_forward.1} parent=1 // pred_fallthru
      _
    // Predicated region
    $region34: #{lstm_mlp_forward.1} parent=1 // pred_check
      _
    $region35: #{lstm_mlp_forward.1} parent=1 // pred_check_branch
      %57 = sbr.rel (0) target = $region37
    $region36: #{lstm_mlp_forward.1} parent=1 // pred_region
      %s59 = ssub.s32 16384, 16384
      %60 = vsyncadd [#allocation6], %s59
      %s61 = sshll.u32 [#allocation7], 4
      %s62 = int_to_ptr.vmem [resolvable:$true] %s61
      %67 = dma.hbm_to_vmem [thread:$0]  %s8, 16384, %s62, [#allocation6], 512, 512, 32
    $region37: #{lstm_mlp_forward.1} parent=1 // pred_fallthru
      _
    // Predicated region
    $region38: #{lstm_mlp_forward.1} parent=1 // pred_check
      _
    $region39: #{lstm_mlp_forward.1} parent=1 // pred_check_branch
      %69 = sbr.rel (0) target = $region41
    $region40: #{lstm_mlp_forward.1} parent=1 // pred_region
      _
    $region41: #{lstm_mlp_forward.1} parent=1 // pred_fallthru
      _
    // Predicated region
    $region42: #{lstm_mlp_forward.1} parent=1 // pred_check
      _
    $region43: #{lstm_mlp_forward.1} parent=1 // pred_check_branch
      %71 = sbr.rel (0) target = $region45
    $region44: #{lstm_mlp_forward.1} parent=1 // pred_region
      _
    $region45: #{lstm_mlp_forward.1} parent=1 // pred_fallthru
      _
    // Predicated region
    $region46: #{lstm_mlp_forward.1} parent=1 // pred_check
      _
    $region47: #{lstm_mlp_forward.1} parent=1 // pred_check_branch
      %73 = sbr.rel (0) target = $region49
    $region48: #{lstm_mlp_forward.1} parent=1 // pred_region
      _
    $region49: #{lstm_mlp_forward.1} parent=1 // pred_fallthru
      _
    // Predicated region
    $region50: #{lstm_mlp_forward.1} parent=1 // pred_check
      _
    $region51: #{lstm_mlp_forward.1} parent=1 // pred_check_branch
      %75 = sbr.rel (0) target = $region53
    $region52: #{lstm_mlp_forward.1} parent=1 // pred_region
      %76 = dma.done [#allocation3], 4096
    $region53: #{lstm_mlp_forward.1} parent=1 // pred_fallthru
      _
    // Predicated region
    $region54: #{lstm_mlp_forward.1} parent=1 // pred_check
      _
    $region55: #{lstm_mlp_forward.1} parent=1 // pred_check_branch
      %78 = sbr.rel (0) target = $region57
    $region56: #{lstm_mlp_forward.1} parent=1 // pred_region
      %79 = dma.done [#allocation6], 8192
    $region57: #{lstm_mlp_forward.1} parent=1 // pred_fallthru
      _
    // Predicated region
    $region58: #{lstm_mlp_forward.1} parent=1 // pred_check
      _
    $region59: #{lstm_mlp_forward.1} parent=1 // pred_check_branch
      %81 = sbr.rel (0) target = $region61
    $region60: #{lstm_mlp_forward.1} parent=1 // pred_region
      %82 = dma.done [#allocation6], 16384
    $region61: #{lstm_mlp_forward.1} parent=1 // pred_fallthru
      _
    %v83 = vld [vmem:[%s0] sm:$0xff]
    %v84 = vld [vmem:[%s0 + $0x8] sm:$0xff]
    %v85 = vld [vmem:[%s1] sm:$0xff]
    %v86 = vld [vmem:[%s1 + $0x8] sm:$0xff]
    %v87 = vld [vmem:[%s2] sm:$0x1]
    %v89 = vlaneseq
    %v90 = vshrl.u32 %v89, 7
    %v91 = vsub.s32 0, %v90
    %v92 = vrot.slane %v87, %v91
    %vm94 = vcmask 130048
    %v96 = vsel %vm94, %v83, 0
    %v99 = vsel %vm94, %v84, 0
    %101 = vmatprep.subr.mxu0 0.0
    %102 = vmatpush1.msra.mxu0 %v85
    %103 = vmatprep.subr.mxu0 0.0
    %104 = vmatpush1.msra.mxu0 %v86
    %105 = vmatprep.subr.mxu0 0.0
    %106 = vmatpush1.msra.mxu0 0.0
    %107 = vmatprep.subr.mxu0 0.0
    %108 = vmatpush1.msra.mxu0 0.0
    %109 = vmatprep.subr.mxu0 0.0
    %110 = vmatpush1.msra.mxu0 0.0
    %111 = vmatprep.subr.mxu0 0.0
    %112 = vmatpush1.msra.mxu0 0.0
    %113 = vmatprep.subr.mxu0 0.0
    %114 = vmatpush1.msra.mxu0 0.0
    %115 = vmatprep.subr.mxu0 0.0
    %116 = vmatpush1.msra.mxu0 0.0
    %117 = vmatprep.subr.mxu0 0.0
    %118 = vmatpush1.msra.mxu0 0.0
    %119 = vmatprep.subr.mxu0 0.0
    %120 = vmatpush1.msra.mxu0 0.0
    %121 = vmatprep.subr.mxu0 0.0
    %122 = vmatpush1.msra.mxu0 0.0
    %123 = vmatprep.subr.mxu0 0.0
    %124 = vmatpush1.msra.mxu0 0.0
    %125 = vmatprep.subr.mxu0 0.0
    %126 = vmatpush1.msra.mxu0 0.0
    %127 = vmatprep.subr.mxu0 0.0
    %128 = vmatpush1.msra.mxu0 0.0
    %129 = vmatprep.subr.mxu0 0.0
    %130 = vmatpush1.msra.mxu0 0.0
    %131 = vmatprep.subr.mxu0 0.0
    %132 = vmatpush1.msra.mxu0 0.0
    %133 = vmatprep.subr.mxu0 0.0
    %134 = vmatpush1.msra.mxu0 0.0
    %135 = vmatprep.subr.mxu0 0.0
    %136 = vmatpush1.msra.mxu0 0.0
    %137 = vmatprep.subr.mxu0 0.0
    %138 = vmatpush1.msra.mxu0 0.0
    %139 = vmatprep.subr.mxu0 0.0
    %140 = vmatpush1.msra.mxu0 0.0
    %141 = vmatprep.subr.mxu0 0.0
    %142 = vmatpush1.msra.mxu0 0.0
    %143 = vmatprep.subr.mxu0 0.0
    %144 = vmatpush1.msra.mxu0 0.0
    %145 = vmatprep.subr.mxu0 0.0
    %146 = vmatpush1.msra.mxu0 0.0
    %147 = vmatprep.subr.mxu0 0.0
    %148 = vmatpush1.msra.mxu0 0.0
    %149 = vmatprep.subr.mxu0 0.0
    %150 = vmatpush1.msra.mxu0 0.0
    %151 = vmatprep.subr.mxu0 0.0
    %152 = vmatpush1.msra.mxu0 0.0
    %153 = vmatprep.subr.mxu0 0.0
    %154 = vmatpush1.msra.mxu0 0.0
    %155 = vmatprep.subr.mxu0 0.0
    %156 = vmatpush1.msra.mxu0 0.0
    %157 = vmatprep.subr.mxu0 0.0
    %158 = vmatpush1.msra.mxu0 0.0
    %159 = vmatprep.subr.mxu0 0.0
    %160 = vmatpush1.msra.mxu0 0.0
    %161 = vmatprep.subr.mxu0 0.0
    %162 = vmatpush1.msra.mxu0 0.0
    %163 = vmatprep.subr.mxu0 0.0
    %164 = vmatpush1.msra.mxu0 0.0
    %165 = vmatprep.mubr.f32.mxu0 0.0
    %166 = vmatmul.mubr.f32.gmra.mrb[0].mxu0 %v96
    %v167 = vpop.f32.mrb[0].mxu0
    %v168 = vadd.f32 %v92, %v167
    %v169 = vpop.f32.mrb[0].mxu0
    %170 = vmatprep.mubr.f32.mxu0 0.0
    %171 = vmatmul.mubr.f32.gmra.mrb[0].mxu0 %v99
    %v172 = vpop.f32.mrb[0].mxu0
    %v173 = vadd.f32 %v92, %v172
    %v174 = vpop.f32.mrb[0].mxu0
    %175 = vdwg.mxu0
    %vm176 = vcmask 523264
    %v177 = vsel %vm176, %v168, 0.0
    %v178 = vsel %vm176, %v173, 0.0
    %v179 = vadd.f32 %v177, %v178
    %v180 = vrot.slane %v179, 4
    %v181 = vadd.f32 %v179, %v180
    %v182 = vrot.slane %v181, 2
    %v183 = vadd.f32 %v181, %v182
    %v184 = vrot.slane %v183, 1
    %v185 = vadd.f32 %v183, %v184
    %v186 = vrcp.pop 16.0
    %v187 = vmul.f32 %v185, %v186
    %v188 = vmul.f32 %v168, %v168
    %v189 = vmul.f32 %v173, %v173
    %v190 = vsel %vm176, %v188, 0.0
    %v191 = vsel %vm176, %v189, 0.0
    %v192 = vadd.f32 %v190, %v191
    %v193 = vrot.slane %v192, 4
    %v194 = vadd.f32 %v192, %v193
    %v195 = vrot.slane %v194, 2
    %v196 = vadd.f32 %v194, %v195
    %v197 = vrot.slane %v196, 1
    %v198 = vadd.f32 %v196, %v197
    %v199 = vmul.f32 %v198, %v186
    %v200 = vmul.f32 %v187, %v187
    %v201 = vsub.f32 %v199, %v200
    %v202 = vld [vmem:[%s3] sm:$0x1]
    %v203 = vadd.f32 %v201, 1e-05
    %v204 = vrsqrt.pop %v203
    %v205 = vmul.f32 %v202, %v204
    %v206 = vld [vmem:[%s4] sm:$0x1]
    %v207 = vmul.f32 %v187, %v205
    %v208 = vsub.f32 %v206, %v207
    %v210 = vlaneseq
    %v211 = vshrl.u32 %v210, 7
    %v212 = vsub.s32 0, %v211
    %v213 = vrot.slane %v205, %v212
    %v215 = vmul.f32 %v168, %v213
    %v216 = vmul.f32 %v173, %v213
    %v218 = vlaneseq
    %v219 = vshrl.u32 %v218, 7
    %v220 = vsub.s32 0, %v219
    %v221 = vrot.slane %v208, %v220
    %v223 = vadd.f32 %v215, %v221
    %v224 = vadd.f32 %v216, %v221
    %v225 = vmax.f32 %v223, 0.0
    %v226 = vmax.f32 %v224, 0.0
    %v227 = vld [vmem:[#allocation2] sm:$0xff]
    %v228 = vld [vmem:[#allocation2 + $0x8] sm:$0xff]
    %v229 = vld [vmem:[#allocation2 + $0x10] sm:$0xff]
    %v230 = vld [vmem:[#allocation2 + $0x18] sm:$0xff]
    %v231 = vld [vmem:[#allocation2 + $0x20] sm:$0xff]
    %v232 = vld [vmem:[#allocation2 + $0x28] sm:$0xff]
    %v233 = vld [vmem:[#allocation2 + $0x30] sm:$0xff]
    %v234 = vld [vmem:[#allocation2 + $0x38] sm:$0xff]
    %v235 = vld [vmem:[#allocation2 + $0x40] sm:$0xff]
    %v236 = vld [vmem:[#allocation2 + $0x48] sm:$0xff]
    %v237 = vld [vmem:[#allocation2 + $0x50] sm:$0xff]
    %v238 = vld [vmem:[#allocation2 + $0x58] sm:$0xff]
    %v239 = vld [vmem:[#allocation2 + $0x60] sm:$0xff]
    %v240 = vld [vmem:[#allocation2 + $0x68] sm:$0xff]
    %v241 = vld [vmem:[#allocation2 + $0x70] sm:$0xff]
    %v242 = vld [vmem:[#allocation2 + $0x78] sm:$0xff]
    %v243 = vld [vmem:[#allocation2 + $0x80] sm:$0xff]
    %v244 = vld [vmem:[#allocation2 + $0x88] sm:$0xff]
    %v245 = vld [vmem:[#allocation2 + $0x90] sm:$0xff]
    %v246 = vld [vmem:[#allocation2 + $0x98] sm:$0xff]
    %v247 = vld [vmem:[#allocation2 + $0xa0] sm:$0xff]
    %v248 = vld [vmem:[#allocation2 + $0xa8] sm:$0xff]
    %v249 = vld [vmem:[#allocation2 + $0xb0] sm:$0xff]
    %v250 = vld [vmem:[#allocation2 + $0xb8] sm:$0xff]
    %v251 = vld [vmem:[#allocation2 + $0xc0] sm:$0xff]
    %v252 = vld [vmem:[#allocation2 + $0xc8] sm:$0xff]
    %v253 = vld [vmem:[#allocation2 + $0xd0] sm:$0xff]
    %v254 = vld [vmem:[#allocation2 + $0xd8] sm:$0xff]
    %v255 = vld [vmem:[#allocation2 + $0xe0] sm:$0xff]
    %v256 = vld [vmem:[#allocation2 + $0xe8] sm:$0xff]
    %v257 = vld [vmem:[#allocation2 + $0xf0] sm:$0xff]
    %v258 = vld [vmem:[#allocation2 + $0xf8] sm:$0xff]
    %v259 = vld [vmem:[%s7] sm:$0xf]
    %v261 = vlaneseq
    %v262 = vshrl.u32 %v261, 7
    %v263 = vsub.s32 0, %v262
    %v264 = vrot.slane %v259, %v263
    %v265 = vlaneseq
    %v266 = vshrl.u32 %v265, 7
    %v267 = vsub.s32 1, %v266
    %v268 = vrot.slane %v259, %v267
    %v269 = vlaneseq
    %v270 = vshrl.u32 %v269, 7
    %v271 = vsub.s32 2, %v270
    %v272 = vrot.slane %v259, %v271
    %v273 = vlaneseq
    %v274 = vshrl.u32 %v273, 7
    %v275 = vsub.s32 3, %v274
    %v276 = vrot.slane %v259, %v275
    %v282 = vsel %vm176, %v225, 0
    %v285 = vsel %vm176, %v226, 0
    %287 = vmatprep.subr.mxu0 %v228
    %288 = vmatpush1.msra.mxu0 %v227
    %289 = vmatprep.subr.mxu0 %v232
    %290 = vmatpush1.msra.mxu0 %v231
    %291 = vmatprep.subr.mxu0 %v236
    %292 = vmatpush1.msra.mxu0 %v235
    %293 = vmatprep.subr.mxu0 %v240
    %294 = vmatpush1.msra.mxu0 %v239
    %295 = vmatprep.subr.mxu0 %v244
    %296 = vmatpush1.msra.mxu0 %v243
    %297 = vmatprep.subr.mxu0 %v248
    %298 = vmatpush1.msra.mxu0 %v247
    %299 = vmatprep.subr.mxu0 %v252
    %300 = vmatpush1.msra.mxu0 %v251
    %301 = vmatprep.subr.mxu0 %v256
    %302 = vmatpush1.msra.mxu0 %v255
    %303 = vmatprep.subr.mxu0 0.0
    %304 = vmatpush1.msra.mxu0 0.0
    %305 = vmatprep.subr.mxu0 0.0
    %306 = vmatpush1.msra.mxu0 0.0
    %307 = vmatprep.subr.mxu0 0.0
    %308 = vmatpush1.msra.mxu0 0.0
    %309 = vmatprep.subr.mxu0 0.0
    %310 = vmatpush1.msra.mxu0 0.0
    %311 = vmatprep.subr.mxu0 0.0
    %312 = vmatpush1.msra.mxu0 0.0
    %313 = vmatprep.subr.mxu0 0.0
    %314 = vmatpush1.msra.mxu0 0.0
    %315 = vmatprep.subr.mxu0 0.0
    %316 = vmatpush1.msra.mxu0 0.0
    %317 = vmatprep.subr.mxu0 0.0
    %318 = vmatpush1.msra.mxu0 0.0
    %319 = vmatprep.subr.mxu0 0.0
    %320 = vmatpush1.msra.mxu0 0.0
    %321 = vmatprep.subr.mxu0 0.0
    %322 = vmatpush1.msra.mxu0 0.0
    %323 = vmatprep.subr.mxu0 0.0
    %324 = vmatpush1.msra.mxu0 0.0
    %325 = vmatprep.subr.mxu0 0.0
    %326 = vmatpush1.msra.mxu0 0.0
    %327 = vmatprep.subr.mxu0 0.0
    %328 = vmatpush1.msra.mxu0 0.0
    %329 = vmatprep.subr.mxu0 0.0
    %330 = vmatpush1.msra.mxu0 0.0
    %331 = vmatprep.subr.mxu0 0.0
    %332 = vmatpush1.msra.mxu0 0.0
    %333 = vmatprep.subr.mxu0 0.0
    %334 = vmatpush1.msra.mxu0 0.0
    %335 = vmatprep.subr.mxu0 0.0
    %336 = vmatpush1.msra.mxu0 0.0
    %337 = vmatprep.subr.mxu0 0.0
    %338 = vmatpush1.msra.mxu0 0.0
    %339 = vmatprep.subr.mxu0 0.0
    %340 = vmatpush1.msra.mxu0 0.0
    %341 = vmatprep.subr.mxu0 0.0
    %342 = vmatpush1.msra.mxu0 0.0
    %343 = vmatprep.subr.mxu0 0.0
    %344 = vmatpush1.msra.mxu0 0.0
    %345 = vmatprep.subr.mxu0 0.0
    %346 = vmatpush1.msra.mxu0 0.0
    %347 = vmatprep.subr.mxu0 0.0
    %348 = vmatpush1.msra.mxu0 0.0
    %349 = vmatprep.subr.mxu0 0.0
    %350 = vmatpush1.msra.mxu0 0.0
    %351 = vmatprep.mubr.f32.mxu0 0.0
    %352 = vmatmul.mubr.f32.gmra.mrb[0].mxu0 %v282
    %v353 = vpop.f32.mrb[0].mxu0
    %v354 = vadd.f32 %v264, %v353
    %v355 = vpop.f32.mrb[0].mxu0
    %v356 = vadd.f32 %v268, %v355
    %357 = vmatprep.mubr.f32.mxu0 0.0
    %358 = vmatmul.mubr.f32.gmra.mrb[0].mxu0 %v285
    %v359 = vpop.f32.mrb[0].mxu0
    %v360 = vadd.f32 %v264, %v359
    %v361 = vpop.f32.mrb[0].mxu0
    %v362 = vadd.f32 %v268, %v361
    %363 = vdwg.mxu0
    %364 = vmatprep.subr.mxu0 %v230
    %365 = vmatpush1.msra.mxu0 %v229
    %366 = vmatprep.subr.mxu0 %v234
    %367 = vmatpush1.msra.mxu0 %v233
    %368 = vmatprep.subr.mxu0 %v238
    %369 = vmatpush1.msra.mxu0 %v237
    %370 = vmatprep.subr.mxu0 %v242
    %371 = vmatpush1.msra.mxu0 %v241
    %372 = vmatprep.subr.mxu0 %v246
    %373 = vmatpush1.msra.mxu0 %v245
    %374 = vmatprep.subr.mxu0 %v250
    %375 = vmatpush1.msra.mxu0 %v249
    %376 = vmatprep.subr.mxu0 %v254
    %377 = vmatpush1.msra.mxu0 %v253
    %378 = vmatprep.subr.mxu0 %v258
    %379 = vmatpush1.msra.mxu0 %v257
    %380 = vmatprep.subr.mxu0 0.0
    %381 = vmatpush1.msra.mxu0 0.0
    %382 = vmatprep.subr.mxu0 0.0
    %383 = vmatpush1.msra.mxu0 0.0
    %384 = vmatprep.subr.mxu0 0.0
    %385 = vmatpush1.msra.mxu0 0.0
    %386 = vmatprep.subr.mxu0 0.0
    %387 = vmatpush1.msra.mxu0 0.0
    %388 = vmatprep.subr.mxu0 0.0
    %389 = vmatpush1.msra.mxu0 0.0
    %390 = vmatprep.subr.mxu0 0.0
    %391 = vmatpush1.msra.mxu0 0.0
    %392 = vmatprep.subr.mxu0 0.0
    %393 = vmatpush1.msra.mxu0 0.0
    %394 = vmatprep.subr.mxu0 0.0
    %395 = vmatpush1.msra.mxu0 0.0
    %396 = vmatprep.subr.mxu0 0.0
    %397 = vmatpush1.msra.mxu0 0.0
    %398 = vmatprep.subr.mxu0 0.0
    %399 = vmatpush1.msra.mxu0 0.0
    %400 = vmatprep.subr.mxu0 0.0
    %401 = vmatpush1.msra.mxu0 0.0
    %402 = vmatprep.subr.mxu0 0.0
    %403 = vmatpush1.msra.mxu0 0.0
    %404 = vmatprep.subr.mxu0 0.0
    %405 = vmatpush1.msra.mxu0 0.0
    %406 = vmatprep.subr.mxu0 0.0
    %407 = vmatpush1.msra.mxu0 0.0
    %408 = vmatprep.subr.mxu0 0.0
    %409 = vmatpush1.msra.mxu0 0.0
    %410 = vmatprep.subr.mxu0 0.0
    %411 = vmatpush1.msra.mxu0 0.0
    %412 = vmatprep.subr.mxu0 0.0
    %413 = vmatpush1.msra.mxu0 0.0
    %414 = vmatprep.subr.mxu0 0.0
    %415 = vmatpush1.msra.mxu0 0.0
    %416 = vmatprep.subr.mxu0 0.0
    %417 = vmatpush1.msra.mxu0 0.0
    %418 = vmatprep.subr.mxu0 0.0
    %419 = vmatpush1.msra.mxu0 0.0
    %420 = vmatprep.subr.mxu0 0.0
    %421 = vmatpush1.msra.mxu0 0.0
    %422 = vmatprep.subr.mxu0 0.0
    %423 = vmatpush1.msra.mxu0 0.0
    %424 = vmatprep.subr.mxu0 0.0
    %425 = vmatpush1.msra.mxu0 0.0
    %426 = vmatprep.subr.mxu0 0.0
    %427 = vmatpush1.msra.mxu0 0.0
    %428 = vmatprep.mubr.f32.mxu0 0.0
    %429 = vmatmul.mubr.f32.gmra.mrb[0].mxu0 %v282
    %v430 = vpop.f32.mrb[0].mxu0
    %v431 = vadd.f32 %v272, %v430
    %v432 = vpop.f32.mrb[0].mxu0
    %v433 = vadd.f32 %v276, %v432
    %434 = vmatprep.mubr.f32.mxu0 0.0
    %435 = vmatmul.mubr.f32.gmra.mrb[0].mxu0 %v285
    %v436 = vpop.f32.mrb[0].mxu0
    %v437 = vadd.f32 %v272, %v436
    %v438 = vpop.f32.mrb[0].mxu0
    %v439 = vadd.f32 %v276, %v438
    %440 = vdwg.mxu0
    %v441 = vld [vmem:[#allocation5] sm:$0xff]
    %v442 = vld [vmem:[#allocation5 + $0x8] sm:$0xff]
    %v443 = vld [vmem:[#allocation5 + $0x10] sm:$0xff]
    %v444 = vld [vmem:[#allocation5 + $0x18] sm:$0xff]
    %v445 = vld [vmem:[#allocation5 + $0x20] sm:$0xff]
    %v446 = vld [vmem:[#allocation5 + $0x28] sm:$0xff]
    %v447 = vld [vmem:[#allocation5 + $0x30] sm:$0xff]
    %v448 = vld [vmem:[#allocation5 + $0x38] sm:$0xff]
    %v449 = vld [vmem:[#allocation5 + $0x40] sm:$0xff]
    %v450 = vld [vmem:[#allocation5 + $0x48] sm:$0xff]
    %v451 = vld [vmem:[#allocation5 + $0x50] sm:$0xff]
    %v452 = vld [vmem:[#allocation5 + $0x58] sm:$0xff]
    %v453 = vld [vmem:[#allocation5 + $0x60] sm:$0xff]
    %v454 = vld [vmem:[#allocation5 + $0x68] sm:$0xff]
    %v455 = vld [vmem:[#allocation5 + $0x70] sm:$0xff]
    %v456 = vld [vmem:[#allocation5 + $0x78] sm:$0xff]
    %v457 = vld [vmem:[#allocation5 + $0x80] sm:$0xff]
    %v458 = vld [vmem:[#allocation5 + $0x88] sm:$0xff]
    %v459 = vld [vmem:[#allocation5 + $0x90] sm:$0xff]
    %v460 = vld [vmem:[#allocation5 + $0x98] sm:$0xff]
    %v461 = vld [vmem:[#allocation5 + $0xa0] sm:$0xff]
    %v462 = vld [vmem:[#allocation5 + $0xa8] sm:$0xff]
    %v463 = vld [vmem:[#allocation5 + $0xb0] sm:$0xff]
    %v464 = vld [vmem:[#allocation5 + $0xb8] sm:$0xff]
    %v465 = vld [vmem:[#allocation5 + $0xc0] sm:$0xff]
    %v466 = vld [vmem:[#allocation5 + $0xc8] sm:$0xff]
    %v467 = vld [vmem:[#allocation5 + $0xd0] sm:$0xff]
    %v468 = vld [vmem:[#allocation5 + $0xd8] sm:$0xff]
    %v469 = vld [vmem:[#allocation5 + $0xe0] sm:$0xff]
    %v470 = vld [vmem:[#allocation5 + $0xe8] sm:$0xff]
    %v471 = vld [vmem:[#allocation5 + $0xf0] sm:$0xff]
    %v472 = vld [vmem:[#allocation5 + $0xf8] sm:$0xff]
    %v473 = vld [vmem:[#allocation5 + $0x100] sm:$0xff]
    %v474 = vld [vmem:[#allocation5 + $0x108] sm:$0xff]
    %v475 = vld [vmem:[#allocation5 + $0x110] sm:$0xff]
    %v476 = vld [vmem:[#allocation5 + $0x118] sm:$0xff]
    %v477 = vld [vmem:[#allocation5 + $0x120] sm:$0xff]
    %v478 = vld [vmem:[#allocation5 + $0x128] sm:$0xff]
    %v479 = vld [vmem:[#allocation5 + $0x130] sm:$0xff]
    %v480 = vld [vmem:[#allocation5 + $0x138] sm:$0xff]
    %v481 = vld [vmem:[#allocation5 + $0x140] sm:$0xff]
    %v482 = vld [vmem:[#allocation5 + $0x148] sm:$0xff]
    %v483 = vld [vmem:[#allocation5 + $0x150] sm:$0xff]
    %v484 = vld [vmem:[#allocation5 + $0x158] sm:$0xff]
    %v485 = vld [vmem:[#allocation5 + $0x160] sm:$0xff]
    %v486 = vld [vmem:[#allocation5 + $0x168] sm:$0xff]
    %v487 = vld [vmem:[#allocation5 + $0x170] sm:$0xff]
    %v488 = vld [vmem:[#allocation5 + $0x178] sm:$0xff]
    %v489 = vld [vmem:[#allocation5 + $0x180] sm:$0xff]
    %v490 = vld [vmem:[#allocation5 + $0x188] sm:$0xff]
    %v491 = vld [vmem:[#allocation5 + $0x190] sm:$0xff]
    %v492 = vld [vmem:[#allocation5 + $0x198] sm:$0xff]
    %v493 = vld [vmem:[#allocation5 + $0x1a0] sm:$0xff]
    %v494 = vld [vmem:[#allocation5 + $0x1a8] sm:$0xff]
    %v495 = vld [vmem:[#allocation5 + $0x1b0] sm:$0xff]
    %v496 = vld [vmem:[#allocation5 + $0x1b8] sm:$0xff]
    %v497 = vld [vmem:[#allocation5 + $0x1c0] sm:$0xff]
    %v498 = vld [vmem:[#allocation5 + $0x1c8] sm:$0xff]
    %v499 = vld [vmem:[#allocation5 + $0x1d0] sm:$0xff]
    %v500 = vld [vmem:[#allocation5 + $0x1d8] sm:$0xff]
    %v501 = vld [vmem:[#allocation5 + $0x1e0] sm:$0xff]
    %v502 = vld [vmem:[#allocation5 + $0x1e8] sm:$0xff]
    %v503 = vld [vmem:[#allocation5 + $0x1f0] sm:$0xff]
    %v504 = vld [vmem:[#allocation5 + $0x1f8] sm:$0xff]
    %v505 = vld [vmem:[#allocation7] sm:$0xff]
    %v506 = vld [vmem:[#allocation7 + $0x8] sm:$0xff]
    %v507 = vld [vmem:[#allocation7 + $0x10] sm:$0xff]
    %v508 = vld [vmem:[#allocation7 + $0x18] sm:$0xff]
    %v509 = vld [vmem:[#allocation7 + $0x20] sm:$0xff]
    %v510 = vld [vmem:[#allocation7 + $0x28] sm:$0xff]
    %v511 = vld [vmem:[#allocation7 + $0x30] sm:$0xff]
    %v512 = vld [vmem:[#allocation7 + $0x38] sm:$0xff]
    %v513 = vld [vmem:[#allocation7 + $0x40] sm:$0xff]
    %v514 = vld [vmem:[#allocation7 + $0x48] sm:$0xff]
    %v515 = vld [vmem:[#allocation7 + $0x50] sm:$0xff]
    %v516 = vld [vmem:[#allocation7 + $0x58] sm:$0xff]
    %v517 = vld [vmem:[#allocation7 + $0x60] sm:$0xff]
    %v518 = vld [vmem:[#allocation7 + $0x68] sm:$0xff]
    %v519 = vld [vmem:[#allocation7 + $0x70] sm:$0xff]
    %v520 = vld [vmem:[#allocation7 + $0x78] sm:$0xff]
    %v521 = vld [vmem:[#allocation7 + $0x80] sm:$0xff]
    %v522 = vld [vmem:[#allocation7 + $0x88] sm:$0xff]
    %v523 = vld [vmem:[#allocation7 + $0x90] sm:$0xff]
    %v524 = vld [vmem:[#allocation7 + $0x98] sm:$0xff]
    %v525 = vld [vmem:[#allocation7 + $0xa0] sm:$0xff]
    %v526 = vld [vmem:[#allocation7 + $0xa8] sm:$0xff]
    %v527 = vld [vmem:[#allocation7 + $0xb0] sm:$0xff]
    %v528 = vld [vmem:[#allocation7 + $0xb8] sm:$0xff]
    %v529 = vld [vmem:[#allocation7 + $0xc0] sm:$0xff]
    %v530 = vld [vmem:[#allocation7 + $0xc8] sm:$0xff]
    %v531 = vld [vmem:[#allocation7 + $0xd0] sm:$0xff]
    %v532 = vld [vmem:[#allocation7 + $0xd8] sm:$0xff]
    %v533 = vld [vmem:[#allocation7 + $0xe0] sm:$0xff]
    %v534 = vld [vmem:[#allocation7 + $0xe8] sm:$0xff]
    %v535 = vld [vmem:[#allocation7 + $0xf0] sm:$0xff]
    %v536 = vld [vmem:[#allocation7 + $0xf8] sm:$0xff]
    %v537 = vld [vmem:[#allocation7 + $0x100] sm:$0xff]
    %v538 = vld [vmem:[#allocation7 + $0x108] sm:$0xff]
    %v539 = vld [vmem:[#allocation7 + $0x110] sm:$0xff]
    %v540 = vld [vmem:[#allocation7 + $0x118] sm:$0xff]
    %v541 = vld [vmem:[#allocation7 + $0x120] sm:$0xff]
    %v542 = vld [vmem:[#allocation7 + $0x128] sm:$0xff]
    %v543 = vld [vmem:[#allocation7 + $0x130] sm:$0xff]
    %v544 = vld [vmem:[#allocation7 + $0x138] sm:$0xff]
    %v545 = vld [vmem:[#allocation7 + $0x140] sm:$0xff]
    %v546 = vld [vmem:[#allocation7 + $0x148] sm:$0xff]
    %v547 = vld [vmem:[#allocation7 + $0x150] sm:$0xff]
    %v548 = vld [vmem:[#allocation7 + $0x158] sm:$0xff]
    %v549 = vld [vmem:[#allocation7 + $0x160] sm:$0xff]
    %v550 = vld [vmem:[#allocation7 + $0x168] sm:$0xff]
    %v551 = vld [vmem:[#allocation7 + $0x170] sm:$0xff]
    %v552 = vld [vmem:[#allocation7 + $0x178] sm:$0xff]
    %v553 = vld [vmem:[#allocation7 + $0x180] sm:$0xff]
    %v554 = vld [vmem:[#allocation7 + $0x188] sm:$0xff]
    %v555 = vld [vmem:[#allocation7 + $0x190] sm:$0xff]
    %v556 = vld [vmem:[#allocation7 + $0x198] sm:$0xff]
    %v557 = vld [vmem:[#allocation7 + $0x1a0] sm:$0xff]
    %v558 = vld [vmem:[#allocation7 + $0x1a8] sm:$0xff]
    %v559 = vld [vmem:[#allocation7 + $0x1b0] sm:$0xff]
    %v560 = vld [vmem:[#allocation7 + $0x1b8] sm:$0xff]
    %v561 = vld [vmem:[#allocation7 + $0x1c0] sm:$0xff]
    %v562 = vld [vmem:[#allocation7 + $0x1c8] sm:$0xff]
    %v563 = vld [vmem:[#allocation7 + $0x1d0] sm:$0xff]
    %v564 = vld [vmem:[#allocation7 + $0x1d8] sm:$0xff]
    %v565 = vld [vmem:[#allocation7 + $0x1e0] sm:$0xff]
    %v566 = vld [vmem:[#allocation7 + $0x1e8] sm:$0xff]
    %v567 = vld [vmem:[#allocation7 + $0x1f0] sm:$0xff]
    %v568 = vld [vmem:[#allocation7 + $0x1f8] sm:$0xff]
    %v569 = vld [vmem:[#allocation7 + $0x200] sm:$0xff]
    %v570 = vld [vmem:[#allocation7 + $0x208] sm:$0xff]
    %v571 = vld [vmem:[#allocation7 + $0x210] sm:$0xff]
    %v572 = vld [vmem:[#allocation7 + $0x218] sm:$0xff]
    %v573 = vld [vmem:[#allocation7 + $0x220] sm:$0xff]
    %v574 = vld [vmem:[#allocation7 + $0x228] sm:$0xff]
    %v575 = vld [vmem:[#allocation7 + $0x230] sm:$0xff]
    %v576 = vld [vmem:[#allocation7 + $0x238] sm:$0xff]
    %v577 = vld [vmem:[#allocation7 + $0x240] sm:$0xff]
    %v578 = vld [vmem:[#allocation7 + $0x248] sm:$0xff]
    %v579 = vld [vmem:[#allocation7 + $0x250] sm:$0xff]
    %v580 = vld [vmem:[#allocation7 + $0x258] sm:$0xff]
    %v581 = vld [vmem:[#allocation7 + $0x260] sm:$0xff]
    %v582 = vld [vmem:[#allocation7 + $0x268] sm:$0xff]
    %v583 = vld [vmem:[#allocation7 + $0x270] sm:$0xff]
    %v584 = vld [vmem:[#allocation7 + $0x278] sm:$0xff]
    %v585 = vld [vmem:[#allocation7 + $0x280] sm:$0xff]
    %v586 = vld [vmem:[#allocation7 + $0x288] sm:$0xff]
    %v587 = vld [vmem:[#allocation7 + $0x290] sm:$0xff]
    %v588 = vld [vmem:[#allocation7 + $0x298] sm:$0xff]
    %v589 = vld [vmem:[#allocation7 + $0x2a0] sm:$0xff]
    %v590 = vld [vmem:[#allocation7 + $0x2a8] sm:$0xff]
    %v591 = vld [vmem:[#allocation7 + $0x2b0] sm:$0xff]
    %v592 = vld [vmem:[#allocation7 + $0x2b8] sm:$0xff]
    %v593 = vld [vmem:[#allocation7 + $0x2c0] sm:$0xff]
    %v594 = vld [vmem:[#allocation7 + $0x2c8] sm:$0xff]
    %v595 = vld [vmem:[#allocation7 + $0x2d0] sm:$0xff]
    %v596 = vld [vmem:[#allocation7 + $0x2d8] sm:$0xff]
    %v597 = vld [vmem:[#allocation7 + $0x2e0] sm:$0xff]
    %v598 = vld [vmem:[#allocation7 + $0x2e8] sm:$0xff]
    %v599 = vld [vmem:[#allocation7 + $0x2f0] sm:$0xff]
    %v600 = vld [vmem:[#allocation7 + $0x2f8] sm:$0xff]
    %v601 = vld [vmem:[#allocation7 + $0x300] sm:$0xff]
    %v602 = vld [vmem:[#allocation7 + $0x308] sm:$0xff]
    %v603 = vld [vmem:[#allocation7 + $0x310] sm:$0xff]
    %v604 = vld [vmem:[#allocation7 + $0x318] sm:$0xff]
    %v605 = vld [vmem:[#allocation7 + $0x320] sm:$0xff]
    %v606 = vld [vmem:[#allocation7 + $0x328] sm:$0xff]
    %v607 = vld [vmem:[#allocation7 + $0x330] sm:$0xff]
    %v608 = vld [vmem:[#allocation7 + $0x338] sm:$0xff]
    %v609 = vld [vmem:[#allocation7 + $0x340] sm:$0xff]
    %v610 = vld [vmem:[#allocation7 + $0x348] sm:$0xff]
    %v611 = vld [vmem:[#allocation7 + $0x350] sm:$0xff]
    %v612 = vld [vmem:[#allocation7 + $0x358] sm:$0xff]
    %v613 = vld [vmem:[#allocation7 + $0x360] sm:$0xff]
    %v614 = vld [vmem:[#allocation7 + $0x368] sm:$0xff]
    %v615 = vld [vmem:[#allocation7 + $0x370] sm:$0xff]
    %v616 = vld [vmem:[#allocation7 + $0x378] sm:$0xff]
    %v617 = vld [vmem:[#allocation7 + $0x380] sm:$0xff]
    %v618 = vld [vmem:[#allocation7 + $0x388] sm:$0xff]
    %v619 = vld [vmem:[#allocation7 + $0x390] sm:$0xff]
    %v620 = vld [vmem:[#allocation7 + $0x398] sm:$0xff]
    %v621 = vld [vmem:[#allocation7 + $0x3a0] sm:$0xff]
    %v622 = vld [vmem:[#allocation7 + $0x3a8] sm:$0xff]
    %v623 = vld [vmem:[#allocation7 + $0x3b0] sm:$0xff]
    %v624 = vld [vmem:[#allocation7 + $0x3b8] sm:$0xff]
    %v625 = vld [vmem:[#allocation7 + $0x3c0] sm:$0xff]
    %v626 = vld [vmem:[#allocation7 + $0x3c8] sm:$0xff]
    %v627 = vld [vmem:[#allocation7 + $0x3d0] sm:$0xff]
    %v628 = vld [vmem:[#allocation7 + $0x3d8] sm:$0xff]
    %v629 = vld [vmem:[#allocation7 + $0x3e0] sm:$0xff]
    %v630 = vld [vmem:[#allocation7 + $0x3e8] sm:$0xff]
    %v631 = vld [vmem:[#allocation7 + $0x3f0] sm:$0xff]
    %v632 = vld [vmem:[#allocation7 + $0x3f8] sm:$0xff]
    %v633 = vld [vmem:[%s9] sm:$0xf]
    %v635 = vlaneseq
    %v636 = vshrl.u32 %v635, 7
    %v637 = vsub.s32 0, %v636
    %v638 = vrot.slane %v633, %v637
    %v639 = vlaneseq
    %v640 = vshrl.u32 %v639, 7
    %v641 = vsub.s32 1, %v640
    %v642 = vrot.slane %v633, %v641
    %v643 = vlaneseq
    %v644 = vshrl.u32 %v643, 7
    %v645 = vsub.s32 2, %v644
    %v646 = vrot.slane %v633, %v645
    %v647 = vlaneseq
    %v648 = vshrl.u32 %v647, 7
    %v649 = vsub.s32 3, %v648
    %v650 = vrot.slane %v633, %v649
    %655 = vmatprep.subr.mxu0 %v442
    %656 = vmatpush1.msra.mxu0 %v441
    %657 = vmatprep.subr.mxu0 %v446
    %658 = vmatpush1.msra.mxu0 %v445
    %659 = vmatprep.subr.mxu0 %v450
    %660 = vmatpush1.msra.mxu0 %v449
    %661 = vmatprep.subr.mxu0 %v454
    %662 = vmatpush1.msra.mxu0 %v453
    %663 = vmatprep.subr.mxu0 %v458
    %664 = vmatpush1.msra.mxu0 %v457
    %665 = vmatprep.subr.mxu0 %v462
    %666 = vmatpush1.msra.mxu0 %v461
    %667 = vmatprep.subr.mxu0 %v466
    %668 = vmatpush1.msra.mxu0 %v465
    %669 = vmatprep.subr.mxu0 %v470
    %670 = vmatpush1.msra.mxu0 %v469
    %671 = vmatprep.subr.mxu0 %v474
    %672 = vmatpush1.msra.mxu0 %v473
    %673 = vmatprep.subr.mxu0 %v478
    %674 = vmatpush1.msra.mxu0 %v477
    %675 = vmatprep.subr.mxu0 %v482
    %676 = vmatpush1.msra.mxu0 %v481
    %677 = vmatprep.subr.mxu0 %v486
    %678 = vmatpush1.msra.mxu0 %v485
    %679 = vmatprep.subr.mxu0 %v490
    %680 = vmatpush1.msra.mxu0 %v489
    %681 = vmatprep.subr.mxu0 %v494
    %682 = vmatpush1.msra.mxu0 %v493
    %683 = vmatprep.subr.mxu0 %v498
    %684 = vmatpush1.msra.mxu0 %v497
    %685 = vmatprep.subr.mxu0 %v502
    %686 = vmatpush1.msra.mxu0 %v501
    %687 = vmatprep.subr.mxu0 0.0
    %688 = vmatpush1.msra.mxu0 0.0
    %689 = vmatprep.subr.mxu0 0.0
    %690 = vmatpush1.msra.mxu0 0.0
    %691 = vmatprep.subr.mxu0 0.0
    %692 = vmatpush1.msra.mxu0 0.0
    %693 = vmatprep.subr.mxu0 0.0
    %694 = vmatpush1.msra.mxu0 0.0
    %695 = vmatprep.subr.mxu0 0.0
    %696 = vmatpush1.msra.mxu0 0.0
    %697 = vmatprep.subr.mxu0 0.0
    %698 = vmatpush1.msra.mxu0 0.0
    %699 = vmatprep.subr.mxu0 0.0
    %700 = vmatpush1.msra.mxu0 0.0
    %701 = vmatprep.subr.mxu0 0.0
    %702 = vmatpush1.msra.mxu0 0.0
    %703 = vmatprep.subr.mxu0 0.0
    %704 = vmatpush1.msra.mxu0 0.0
    %705 = vmatprep.subr.mxu0 0.0
    %706 = vmatpush1.msra.mxu0 0.0
    %707 = vmatprep.subr.mxu0 0.0
    %708 = vmatpush1.msra.mxu0 0.0
    %709 = vmatprep.subr.mxu0 0.0
    %710 = vmatpush1.msra.mxu0 0.0
    %711 = vmatprep.subr.mxu0 0.0
    %712 = vmatpush1.msra.mxu0 0.0
    %713 = vmatprep.subr.mxu0 0.0
    %714 = vmatpush1.msra.mxu0 0.0
    %715 = vmatprep.subr.mxu0 0.0
    %716 = vmatpush1.msra.mxu0 0.0
    %717 = vmatprep.subr.mxu0 0.0
    %718 = vmatpush1.msra.mxu0 0.0
    %719 = vmatprep.mubr.f32.mxu0 0.0
    %720 = vmatmul.mubr.f32.gmra.mrb[0].mxu0 0.0
    %v721 = vpop.f32.mrb[0].mxu0
    %v722 = vadd.f32 0.0, %v721
    %v723 = vpop.f32.mrb[0].mxu0
    %v724 = vadd.f32 0.0, %v723
    %725 = vdwg.mxu0
    %726 = vmatprep.subr.mxu0 %v444
    %727 = vmatpush1.msra.mxu0 %v443
    %728 = vmatprep.subr.mxu0 %v448
    %729 = vmatpush1.msra.mxu0 %v447
    %730 = vmatprep.subr.mxu0 %v452
    %731 = vmatpush1.msra.mxu0 %v451
    %732 = vmatprep.subr.mxu0 %v456
    %733 = vmatpush1.msra.mxu0 %v455
    %734 = vmatprep.subr.mxu0 %v460
    %735 = vmatpush1.msra.mxu0 %v459
    %736 = vmatprep.subr.mxu0 %v464
    %737 = vmatpush1.msra.mxu0 %v463
    %738 = vmatprep.subr.mxu0 %v468
    %739 = vmatpush1.msra.mxu0 %v467
    %740 = vmatprep.subr.mxu0 %v472
    %741 = vmatpush1.msra.mxu0 %v471
    %742 = vmatprep.subr.mxu0 %v476
    %743 = vmatpush1.msra.mxu0 %v475
    %744 = vmatprep.subr.mxu0 %v480
    %745 = vmatpush1.msra.mxu0 %v479
    %746 = vmatprep.subr.mxu0 %v484
    %747 = vmatpush1.msra.mxu0 %v483
    %748 = vmatprep.subr.mxu0 %v488
    %749 = vmatpush1.msra.mxu0 %v487
    %750 = vmatprep.subr.mxu0 %v492
    %751 = vmatpush1.msra.mxu0 %v491
    %752 = vmatprep.subr.mxu0 %v496
    %753 = vmatpush1.msra.mxu0 %v495
    %754 = vmatprep.subr.mxu0 %v500
    %755 = vmatpush1.msra.mxu0 %v499
    %756 = vmatprep.subr.mxu0 %v504
    %757 = vmatpush1.msra.mxu0 %v503
    %758 = vmatprep.subr.mxu0 0.0
    %759 = vmatpush1.msra.mxu0 0.0
    %760 = vmatprep.subr.mxu0 0.0
    %761 = vmatpush1.msra.mxu0 0.0
    %762 = vmatprep.subr.mxu0 0.0
    %763 = vmatpush1.msra.mxu0 0.0
    %764 = vmatprep.subr.mxu0 0.0
    %765 = vmatpush1.msra.mxu0 0.0
    %766 = vmatprep.subr.mxu0 0.0
    %767 = vmatpush1.msra.mxu0 0.0
    %768 = vmatprep.subr.mxu0 0.0
    %769 = vmatpush1.msra.mxu0 0.0
    %770 = vmatprep.subr.mxu0 0.0
    %771 = vmatpush1.msra.mxu0 0.0
    %772 = vmatprep.subr.mxu0 0.0
    %773 = vmatpush1.msra.mxu0 0.0
    %774 = vmatprep.subr.mxu0 0.0
    %775 = vmatpush1.msra.mxu0 0.0
    %776 = vmatprep.subr.mxu0 0.0
    %777 = vmatpush1.msra.mxu0 0.0
    %778 = vmatprep.subr.mxu0 0.0
    %779 = vmatpush1.msra.mxu0 0.0
    %780 = vmatprep.subr.mxu0 0.0
    %781 = vmatpush1.msra.mxu0 0.0
    %782 = vmatprep.subr.mxu0 0.0
    %783 = vmatpush1.msra.mxu0 0.0
    %784 = vmatprep.subr.mxu0 0.0
    %785 = vmatpush1.msra.mxu0 0.0
    %786 = vmatprep.subr.mxu0 0.0
    %787 = vmatpush1.msra.mxu0 0.0
    %788 = vmatprep.subr.mxu0 0.0
    %789 = vmatpush1.msra.mxu0 0.0
    %790 = vmatprep.mubr.f32.mxu0 0.0
    %791 = vmatmul.mubr.f32.gmra.mrb[0].mxu0 0.0
    %v792 = vpop.f32.mrb[0].mxu0
    %v793 = vadd.f32 0.0, %v792
    %v794 = vpop.f32.mrb[0].mxu0
    %v795 = vadd.f32 0.0, %v794
    %796 = vdwg.mxu0
    %v797 = vadd.f32 %v354, %v722
    %v798 = vadd.f32 %v356, %v724
    %v799 = vadd.f32 %v431, %v793
    %v800 = vadd.f32 %v433, %v795
    %v801 = vxor.u32 %v797, 2147483648
    %v802 = vmul.f32 %v801, 1.442695
    %v803 = vpow.pop %v802
    %v804 = vadd.f32 %v803, 1.0
    %v805 = vrcp.pop %v804
    %v806 = vmul.f32 1.0, %v805
    %v807 = vxor.u32 %v798, 2147483648
    %v808 = vmul.f32 %v807, 1.442695
    %v809 = vpow.pop %v808
    %v810 = vadd.f32 %v809, 1.0
    %v811 = vrcp.pop %v810
    %v812 = vmul.f32 1.0, %v811
    %v813 = vtanh.pop %v799
    %v814 = vxor.u32 %v800, 2147483648
    %v815 = vmul.f32 %v814, 1.442695
    %v816 = vpow.pop %v815
    %v817 = vadd.f32 %v816, 1.0
    %v818 = vrcp.pop %v817
    %v819 = vmul.f32 1.0, %v818
    %v820 = vmul.f32 %v812, 0.0
    %v821 = vmul.f32 %v806, %v813
    %v822 = vadd.f32 %v820, %v821
    %v823 = vtanh.pop %v822
    %v824 = vmul.f32 %v819, %v823
    %825 = vmatprep.subr.mxu0 %v506
    %826 = vmatpush1.msra.mxu0 %v505
    %827 = vmatprep.subr.mxu0 %v510
    %828 = vmatpush1.msra.mxu0 %v509
    %829 = vmatprep.subr.mxu0 %v514
    %830 = vmatpush1.msra.mxu0 %v513
    %831 = vmatprep.subr.mxu0 %v518
    %832 = vmatpush1.msra.mxu0 %v517
    %833 = vmatprep.subr.mxu0 %v522
    %834 = vmatpush1.msra.mxu0 %v521
    %835 = vmatprep.subr.mxu0 %v526
    %836 = vmatpush1.msra.mxu0 %v525
    %837 = vmatprep.subr.mxu0 %v530
    %838 = vmatpush1.msra.mxu0 %v529
    %839 = vmatprep.subr.mxu0 %v534
    %840 = vmatpush1.msra.mxu0 %v533
    %841 = vmatprep.subr.mxu0 %v538
    %842 = vmatpush1.msra.mxu0 %v537
    %843 = vmatprep.subr.mxu0 %v542
    %844 = vmatpush1.msra.mxu0 %v541
    %845 = vmatprep.subr.mxu0 %v546
    %846 = vmatpush1.msra.mxu0 %v545
    %847 = vmatprep.subr.mxu0 %v550
    %848 = vmatpush1.msra.mxu0 %v549
    %849 = vmatprep.subr.mxu0 %v554
    %850 = vmatpush1.msra.mxu0 %v553
    %851 = vmatprep.subr.mxu0 %v558
    %852 = vmatpush1.msra.mxu0 %v557
    %853 = vmatprep.subr.mxu0 %v562
    %854 = vmatpush1.msra.mxu0 %v561
    %855 = vmatprep.subr.mxu0 %v566
    %856 = vmatpush1.msra.mxu0 %v565
    %857 = vmatprep.subr.mxu0 %v570
    %858 = vmatpush1.msra.mxu0 %v569
    %859 = vmatprep.subr.mxu0 %v574
    %860 = vmatpush1.msra.mxu0 %v573
    %861 = vmatprep.subr.mxu0 %v578
    %862 = vmatpush1.msra.mxu0 %v577
    %863 = vmatprep.subr.mxu0 %v582
    %864 = vmatpush1.msra.mxu0 %v581
    %865 = vmatprep.subr.mxu0 %v586
    %866 = vmatpush1.msra.mxu0 %v585
    %867 = vmatprep.subr.mxu0 %v590
    %868 = vmatpush1.msra.mxu0 %v589
    %869 = vmatprep.subr.mxu0 %v594
    %870 = vmatpush1.msra.mxu0 %v593
    %871 = vmatprep.subr.mxu0 %v598
    %872 = vmatpush1.msra.mxu0 %v597
    %873 = vmatprep.subr.mxu0 %v602
    %874 = vmatpush1.msra.mxu0 %v601
    %875 = vmatprep.subr.mxu0 %v606
    %876 = vmatpush1.msra.mxu0 %v605
    %877 = vmatprep.subr.mxu0 %v610
    %878 = vmatpush1.msra.mxu0 %v609
    %879 = vmatprep.subr.mxu0 %v614
    %880 = vmatpush1.msra.mxu0 %v613
    %881 = vmatprep.subr.mxu0 %v618
    %882 = vmatpush1.msra.mxu0 %v617
    %883 = vmatprep.subr.mxu0 %v622
    %884 = vmatpush1.msra.mxu0 %v621
    %885 = vmatprep.subr.mxu0 %v626
    %886 = vmatpush1.msra.mxu0 %v625
    %887 = vmatprep.subr.mxu0 %v630
    %888 = vmatpush1.msra.mxu0 %v629
    %889 = vmatprep.mubr.f32.mxu0 0.0
    %890 = vmatmul.mubr.f32.gmra.mrb[0].mxu0 %v824
    %v891 = vpop.f32.mrb[0].mxu0
    %v892 = vadd.f32 %v638, %v891
    %v893 = vpop.f32.mrb[0].mxu0
    %v894 = vadd.f32 %v642, %v893
    %895 = vdwg.mxu0
    %896 = vmatprep.subr.mxu0 %v508
    %897 = vmatpush1.msra.mxu0 %v507
    %898 = vmatprep.subr.mxu0 %v512
    %899 = vmatpush1.msra.mxu0 %v511
    %900 = vmatprep.subr.mxu0 %v516
    %901 = vmatpush1.msra.mxu0 %v515
    %902 = vmatprep.subr.mxu0 %v520
    %903 = vmatpush1.msra.mxu0 %v519
    %904 = vmatprep.subr.mxu0 %v524
    %905 = vmatpush1.msra.mxu0 %v523
    %906 = vmatprep.subr.mxu0 %v528
    %907 = vmatpush1.msra.mxu0 %v527
    %908 = vmatprep.subr.mxu0 %v532
    %909 = vmatpush1.msra.mxu0 %v531
    %910 = vmatprep.subr.mxu0 %v536
    %911 = vmatpush1.msra.mxu0 %v535
    %912 = vmatprep.subr.mxu0 %v540
    %913 = vmatpush1.msra.mxu0 %v539
    %914 = vmatprep.subr.mxu0 %v544
    %915 = vmatpush1.msra.mxu0 %v543
    %916 = vmatprep.subr.mxu0 %v548
    %917 = vmatpush1.msra.mxu0 %v547
    %918 = vmatprep.subr.mxu0 %v552
    %919 = vmatpush1.msra.mxu0 %v551
    %920 = vmatprep.subr.mxu0 %v556
    %921 = vmatpush1.msra.mxu0 %v555
    %922 = vmatprep.subr.mxu0 %v560
    %923 = vmatpush1.msra.mxu0 %v559
    %924 = vmatprep.subr.mxu0 %v564
    %925 = vmatpush1.msra.mxu0 %v563
    %926 = vmatprep.subr.mxu0 %v568
    %927 = vmatpush1.msra.mxu0 %v567
    %928 = vmatprep.subr.mxu0 %v572
    %929 = vmatpush1.msra.mxu0 %v571
    %930 = vmatprep.subr.mxu0 %v576
    %931 = vmatpush1.msra.mxu0 %v575
    %932 = vmatprep.subr.mxu0 %v580
    %933 = vmatpush1.msra.mxu0 %v579
    %934 = vmatprep.subr.mxu0 %v584
    %935 = vmatpush1.msra.mxu0 %v583
    %936 = vmatprep.subr.mxu0 %v588
    %937 = vmatpush1.msra.mxu0 %v587
    %938 = vmatprep.subr.mxu0 %v592
    %939 = vmatpush1.msra.mxu0 %v591
    %940 = vmatprep.subr.mxu0 %v596
    %941 = vmatpush1.msra.mxu0 %v595
    %942 = vmatprep.subr.mxu0 %v600
    %943 = vmatpush1.msra.mxu0 %v599
    %944 = vmatprep.subr.mxu0 %v604
    %945 = vmatpush1.msra.mxu0 %v603
    %946 = vmatprep.subr.mxu0 %v608
    %947 = vmatpush1.msra.mxu0 %v607
    %948 = vmatprep.subr.mxu0 %v612
    %949 = vmatpush1.msra.mxu0 %v611
    %950 = vmatprep.subr.mxu0 %v616
    %951 = vmatpush1.msra.mxu0 %v615
    %952 = vmatprep.subr.mxu0 %v620
    %953 = vmatpush1.msra.mxu0 %v619
    %954 = vmatprep.subr.mxu0 %v624
    %955 = vmatpush1.msra.mxu0 %v623
    %956 = vmatprep.subr.mxu0 %v628
    %957 = vmatpush1.msra.mxu0 %v627
    %958 = vmatprep.subr.mxu0 %v632
    %959 = vmatpush1.msra.mxu0 %v631
    %960 = vmatprep.mubr.f32.mxu0 0.0
    %961 = vmatmul.mubr.f32.gmra.mrb[0].mxu0 %v824
    %v962 = vpop.f32.mrb[0].mxu0
    %v963 = vadd.f32 %v646, %v962
    %v964 = vpop.f32.mrb[0].mxu0
    %v965 = vadd.f32 %v650, %v964
    %966 = vdwg.mxu0
    %v967 = vxor.u32 %v892, 2147483648
    %v968 = vmul.f32 %v967, 1.442695
    %v969 = vpow.pop %v968
    %v970 = vadd.f32 %v969, 1.0
    %v971 = vrcp.pop %v970
    %v972 = vmul.f32 1.0, %v971
    %v973 = vxor.u32 %v894, 2147483648
    %v974 = vmul.f32 %v973, 1.442695
    %v975 = vpow.pop %v974
    %v976 = vadd.f32 %v975, 1.0
    %v977 = vrcp.pop %v976
    %v978 = vmul.f32 1.0, %v977
    %v979 = vtanh.pop %v963
    %v980 = vxor.u32 %v965, 2147483648
    %v981 = vmul.f32 %v980, 1.442695
    %v982 = vpow.pop %v981
    %v983 = vadd.f32 %v982, 1.0
    %v984 = vrcp.pop %v983
    %v985 = vmul.f32 1.0, %v984
    %v986 = vmul.f32 %v978, 0.0
    %v987 = vmul.f32 %v972, %v979
    %v988 = vadd.f32 %v986, %v987
    %v989 = vtanh.pop %v988
    %v990 = vmul.f32 %v985, %v989
    %991 = vmatprep.subr.mxu0 %v442
    %992 = vmatpush1.msra.mxu0 %v441
    %993 = vmatprep.subr.mxu0 %v446
    %994 = vmatpush1.msra.mxu0 %v445
    %995 = vmatprep.subr.mxu0 %v450
    %996 = vmatpush1.msra.mxu0 %v449
    %997 = vmatprep.subr.mxu0 %v454
    %998 = vmatpush1.msra.mxu0 %v453
    %999 = vmatprep.subr.mxu0 %v458
    %1000 = vmatpush1.msra.mxu0 %v457
    %1001 = vmatprep.subr.mxu0 %v462
    %1002 = vmatpush1.msra.mxu0 %v461
    %1003 = vmatprep.subr.mxu0 %v466
    %1004 = vmatpush1.msra.mxu0 %v465
    %1005 = vmatprep.subr.mxu0 %v470
    %1006 = vmatpush1.msra.mxu0 %v469
    %1007 = vmatprep.subr.mxu0 %v474
    %1008 = vmatpush1.msra.mxu0 %v473
    %1009 = vmatprep.subr.mxu0 %v478
    %1010 = vmatpush1.msra.mxu0 %v477
    %1011 = vmatprep.subr.mxu0 %v482
    %1012 = vmatpush1.msra.mxu0 %v481
    %1013 = vmatprep.subr.mxu0 %v486
    %1014 = vmatpush1.msra.mxu0 %v485
    %1015 = vmatprep.subr.mxu0 %v490
    %1016 = vmatpush1.msra.mxu0 %v489
    %1017 = vmatprep.subr.mxu0 %v494
    %1018 = vmatpush1.msra.mxu0 %v493
    %1019 = vmatprep.subr.mxu0 %v498
    %1020 = vmatpush1.msra.mxu0 %v497
    %1021 = vmatprep.subr.mxu0 %v502
    %1022 = vmatpush1.msra.mxu0 %v501
    %1023 = vmatprep.subr.mxu0 0.0
    %1024 = vmatpush1.msra.mxu0 0.0
    %1025 = vmatprep.subr.mxu0 0.0
    %1026 = vmatpush1.msra.mxu0 0.0
    %1027 = vmatprep.subr.mxu0 0.0
    %1028 = vmatpush1.msra.mxu0 0.0
    %1029 = vmatprep.subr.mxu0 0.0
    %1030 = vmatpush1.msra.mxu0 0.0
    %1031 = vmatprep.subr.mxu0 0.0
    %1032 = vmatpush1.msra.mxu0 0.0
    %1033 = vmatprep.subr.mxu0 0.0
    %1034 = vmatpush1.msra.mxu0 0.0
    %1035 = vmatprep.subr.mxu0 0.0
    %1036 = vmatpush1.msra.mxu0 0.0
    %1037 = vmatprep.subr.mxu0 0.0
    %1038 = vmatpush1.msra.mxu0 0.0
    %1039 = vmatprep.subr.mxu0 0.0
    %1040 = vmatpush1.msra.mxu0 0.0
    %1041 = vmatprep.subr.mxu0 0.0
    %1042 = vmatpush1.msra.mxu0 0.0
    %1043 = vmatprep.subr.mxu0 0.0
    %1044 = vmatpush1.msra.mxu0 0.0
    %1045 = vmatprep.subr.mxu0 0.0
    %1046 = vmatpush1.msra.mxu0 0.0
    %1047 = vmatprep.subr.mxu0 0.0
    %1048 = vmatpush1.msra.mxu0 0.0
    %1049 = vmatprep.subr.mxu0 0.0
    %1050 = vmatpush1.msra.mxu0 0.0
    %1051 = vmatprep.subr.mxu0 0.0
    %1052 = vmatpush1.msra.mxu0 0.0
    %1053 = vmatprep.subr.mxu0 0.0
    %1054 = vmatpush1.msra.mxu0 0.0
    %1055 = vmatprep.mubr.f32.mxu0 0.0
    %1056 = vmatmul.mubr.f32.gmra.mrb[0].mxu0 %v824
    %v1057 = vpop.f32.mrb[0].mxu0
    %v1058 = vadd.f32 0.0, %v1057
    %v1059 = vpop.f32.mrb[0].mxu0
    %v1060 = vadd.f32 0.0, %v1059
    %1061 = vdwg.mxu0
    %1062 = vmatprep.subr.mxu0 %v444
    %1063 = vmatpush1.msra.mxu0 %v443
    %1064 = vmatprep.subr.mxu0 %v448
    %1065 = vmatpush1.msra.mxu0 %v447
    %1066 = vmatprep.subr.mxu0 %v452
    %1067 = vmatpush1.msra.mxu0 %v451
    %1068 = vmatprep.subr.mxu0 %v456
    %1069 = vmatpush1.msra.mxu0 %v455
    %1070 = vmatprep.subr.mxu0 %v460
    %1071 = vmatpush1.msra.mxu0 %v459
    %1072 = vmatprep.subr.mxu0 %v464
    %1073 = vmatpush1.msra.mxu0 %v463
    %1074 = vmatprep.subr.mxu0 %v468
    %1075 = vmatpush1.msra.mxu0 %v467
    %1076 = vmatprep.subr.mxu0 %v472
    %1077 = vmatpush1.msra.mxu0 %v471
    %1078 = vmatprep.subr.mxu0 %v476
    %1079 = vmatpush1.msra.mxu0 %v475
    %1080 = vmatprep.subr.mxu0 %v480
    %1081 = vmatpush1.msra.mxu0 %v479
    %1082 = vmatprep.subr.mxu0 %v484
    %1083 = vmatpush1.msra.mxu0 %v483
    %1084 = vmatprep.subr.mxu0 %v488
    %1085 = vmatpush1.msra.mxu0 %v487
    %1086 = vmatprep.subr.mxu0 %v492
    %1087 = vmatpush1.msra.mxu0 %v491
    %1088 = vmatprep.subr.mxu0 %v496
    %1089 = vmatpush1.msra.mxu0 %v495
    %1090 = vmatprep.subr.mxu0 %v500
    %1091 = vmatpush1.msra.mxu0 %v499
    %1092 = vmatprep.subr.mxu0 %v504
    %1093 = vmatpush1.msra.mxu0 %v503
    %1094 = vmatprep.subr.mxu0 0.0
    %1095 = vmatpush1.msra.mxu0 0.0
    %1096 = vmatprep.subr.mxu0 0.0
    %1097 = vmatpush1.msra.mxu0 0.0
    %1098 = vmatprep.subr.mxu0 0.0
    %1099 = vmatpush1.msra.mxu0 0.0
    %1100 = vmatprep.subr.mxu0 0.0
    %1101 = vmatpush1.msra.mxu0 0.0
    %1102 = vmatprep.subr.mxu0 0.0
    %1103 = vmatpush1.msra.mxu0 0.0
    %1104 = vmatprep.subr.mxu0 0.0
    %1105 = vmatpush1.msra.mxu0 0.0
    %1106 = vmatprep.subr.mxu0 0.0
    %1107 = vmatpush1.msra.mxu0 0.0
    %1108 = vmatprep.subr.mxu0 0.0
    %1109 = vmatpush1.msra.mxu0 0.0
    %1110 = vmatprep.subr.mxu0 0.0
    %1111 = vmatpush1.msra.mxu0 0.0
    %1112 = vmatprep.subr.mxu0 0.0
    %1113 = vmatpush1.msra.mxu0 0.0
    %1114 = vmatprep.subr.mxu0 0.0
    %1115 = vmatpush1.msra.mxu0 0.0
    %1116 = vmatprep.subr.mxu0 0.0
    %1117 = vmatpush1.msra.mxu0 0.0
    %1118 = vmatprep.subr.mxu0 0.0
    %1119 = vmatpush1.msra.mxu0 0.0
    %1120 = vmatprep.subr.mxu0 0.0
    %1121 = vmatpush1.msra.mxu0 0.0
    %1122 = vmatprep.subr.mxu0 0.0
    %1123 = vmatpush1.msra.mxu0 0.0
    %1124 = vmatprep.subr.mxu0 0.0
    %1125 = vmatpush1.msra.mxu0 0.0
    %1126 = vmatprep.mubr.f32.mxu0 0.0
    %1127 = vmatmul.mubr.f32.gmra.mrb[0].mxu0 %v824
    %v1128 = vpop.f32.mrb[0].mxu0
    %v1129 = vadd.f32 0.0, %v1128
    %v1130 = vpop.f32.mrb[0].mxu0
    %v1131 = vadd.f32 0.0, %v1130
    %1132 = vdwg.mxu0
    %v1137 = vrot.slane %v1058, 6
    %v1138 = vrot.slane %v1060, 6
    %v1139 = vrot.slane %v1129, 6
    %v1140 = vrot.slane %v1131, 6
    %v1145 = vadd.f32 %v354, %v1137
    %v1146 = vadd.f32 %v356, %v1138
    %v1147 = vadd.f32 %v431, %v1139
    %v1148 = vadd.f32 %v433, %v1140
    %v1149 = vxor.u32 %v1145, 2147483648
    %v1150 = vmul.f32 %v1149, 1.442695
    %v1151 = vpow.pop %v1150
    %v1152 = vadd.f32 %v1151, 1.0
    %v1153 = vrcp.pop %v1152
    %v1154 = vmul.f32 1.0, %v1153
    %v1155 = vxor.u32 %v1146, 2147483648
    %v1156 = vmul.f32 %v1155, 1.442695
    %v1157 = vpow.pop %v1156
    %v1158 = vadd.f32 %v1157, 1.0
    %v1159 = vrcp.pop %v1158
    %v1160 = vmul.f32 1.0, %v1159
    %v1161 = vtanh.pop %v1147
    %v1162 = vxor.u32 %v1148, 2147483648
    %v1163 = vmul.f32 %v1162, 1.442695
    %v1164 = vpow.pop %v1163
    %v1165 = vadd.f32 %v1164, 1.0
    %v1166 = vrcp.pop %v1165
    %v1167 = vmul.f32 1.0, %v1166
    %v1169 = vrot.slane %v822, 6
    %v1171 = vmul.f32 %v1160, %v1169
    %v1172 = vmul.f32 %v1154, %v1161
    %v1173 = vadd.f32 %v1171, %v1172
    %v1174 = vtanh.pop %v1173
    %v1175 = vmul.f32 %v1167, %v1174
    %v1177 = vrot.slane %v990, 6
    %v1179 = vrot.slane %v1175, 2
    %v1180 = vrot.slane %v1177, 2
    %1183 = vmatprep.subr.mxu0 %v506
    %1184 = vmatpush1.msra.mxu0 %v505
    %1185 = vmatprep.subr.mxu0 %v510
    %1186 = vmatpush1.msra.mxu0 %v509
    %1187 = vmatprep.subr.mxu0 %v514
    %1188 = vmatpush1.msra.mxu0 %v513
    %1189 = vmatprep.subr.mxu0 %v518
    %1190 = vmatpush1.msra.mxu0 %v517
    %1191 = vmatprep.subr.mxu0 %v522
    %1192 = vmatpush1.msra.mxu0 %v521
    %1193 = vmatprep.subr.mxu0 %v526
    %1194 = vmatpush1.msra.mxu0 %v525
    %1195 = vmatprep.subr.mxu0 %v530
    %1196 = vmatpush1.msra.mxu0 %v529
    %1197 = vmatprep.subr.mxu0 %v534
    %1198 = vmatpush1.msra.mxu0 %v533
    %1199 = vmatprep.subr.mxu0 %v538
    %1200 = vmatpush1.msra.mxu0 %v537
    %1201 = vmatprep.subr.mxu0 %v542
    %1202 = vmatpush1.msra.mxu0 %v541
    %1203 = vmatprep.subr.mxu0 %v546
    %1204 = vmatpush1.msra.mxu0 %v545
    %1205 = vmatprep.subr.mxu0 %v550
    %1206 = vmatpush1.msra.mxu0 %v549
    %1207 = vmatprep.subr.mxu0 %v554
    %1208 = vmatpush1.msra.mxu0 %v553
    %1209 = vmatprep.subr.mxu0 %v558
    %1210 = vmatpush1.msra.mxu0 %v557
    %1211 = vmatprep.subr.mxu0 %v562
    %1212 = vmatpush1.msra.mxu0 %v561
    %1213 = vmatprep.subr.mxu0 %v566
    %1214 = vmatpush1.msra.mxu0 %v565
    %1215 = vmatprep.subr.mxu0 %v570
    %1216 = vmatpush1.msra.mxu0 %v569
    %1217 = vmatprep.subr.mxu0 %v574
    %1218 = vmatpush1.msra.mxu0 %v573
    %1219 = vmatprep.subr.mxu0 %v578
    %1220 = vmatpush1.msra.mxu0 %v577
    %1221 = vmatprep.subr.mxu0 %v582
    %1222 = vmatpush1.msra.mxu0 %v581
    %1223 = vmatprep.subr.mxu0 %v586
    %1224 = vmatpush1.msra.mxu0 %v585
    %1225 = vmatprep.subr.mxu0 %v590
    %1226 = vmatpush1.msra.mxu0 %v589
    %1227 = vmatprep.subr.mxu0 %v594
    %1228 = vmatpush1.msra.mxu0 %v593
    %1229 = vmatprep.subr.mxu0 %v598
    %1230 = vmatpush1.msra.mxu0 %v597
    %1231 = vmatprep.subr.mxu0 %v602
    %1232 = vmatpush1.msra.mxu0 %v601
    %1233 = vmatprep.subr.mxu0 %v606
    %1234 = vmatpush1.msra.mxu0 %v605
    %1235 = vmatprep.subr.mxu0 %v610
    %1236 = vmatpush1.msra.mxu0 %v609
    %1237 = vmatprep.subr.mxu0 %v614
    %1238 = vmatpush1.msra.mxu0 %v613
    %1239 = vmatprep.subr.mxu0 %v618
    %1240 = vmatpush1.msra.mxu0 %v617
    %1241 = vmatprep.subr.mxu0 %v622
    %1242 = vmatpush1.msra.mxu0 %v621
    %1243 = vmatprep.subr.mxu0 %v626
    %1244 = vmatpush1.msra.mxu0 %v625
    %1245 = vmatprep.subr.mxu0 %v630
    %1246 = vmatpush1.msra.mxu0 %v629
    %1247 = vmatprep.mubr.f32.mxu0 %v1180
    %1248 = vmatmul.mubr.f32.gmra.mrb[0].mxu0 %v1179
    %v1249 = vpop.f32.mrb[0].mxu0
    %v1250 = vadd.f32 %v638, %v1249
    %v1251 = vpop.f32.mrb[0].mxu0
    %v1252 = vadd.f32 %v642, %v1251
    %1253 = vdwg.mxu0
    %1254 = vmatprep.subr.mxu0 %v508
    %1255 = vmatpush1.msra.mxu0 %v507
    %1256 = vmatprep.subr.mxu0 %v512
    %1257 = vmatpush1.msra.mxu0 %v511
    %1258 = vmatprep.subr.mxu0 %v516
    %1259 = vmatpush1.msra.mxu0 %v515
    %1260 = vmatprep.subr.mxu0 %v520
    %1261 = vmatpush1.msra.mxu0 %v519
    %1262 = vmatprep.subr.mxu0 %v524
    %1263 = vmatpush1.msra.mxu0 %v523
    %1264 = vmatprep.subr.mxu0 %v528
    %1265 = vmatpush1.msra.mxu0 %v527
    %1266 = vmatprep.subr.mxu0 %v532
    %1267 = vmatpush1.msra.mxu0 %v531
    %1268 = vmatprep.subr.mxu0 %v536
    %1269 = vmatpush1.msra.mxu0 %v535
    %1270 = vmatprep.subr.mxu0 %v540
    %1271 = vmatpush1.msra.mxu0 %v539
    %1272 = vmatprep.subr.mxu0 %v544
    %1273 = vmatpush1.msra.mxu0 %v543
    %1274 = vmatprep.subr.mxu0 %v548
    %1275 = vmatpush1.msra.mxu0 %v547
    %1276 = vmatprep.subr.mxu0 %v552
    %1277 = vmatpush1.msra.mxu0 %v551
    %1278 = vmatprep.subr.mxu0 %v556
    %1279 = vmatpush1.msra.mxu0 %v555
    %1280 = vmatprep.subr.mxu0 %v560
    %1281 = vmatpush1.msra.mxu0 %v559
    %1282 = vmatprep.subr.mxu0 %v564
    %1283 = vmatpush1.msra.mxu0 %v563
    %1284 = vmatprep.subr.mxu0 %v568
    %1285 = vmatpush1.msra.mxu0 %v567
    %1286 = vmatprep.subr.mxu0 %v572
    %1287 = vmatpush1.msra.mxu0 %v571
    %1288 = vmatprep.subr.mxu0 %v576
    %1289 = vmatpush1.msra.mxu0 %v575
    %1290 = vmatprep.subr.mxu0 %v580
    %1291 = vmatpush1.msra.mxu0 %v579
    %1292 = vmatprep.subr.mxu0 %v584
    %1293 = vmatpush1.msra.mxu0 %v583
    %1294 = vmatprep.subr.mxu0 %v588
    %1295 = vmatpush1.msra.mxu0 %v587
    %1296 = vmatprep.subr.mxu0 %v592
    %1297 = vmatpush1.msra.mxu0 %v591
    %1298 = vmatprep.subr.mxu0 %v596
    %1299 = vmatpush1.msra.mxu0 %v595
    %1300 = vmatprep.subr.mxu0 %v600
    %1301 = vmatpush1.msra.mxu0 %v599
    %1302 = vmatprep.subr.mxu0 %v604
    %1303 = vmatpush1.msra.mxu0 %v603
    %1304 = vmatprep.subr.mxu0 %v608
    %1305 = vmatpush1.msra.mxu0 %v607
    %1306 = vmatprep.subr.mxu0 %v612
    %1307 = vmatpush1.msra.mxu0 %v611
    %1308 = vmatprep.subr.mxu0 %v616
    %1309 = vmatpush1.msra.mxu0 %v615
    %1310 = vmatprep.subr.mxu0 %v620
    %1311 = vmatpush1.msra.mxu0 %v619
    %1312 = vmatprep.subr.mxu0 %v624
    %1313 = vmatpush1.msra.mxu0 %v623
    %1314 = vmatprep.subr.mxu0 %v628
    %1315 = vmatpush1.msra.mxu0 %v627
    %1316 = vmatprep.subr.mxu0 %v632
    %1317 = vmatpush1.msra.mxu0 %v631
    %1318 = vmatprep.mubr.f32.mxu0 %v1180
    %1319 = vmatmul.mubr.f32.gmra.mrb[0].mxu0 %v1179
    %v1320 = vpop.f32.mrb[0].mxu0
    %v1321 = vadd.f32 %v646, %v1320
    %v1322 = vpop.f32.mrb[0].mxu0
    %v1323 = vadd.f32 %v650, %v1322
    %1324 = vdwg.mxu0
    %v1325 = vxor.u32 %v1250, 2147483648
    %v1326 = vmul.f32 %v1325, 1.442695
    %v1327 = vpow.pop %v1326
    %v1328 = vadd.f32 %v1327, 1.0
    %v1329 = vrcp.pop %v1328
    %v1330 = vmul.f32 1.0, %v1329
    %v1331 = vxor.u32 %v1252, 2147483648
    %v1332 = vmul.f32 %v1331, 1.442695
    %v1333 = vpow.pop %v1332
    %v1334 = vadd.f32 %v1333, 1.0
    %v1335 = vrcp.pop %v1334
    %v1336 = vmul.f32 1.0, %v1335
    %v1337 = vtanh.pop %v1321
    %v1338 = vxor.u32 %v1323, 2147483648
    %v1339 = vmul.f32 %v1338, 1.442695
    %v1340 = vpow.pop %v1339
    %v1341 = vadd.f32 %v1340, 1.0
    %v1342 = vrcp.pop %v1341
    %v1343 = vmul.f32 1.0, %v1342
    %v1344 = vmul.f32 %v1336, %v988
    %v1345 = vmul.f32 %v1330, %v1337
    %v1346 = vadd.f32 %v1344, %v1345
    %v1347 = vtanh.pop %v1346
    %v1348 = vmul.f32 %v1343, %v1347
    %v1349 = vmax.f32 %v990, %v1348
    %1350 = vmatprep.subr.mxu0 %v442
    %1351 = vmatpush1.msra.mxu0 %v441
    %1352 = vmatprep.subr.mxu0 %v446
    %1353 = vmatpush1.msra.mxu0 %v445
    %1354 = vmatprep.subr.mxu0 %v450
    %1355 = vmatpush1.msra.mxu0 %v449
    %1356 = vmatprep.subr.mxu0 %v454
    %1357 = vmatpush1.msra.mxu0 %v453
    %1358 = vmatprep.subr.mxu0 %v458
    %1359 = vmatpush1.msra.mxu0 %v457
    %1360 = vmatprep.subr.mxu0 %v462
    %1361 = vmatpush1.msra.mxu0 %v461
    %1362 = vmatprep.subr.mxu0 %v466
    %1363 = vmatpush1.msra.mxu0 %v465
    %1364 = vmatprep.subr.mxu0 %v470
    %1365 = vmatpush1.msra.mxu0 %v469
    %1366 = vmatprep.subr.mxu0 %v474
    %1367 = vmatpush1.msra.mxu0 %v473
    %1368 = vmatprep.subr.mxu0 %v478
    %1369 = vmatpush1.msra.mxu0 %v477
    %1370 = vmatprep.subr.mxu0 %v482
    %1371 = vmatpush1.msra.mxu0 %v481
    %1372 = vmatprep.subr.mxu0 %v486
    %1373 = vmatpush1.msra.mxu0 %v485
    %1374 = vmatprep.subr.mxu0 %v490
    %1375 = vmatpush1.msra.mxu0 %v489
    %1376 = vmatprep.subr.mxu0 %v494
    %1377 = vmatpush1.msra.mxu0 %v493
    %1378 = vmatprep.subr.mxu0 %v498
    %1379 = vmatpush1.msra.mxu0 %v497
    %1380 = vmatprep.subr.mxu0 %v502
    %1381 = vmatpush1.msra.mxu0 %v501
    %1382 = vmatprep.subr.mxu0 0.0
    %1383 = vmatpush1.msra.mxu0 0.0
    %1384 = vmatprep.subr.mxu0 0.0
    %1385 = vmatpush1.msra.mxu0 0.0
    %1386 = vmatprep.subr.mxu0 0.0
    %1387 = vmatpush1.msra.mxu0 0.0
    %1388 = vmatprep.subr.mxu0 0.0
    %1389 = vmatpush1.msra.mxu0 0.0
    %1390 = vmatprep.subr.mxu0 0.0
    %1391 = vmatpush1.msra.mxu0 0.0
    %1392 = vmatprep.subr.mxu0 0.0
    %1393 = vmatpush1.msra.mxu0 0.0
    %1394 = vmatprep.subr.mxu0 0.0
    %1395 = vmatpush1.msra.mxu0 0.0
    %1396 = vmatprep.subr.mxu0 0.0
    %1397 = vmatpush1.msra.mxu0 0.0
    %1398 = vmatprep.subr.mxu0 0.0
    %1399 = vmatpush1.msra.mxu0 0.0
    %1400 = vmatprep.subr.mxu0 0.0
    %1401 = vmatpush1.msra.mxu0 0.0
    %1402 = vmatprep.subr.mxu0 0.0
    %1403 = vmatpush1.msra.mxu0 0.0
    %1404 = vmatprep.subr.mxu0 0.0
    %1405 = vmatpush1.msra.mxu0 0.0
    %1406 = vmatprep.subr.mxu0 0.0
    %1407 = vmatpush1.msra.mxu0 0.0
    %1408 = vmatprep.subr.mxu0 0.0
    %1409 = vmatpush1.msra.mxu0 0.0
    %1410 = vmatprep.subr.mxu0 0.0
    %1411 = vmatpush1.msra.mxu0 0.0
    %1412 = vmatprep.subr.mxu0 0.0
    %1413 = vmatpush1.msra.mxu0 0.0
    %1414 = vmatprep.mubr.f32.mxu0 0.0
    %1415 = vmatmul.mubr.f32.gmra.mrb[0].mxu0 %v1179
    %v1416 = vpop.f32.mrb[0].mxu0
    %v1417 = vadd.f32 0.0, %v1416
    %v1418 = vpop.f32.mrb[0].mxu0
    %v1419 = vadd.f32 0.0, %v1418
    %1420 = vdwg.mxu0
    %1421 = vmatprep.subr.mxu0 %v444
    %1422 = vmatpush1.msra.mxu0 %v443
    %1423 = vmatprep.subr.mxu0 %v448
    %1424 = vmatpush1.msra.mxu0 %v447
    %1425 = vmatprep.subr.mxu0 %v452
    %1426 = vmatpush1.msra.mxu0 %v451
    %1427 = vmatprep.subr.mxu0 %v456
    %1428 = vmatpush1.msra.mxu0 %v455
    %1429 = vmatprep.subr.mxu0 %v460
    %1430 = vmatpush1.msra.mxu0 %v459
    %1431 = vmatprep.subr.mxu0 %v464
    %1432 = vmatpush1.msra.mxu0 %v463
    %1433 = vmatprep.subr.mxu0 %v468
    %1434 = vmatpush1.msra.mxu0 %v467
    %1435 = vmatprep.subr.mxu0 %v472
    %1436 = vmatpush1.msra.mxu0 %v471
    %1437 = vmatprep.subr.mxu0 %v476
    %1438 = vmatpush1.msra.mxu0 %v475
    %1439 = vmatprep.subr.mxu0 %v480
    %1440 = vmatpush1.msra.mxu0 %v479
    %1441 = vmatprep.subr.mxu0 %v484
    %1442 = vmatpush1.msra.mxu0 %v483
    %1443 = vmatprep.subr.mxu0 %v488
    %1444 = vmatpush1.msra.mxu0 %v487
    %1445 = vmatprep.subr.mxu0 %v492
    %1446 = vmatpush1.msra.mxu0 %v491
    %1447 = vmatprep.subr.mxu0 %v496
    %1448 = vmatpush1.msra.mxu0 %v495
    %1449 = vmatprep.subr.mxu0 %v500
    %1450 = vmatpush1.msra.mxu0 %v499
    %1451 = vmatprep.subr.mxu0 %v504
    %1452 = vmatpush1.msra.mxu0 %v503
    %1453 = vmatprep.subr.mxu0 0.0
    %1454 = vmatpush1.msra.mxu0 0.0
    %1455 = vmatprep.subr.mxu0 0.0
    %1456 = vmatpush1.msra.mxu0 0.0
    %1457 = vmatprep.subr.mxu0 0.0
    %1458 = vmatpush1.msra.mxu0 0.0
    %1459 = vmatprep.subr.mxu0 0.0
    %1460 = vmatpush1.msra.mxu0 0.0
    %1461 = vmatprep.subr.mxu0 0.0
    %1462 = vmatpush1.msra.mxu0 0.0
    %1463 = vmatprep.subr.mxu0 0.0
    %1464 = vmatpush1.msra.mxu0 0.0
    %1465 = vmatprep.subr.mxu0 0.0
    %1466 = vmatpush1.msra.mxu0 0.0
    %1467 = vmatprep.subr.mxu0 0.0
    %1468 = vmatpush1.msra.mxu0 0.0
    %1469 = vmatprep.subr.mxu0 0.0
    %1470 = vmatpush1.msra.mxu0 0.0
    %1471 = vmatprep.subr.mxu0 0.0
    %1472 = vmatpush1.msra.mxu0 0.0
    %1473 = vmatprep.subr.mxu0 0.0
    %1474 = vmatpush1.msra.mxu0 0.0
    %1475 = vmatprep.subr.mxu0 0.0
    %1476 = vmatpush1.msra.mxu0 0.0
    %1477 = vmatprep.subr.mxu0 0.0
    %1478 = vmatpush1.msra.mxu0 0.0
    %1479 = vmatprep.subr.mxu0 0.0
    %1480 = vmatpush1.msra.mxu0 0.0
    %1481 = vmatprep.subr.mxu0 0.0
    %1482 = vmatpush1.msra.mxu0 0.0
    %1483 = vmatprep.subr.mxu0 0.0
    %1484 = vmatpush1.msra.mxu0 0.0
    %1485 = vmatprep.mubr.f32.mxu0 0.0
    %1486 = vmatmul.mubr.f32.gmra.mrb[0].mxu0 %v1179
    %v1487 = vpop.f32.mrb[0].mxu0
    %v1488 = vadd.f32 0.0, %v1487
    %v1489 = vpop.f32.mrb[0].mxu0
    %v1490 = vadd.f32 0.0, %v1489
    %1491 = vdwg.mxu0
    %v1496 = vrot.slane %v1417, 4
    %v1497 = vrot.slane %v1419, 4
    %v1498 = vrot.slane %v1488, 4
    %v1499 = vrot.slane %v1490, 4
    %v1504 = vadd.f32 %v354, %v1496
    %v1505 = vadd.f32 %v356, %v1497
    %v1506 = vadd.f32 %v431, %v1498
    %v1507 = vadd.f32 %v433, %v1499
    %v1508 = vxor.u32 %v1504, 2147483648
    %v1509 = vmul.f32 %v1508, 1.442695
    %v1510 = vpow.pop %v1509
    %v1511 = vadd.f32 %v1510, 1.0
    %v1512 = vrcp.pop %v1511
    %v1513 = vmul.f32 1.0, %v1512
    %v1514 = vxor.u32 %v1505, 2147483648
    %v1515 = vmul.f32 %v1514, 1.442695
    %v1516 = vpow.pop %v1515
    %v1517 = vadd.f32 %v1516, 1.0
    %v1518 = vrcp.pop %v1517
    %v1519 = vmul.f32 1.0, %v1518
    %v1520 = vtanh.pop %v1506
    %v1521 = vxor.u32 %v1507, 2147483648
    %v1522 = vmul.f32 %v1521, 1.442695
    %v1523 = vpow.pop %v1522
    %v1524 = vadd.f32 %v1523, 1.0
    %v1525 = vrcp.pop %v1524
    %v1526 = vmul.f32 1.0, %v1525
    %v1528 = vrot.slane %v1173, 6
    %v1530 = vmul.f32 %v1519, %v1528
    %v1531 = vmul.f32 %v1513, %v1520
    %v1532 = vadd.f32 %v1530, %v1531
    %v1533 = vtanh.pop %v1532
    %v1534 = vmul.f32 %v1526, %v1533
    %v1536 = vrot.slane %v1348, 4
    %v1538 = vrot.slane %v1534, 4
    %v1539 = vrot.slane %v1536, 4
    %1542 = vmatprep.subr.mxu0 %v506
    %1543 = vmatpush1.msra.mxu0 %v505
    %1544 = vmatprep.subr.mxu0 %v510
    %1545 = vmatpush1.msra.mxu0 %v509
    %1546 = vmatprep.subr.mxu0 %v514
    %1547 = vmatpush1.msra.mxu0 %v513
    %1548 = vmatprep.subr.mxu0 %v518
    %1549 = vmatpush1.msra.mxu0 %v517
    %1550 = vmatprep.subr.mxu0 %v522
    %1551 = vmatpush1.msra.mxu0 %v521
    %1552 = vmatprep.subr.mxu0 %v526
    %1553 = vmatpush1.msra.mxu0 %v525
    %1554 = vmatprep.subr.mxu0 %v530
    %1555 = vmatpush1.msra.mxu0 %v529
    %1556 = vmatprep.subr.mxu0 %v534
    %1557 = vmatpush1.msra.mxu0 %v533
    %1558 = vmatprep.subr.mxu0 %v538
    %1559 = vmatpush1.msra.mxu0 %v537
    %1560 = vmatprep.subr.mxu0 %v542
    %1561 = vmatpush1.msra.mxu0 %v541
    %1562 = vmatprep.subr.mxu0 %v546
    %1563 = vmatpush1.msra.mxu0 %v545
    %1564 = vmatprep.subr.mxu0 %v550
    %1565 = vmatpush1.msra.mxu0 %v549
    %1566 = vmatprep.subr.mxu0 %v554
    %1567 = vmatpush1.msra.mxu0 %v553
    %1568 = vmatprep.subr.mxu0 %v558
    %1569 = vmatpush1.msra.mxu0 %v557
    %1570 = vmatprep.subr.mxu0 %v562
    %1571 = vmatpush1.msra.mxu0 %v561
    %1572 = vmatprep.subr.mxu0 %v566
    %1573 = vmatpush1.msra.mxu0 %v565
    %1574 = vmatprep.subr.mxu0 %v570
    %1575 = vmatpush1.msra.mxu0 %v569
    %1576 = vmatprep.subr.mxu0 %v574
    %1577 = vmatpush1.msra.mxu0 %v573
    %1578 = vmatprep.subr.mxu0 %v578
    %1579 = vmatpush1.msra.mxu0 %v577
    %1580 = vmatprep.subr.mxu0 %v582
    %1581 = vmatpush1.msra.mxu0 %v581
    %1582 = vmatprep.subr.mxu0 %v586
    %1583 = vmatpush1.msra.mxu0 %v585
    %1584 = vmatprep.subr.mxu0 %v590
    %1585 = vmatpush1.msra.mxu0 %v589
    %1586 = vmatprep.subr.mxu0 %v594
    %1587 = vmatpush1.msra.mxu0 %v593
    %1588 = vmatprep.subr.mxu0 %v598
    %1589 = vmatpush1.msra.mxu0 %v597
    %1590 = vmatprep.subr.mxu0 %v602
    %1591 = vmatpush1.msra.mxu0 %v601
    %1592 = vmatprep.subr.mxu0 %v606
    %1593 = vmatpush1.msra.mxu0 %v605
    %1594 = vmatprep.subr.mxu0 %v610
    %1595 = vmatpush1.msra.mxu0 %v609
    %1596 = vmatprep.subr.mxu0 %v614
    %1597 = vmatpush1.msra.mxu0 %v613
    %1598 = vmatprep.subr.mxu0 %v618
    %1599 = vmatpush1.msra.mxu0 %v617
    %1600 = vmatprep.subr.mxu0 %v622
    %1601 = vmatpush1.msra.mxu0 %v621
    %1602 = vmatprep.subr.mxu0 %v626
    %1603 = vmatpush1.msra.mxu0 %v625
    %1604 = vmatprep.subr.mxu0 %v630
    %1605 = vmatpush1.msra.mxu0 %v629
    %1606 = vmatprep.mubr.f32.mxu0 %v1539
    %1607 = vmatmul.mubr.f32.gmra.mrb[0].mxu0 %v1538
    %v1608 = vpop.f32.mrb[0].mxu0
    %v1609 = vadd.f32 %v638, %v1608
    %v1610 = vpop.f32.mrb[0].mxu0
    %v1611 = vadd.f32 %v642, %v1610
    %1612 = vdwg.mxu0
    %1613 = vmatprep.subr.mxu0 %v508
    %1614 = vmatpush1.msra.mxu0 %v507
    %1615 = vmatprep.subr.mxu0 %v512
    %1616 = vmatpush1.msra.mxu0 %v511
    %1617 = vmatprep.subr.mxu0 %v516
    %1618 = vmatpush1.msra.mxu0 %v515
    %1619 = vmatprep.subr.mxu0 %v520
    %1620 = vmatpush1.msra.mxu0 %v519
    %1621 = vmatprep.subr.mxu0 %v524
    %1622 = vmatpush1.msra.mxu0 %v523
    %1623 = vmatprep.subr.mxu0 %v528
    %1624 = vmatpush1.msra.mxu0 %v527
    %1625 = vmatprep.subr.mxu0 %v532
    %1626 = vmatpush1.msra.mxu0 %v531
    %1627 = vmatprep.subr.mxu0 %v536
    %1628 = vmatpush1.msra.mxu0 %v535
    %1629 = vmatprep.subr.mxu0 %v540
    %1630 = vmatpush1.msra.mxu0 %v539
    %1631 = vmatprep.subr.mxu0 %v544
    %1632 = vmatpush1.msra.mxu0 %v543
    %1633 = vmatprep.subr.mxu0 %v548
    %1634 = vmatpush1.msra.mxu0 %v547
    %1635 = vmatprep.subr.mxu0 %v552
    %1636 = vmatpush1.msra.mxu0 %v551
    %1637 = vmatprep.subr.mxu0 %v556
    %1638 = vmatpush1.msra.mxu0 %v555
    %1639 = vmatprep.subr.mxu0 %v560
    %1640 = vmatpush1.msra.mxu0 %v559
    %1641 = vmatprep.subr.mxu0 %v564
    %1642 = vmatpush1.msra.mxu0 %v563
    %1643 = vmatprep.subr.mxu0 %v568
    %1644 = vmatpush1.msra.mxu0 %v567
    %1645 = vmatprep.subr.mxu0 %v572
    %1646 = vmatpush1.msra.mxu0 %v571
    %1647 = vmatprep.subr.mxu0 %v576
    %1648 = vmatpush1.msra.mxu0 %v575
    %1649 = vmatprep.subr.mxu0 %v580
    %1650 = vmatpush1.msra.mxu0 %v579
    %1651 = vmatprep.subr.mxu0 %v584
    %1652 = vmatpush1.msra.mxu0 %v583
    %1653 = vmatprep.subr.mxu0 %v588
    %1654 = vmatpush1.msra.mxu0 %v587
    %1655 = vmatprep.subr.mxu0 %v592
    %1656 = vmatpush1.msra.mxu0 %v591
    %1657 = vmatprep.subr.mxu0 %v596
    %1658 = vmatpush1.msra.mxu0 %v595
    %1659 = vmatprep.subr.mxu0 %v600
    %1660 = vmatpush1.msra.mxu0 %v599
    %1661 = vmatprep.subr.mxu0 %v604
    %1662 = vmatpush1.msra.mxu0 %v603
    %1663 = vmatprep.subr.mxu0 %v608
    %1664 = vmatpush1.msra.mxu0 %v607
    %1665 = vmatprep.subr.mxu0 %v612
    %1666 = vmatpush1.msra.mxu0 %v611
    %1667 = vmatprep.subr.mxu0 %v616
    %1668 = vmatpush1.msra.mxu0 %v615
    %1669 = vmatprep.subr.mxu0 %v620
    %1670 = vmatpush1.msra.mxu0 %v619
    %1671 = vmatprep.subr.mxu0 %v624
    %1672 = vmatpush1.msra.mxu0 %v623
    %1673 = vmatprep.subr.mxu0 %v628
    %1674 = vmatpush1.msra.mxu0 %v627
    %1675 = vmatprep.subr.mxu0 %v632
    %1676 = vmatpush1.msra.mxu0 %v631
    %1677 = vmatprep.mubr.f32.mxu0 %v1539
    %1678 = vmatmul.mubr.f32.gmra.mrb[0].mxu0 %v1538
    %v1679 = vpop.f32.mrb[0].mxu0
    %v1680 = vadd.f32 %v646, %v1679
    %v1681 = vpop.f32.mrb[0].mxu0
    %v1682 = vadd.f32 %v650, %v1681
    %1683 = vdwg.mxu0
    %v1684 = vxor.u32 %v1609, 2147483648
    %v1685 = vmul.f32 %v1684, 1.442695
    %v1686 = vpow.pop %v1685
    %v1687 = vadd.f32 %v1686, 1.0
    %v1688 = vrcp.pop %v1687
    %v1689 = vmul.f32 1.0, %v1688
    %v1690 = vxor.u32 %v1611, 2147483648
    %v1691 = vmul.f32 %v1690, 1.442695
    %v1692 = vpow.pop %v1691
    %v1693 = vadd.f32 %v1692, 1.0
    %v1694 = vrcp.pop %v1693
    %v1695 = vmul.f32 1.0, %v1694
    %v1696 = vtanh.pop %v1680
    %v1697 = vxor.u32 %v1682, 2147483648
    %v1698 = vmul.f32 %v1697, 1.442695
    %v1699 = vpow.pop %v1698
    %v1700 = vadd.f32 %v1699, 1.0
    %v1701 = vrcp.pop %v1700
    %v1702 = vmul.f32 1.0, %v1701
    %v1703 = vmul.f32 %v1695, %v1346
    %v1704 = vmul.f32 %v1689, %v1696
    %v1705 = vadd.f32 %v1703, %v1704
    %v1706 = vtanh.pop %v1705
    %v1707 = vmul.f32 %v1702, %v1706
    %v1708 = vmax.f32 %v1349, %v1707
    %1709 = vmatprep.subr.mxu0 %v442
    %1710 = vmatpush1.msra.mxu0 %v441
    %1711 = vmatprep.subr.mxu0 %v446
    %1712 = vmatpush1.msra.mxu0 %v445
    %1713 = vmatprep.subr.mxu0 %v450
    %1714 = vmatpush1.msra.mxu0 %v449
    %1715 = vmatprep.subr.mxu0 %v454
    %1716 = vmatpush1.msra.mxu0 %v453
    %1717 = vmatprep.subr.mxu0 %v458
    %1718 = vmatpush1.msra.mxu0 %v457
    %1719 = vmatprep.subr.mxu0 %v462
    %1720 = vmatpush1.msra.mxu0 %v461
    %1721 = vmatprep.subr.mxu0 %v466
    %1722 = vmatpush1.msra.mxu0 %v465
    %1723 = vmatprep.subr.mxu0 %v470
    %1724 = vmatpush1.msra.mxu0 %v469
    %1725 = vmatprep.subr.mxu0 %v474
    %1726 = vmatpush1.msra.mxu0 %v473
    %1727 = vmatprep.subr.mxu0 %v478
    %1728 = vmatpush1.msra.mxu0 %v477
    %1729 = vmatprep.subr.mxu0 %v482
    %1730 = vmatpush1.msra.mxu0 %v481
    %1731 = vmatprep.subr.mxu0 %v486
    %1732 = vmatpush1.msra.mxu0 %v485
    %1733 = vmatprep.subr.mxu0 %v490
    %1734 = vmatpush1.msra.mxu0 %v489
    %1735 = vmatprep.subr.mxu0 %v494
    %1736 = vmatpush1.msra.mxu0 %v493
    %1737 = vmatprep.subr.mxu0 %v498
    %1738 = vmatpush1.msra.mxu0 %v497
    %1739 = vmatprep.subr.mxu0 %v502
    %1740 = vmatpush1.msra.mxu0 %v501
    %1741 = vmatprep.subr.mxu0 0.0
    %1742 = vmatpush1.msra.mxu0 0.0
    %1743 = vmatprep.subr.mxu0 0.0
    %1744 = vmatpush1.msra.mxu0 0.0
    %1745 = vmatprep.subr.mxu0 0.0
    %1746 = vmatpush1.msra.mxu0 0.0
    %1747 = vmatprep.subr.mxu0 0.0
    %1748 = vmatpush1.msra.mxu0 0.0
    %1749 = vmatprep.subr.mxu0 0.0
    %1750 = vmatpush1.msra.mxu0 0.0
    %1751 = vmatprep.subr.mxu0 0.0
    %1752 = vmatpush1.msra.mxu0 0.0
    %1753 = vmatprep.subr.mxu0 0.0
    %1754 = vmatpush1.msra.mxu0 0.0
    %1755 = vmatprep.subr.mxu0 0.0
    %1756 = vmatpush1.msra.mxu0 0.0
    %1757 = vmatprep.subr.mxu0 0.0
    %1758 = vmatpush1.msra.mxu0 0.0
    %1759 = vmatprep.subr.mxu0 0.0
    %1760 = vmatpush1.msra.mxu0 0.0
    %1761 = vmatprep.subr.mxu0 0.0
    %1762 = vmatpush1.msra.mxu0 0.0
    %1763 = vmatprep.subr.mxu0 0.0
    %1764 = vmatpush1.msra.mxu0 0.0
    %1765 = vmatprep.subr.mxu0 0.0
    %1766 = vmatpush1.msra.mxu0 0.0
    %1767 = vmatprep.subr.mxu0 0.0
    %1768 = vmatpush1.msra.mxu0 0.0
    %1769 = vmatprep.subr.mxu0 0.0
    %1770 = vmatpush1.msra.mxu0 0.0
    %1771 = vmatprep.subr.mxu0 0.0
    %1772 = vmatpush1.msra.mxu0 0.0
    %1773 = vmatprep.mubr.f32.mxu0 0.0
    %1774 = vmatmul.mubr.f32.gmra.mrb[0].mxu0 %v1538
    %v1775 = vpop.f32.mrb[0].mxu0
    %v1776 = vadd.f32 0.0, %v1775
    %v1777 = vpop.f32.mrb[0].mxu0
    %v1778 = vadd.f32 0.0, %v1777
    %1779 = vdwg.mxu0
    %1780 = vmatprep.subr.mxu0 %v444
    %1781 = vmatpush1.msra.mxu0 %v443
    %1782 = vmatprep.subr.mxu0 %v448
    %1783 = vmatpush1.msra.mxu0 %v447
    %1784 = vmatprep.subr.mxu0 %v452
    %1785 = vmatpush1.msra.mxu0 %v451
    %1786 = vmatprep.subr.mxu0 %v456
    %1787 = vmatpush1.msra.mxu0 %v455
    %1788 = vmatprep.subr.mxu0 %v460
    %1789 = vmatpush1.msra.mxu0 %v459
    %1790 = vmatprep.subr.mxu0 %v464
    %1791 = vmatpush1.msra.mxu0 %v463
    %1792 = vmatprep.subr.mxu0 %v468
    %1793 = vmatpush1.msra.mxu0 %v467
    %1794 = vmatprep.subr.mxu0 %v472
    %1795 = vmatpush1.msra.mxu0 %v471
    %1796 = vmatprep.subr.mxu0 %v476
    %1797 = vmatpush1.msra.mxu0 %v475
    %1798 = vmatprep.subr.mxu0 %v480
    %1799 = vmatpush1.msra.mxu0 %v479
    %1800 = vmatprep.subr.mxu0 %v484
    %1801 = vmatpush1.msra.mxu0 %v483
    %1802 = vmatprep.subr.mxu0 %v488
    %1803 = vmatpush1.msra.mxu0 %v487
    %1804 = vmatprep.subr.mxu0 %v492
    %1805 = vmatpush1.msra.mxu0 %v491
    %1806 = vmatprep.subr.mxu0 %v496
    %1807 = vmatpush1.msra.mxu0 %v495
    %1808 = vmatprep.subr.mxu0 %v500
    %1809 = vmatpush1.msra.mxu0 %v499
    %1810 = vmatprep.subr.mxu0 %v504
    %1811 = vmatpush1.msra.mxu0 %v503
    %1812 = vmatprep.subr.mxu0 0.0
    %1813 = vmatpush1.msra.mxu0 0.0
    %1814 = vmatprep.subr.mxu0 0.0
    %1815 = vmatpush1.msra.mxu0 0.0
    %1816 = vmatprep.subr.mxu0 0.0
    %1817 = vmatpush1.msra.mxu0 0.0
    %1818 = vmatprep.subr.mxu0 0.0
    %1819 = vmatpush1.msra.mxu0 0.0
    %1820 = vmatprep.subr.mxu0 0.0
    %1821 = vmatpush1.msra.mxu0 0.0
    %1822 = vmatprep.subr.mxu0 0.0
    %1823 = vmatpush1.msra.mxu0 0.0
    %1824 = vmatprep.subr.mxu0 0.0
    %1825 = vmatpush1.msra.mxu0 0.0
    %1826 = vmatprep.subr.mxu0 0.0
    %1827 = vmatpush1.msra.mxu0 0.0
    %1828 = vmatprep.subr.mxu0 0.0
    %1829 = vmatpush1.msra.mxu0 0.0
    %1830 = vmatprep.subr.mxu0 0.0
    %1831 = vmatpush1.msra.mxu0 0.0
    %1832 = vmatprep.subr.mxu0 0.0
    %1833 = vmatpush1.msra.mxu0 0.0
    %1834 = vmatprep.subr.mxu0 0.0
    %1835 = vmatpush1.msra.mxu0 0.0
    %1836 = vmatprep.subr.mxu0 0.0
    %1837 = vmatpush1.msra.mxu0 0.0
    %1838 = vmatprep.subr.mxu0 0.0
    %1839 = vmatpush1.msra.mxu0 0.0
    %1840 = vmatprep.subr.mxu0 0.0
    %1841 = vmatpush1.msra.mxu0 0.0
    %1842 = vmatprep.subr.mxu0 0.0
    %1843 = vmatpush1.msra.mxu0 0.0
    %1844 = vmatprep.mubr.f32.mxu0 0.0
    %1845 = vmatmul.mubr.f32.gmra.mrb[0].mxu0 %v1538
    %v1846 = vpop.f32.mrb[0].mxu0
    %v1847 = vadd.f32 0.0, %v1846
    %v1848 = vpop.f32.mrb[0].mxu0
    %v1849 = vadd.f32 0.0, %v1848
    %1850 = vdwg.mxu0
    %v1855 = vrot.slane %v1776, 2
    %v1856 = vrot.slane %v1778, 2
    %v1857 = vrot.slane %v1847, 2
    %v1858 = vrot.slane %v1849, 2
    %v1863 = vadd.f32 %v354, %v1855
    %v1864 = vadd.f32 %v356, %v1856
    %v1865 = vadd.f32 %v431, %v1857
    %v1866 = vadd.f32 %v433, %v1858
    %v1867 = vxor.u32 %v1863, 2147483648
    %v1868 = vmul.f32 %v1867, 1.442695
    %v1869 = vpow.pop %v1868
    %v1870 = vadd.f32 %v1869, 1.0
    %v1871 = vrcp.pop %v1870
    %v1872 = vmul.f32 1.0, %v1871
    %v1873 = vxor.u32 %v1864, 2147483648
    %v1874 = vmul.f32 %v1873, 1.442695
    %v1875 = vpow.pop %v1874
    %v1876 = vadd.f32 %v1875, 1.0
    %v1877 = vrcp.pop %v1876
    %v1878 = vmul.f32 1.0, %v1877
    %v1879 = vtanh.pop %v1865
    %v1880 = vxor.u32 %v1866, 2147483648
    %v1881 = vmul.f32 %v1880, 1.442695
    %v1882 = vpow.pop %v1881
    %v1883 = vadd.f32 %v1882, 1.0
    %v1884 = vrcp.pop %v1883
    %v1885 = vmul.f32 1.0, %v1884
    %v1887 = vrot.slane %v1532, 6
    %v1889 = vmul.f32 %v1878, %v1887
    %v1890 = vmul.f32 %v1872, %v1879
    %v1891 = vadd.f32 %v1889, %v1890
    %v1892 = vtanh.pop %v1891
    %v1893 = vmul.f32 %v1885, %v1892
    %v1895 = vrot.slane %v1707, 2
    %v1897 = vrot.slane %v1893, 6
    %v1898 = vrot.slane %v1895, 6
    %1901 = vmatprep.subr.mxu0 %v506
    %1902 = vmatpush1.msra.mxu0 %v505
    %1903 = vmatprep.subr.mxu0 %v510
    %1904 = vmatpush1.msra.mxu0 %v509
    %1905 = vmatprep.subr.mxu0 %v514
    %1906 = vmatpush1.msra.mxu0 %v513
    %1907 = vmatprep.subr.mxu0 %v518
    %1908 = vmatpush1.msra.mxu0 %v517
    %1909 = vmatprep.subr.mxu0 %v522
    %1910 = vmatpush1.msra.mxu0 %v521
    %1911 = vmatprep.subr.mxu0 %v526
    %1912 = vmatpush1.msra.mxu0 %v525
    %1913 = vmatprep.subr.mxu0 %v530
    %1914 = vmatpush1.msra.mxu0 %v529
    %1915 = vmatprep.subr.mxu0 %v534
    %1916 = vmatpush1.msra.mxu0 %v533
    %1917 = vmatprep.subr.mxu0 %v538
    %1918 = vmatpush1.msra.mxu0 %v537
    %1919 = vmatprep.subr.mxu0 %v542
    %1920 = vmatpush1.msra.mxu0 %v541
    %1921 = vmatprep.subr.mxu0 %v546
    %1922 = vmatpush1.msra.mxu0 %v545
    %1923 = vmatprep.subr.mxu0 %v550
    %1924 = vmatpush1.msra.mxu0 %v549
    %1925 = vmatprep.subr.mxu0 %v554
    %1926 = vmatpush1.msra.mxu0 %v553
    %1927 = vmatprep.subr.mxu0 %v558
    %1928 = vmatpush1.msra.mxu0 %v557
    %1929 = vmatprep.subr.mxu0 %v562
    %1930 = vmatpush1.msra.mxu0 %v561
    %1931 = vmatprep.subr.mxu0 %v566
    %1932 = vmatpush1.msra.mxu0 %v565
    %1933 = vmatprep.subr.mxu0 %v570
    %1934 = vmatpush1.msra.mxu0 %v569
    %1935 = vmatprep.subr.mxu0 %v574
    %1936 = vmatpush1.msra.mxu0 %v573
    %1937 = vmatprep.subr.mxu0 %v578
    %1938 = vmatpush1.msra.mxu0 %v577
    %1939 = vmatprep.subr.mxu0 %v582
    %1940 = vmatpush1.msra.mxu0 %v581
    %1941 = vmatprep.subr.mxu0 %v586
    %1942 = vmatpush1.msra.mxu0 %v585
    %1943 = vmatprep.subr.mxu0 %v590
    %1944 = vmatpush1.msra.mxu0 %v589
    %1945 = vmatprep.subr.mxu0 %v594
    %1946 = vmatpush1.msra.mxu0 %v593
    %1947 = vmatprep.subr.mxu0 %v598
    %1948 = vmatpush1.msra.mxu0 %v597
    %1949 = vmatprep.subr.mxu0 %v602
    %1950 = vmatpush1.msra.mxu0 %v601
    %1951 = vmatprep.subr.mxu0 %v606
    %1952 = vmatpush1.msra.mxu0 %v605
    %1953 = vmatprep.subr.mxu0 %v610
    %1954 = vmatpush1.msra.mxu0 %v609
    %1955 = vmatprep.subr.mxu0 %v614
    %1956 = vmatpush1.msra.mxu0 %v613
    %1957 = vmatprep.subr.mxu0 %v618
    %1958 = vmatpush1.msra.mxu0 %v617
    %1959 = vmatprep.subr.mxu0 %v622
    %1960 = vmatpush1.msra.mxu0 %v621
    %1961 = vmatprep.subr.mxu0 %v626
    %1962 = vmatpush1.msra.mxu0 %v625
    %1963 = vmatprep.subr.mxu0 %v630
    %1964 = vmatpush1.msra.mxu0 %v629
    %1965 = vmatprep.mubr.f32.mxu0 %v1898
    %1966 = vmatmul.mubr.f32.gmra.mrb[0].mxu0 %v1897
    %v1967 = vpop.f32.mrb[0].mxu0
    %v1968 = vadd.f32 %v638, %v1967
    %v1969 = vpop.f32.mrb[0].mxu0
    %v1970 = vadd.f32 %v642, %v1969
    %1971 = vdwg.mxu0
    %1972 = vmatprep.subr.mxu0 %v508
    %1973 = vmatpush1.msra.mxu0 %v507
    %1974 = vmatprep.subr.mxu0 %v512
    %1975 = vmatpush1.msra.mxu0 %v511
    %1976 = vmatprep.subr.mxu0 %v516
    %1977 = vmatpush1.msra.mxu0 %v515
    %1978 = vmatprep.subr.mxu0 %v520
    %1979 = vmatpush1.msra.mxu0 %v519
    %1980 = vmatprep.subr.mxu0 %v524
    %1981 = vmatpush1.msra.mxu0 %v523
    %1982 = vmatprep.subr.mxu0 %v528
    %1983 = vmatpush1.msra.mxu0 %v527
    %1984 = vmatprep.subr.mxu0 %v532
    %1985 = vmatpush1.msra.mxu0 %v531
    %1986 = vmatprep.subr.mxu0 %v536
    %1987 = vmatpush1.msra.mxu0 %v535
    %1988 = vmatprep.subr.mxu0 %v540
    %1989 = vmatpush1.msra.mxu0 %v539
    %1990 = vmatprep.subr.mxu0 %v544
    %1991 = vmatpush1.msra.mxu0 %v543
    %1992 = vmatprep.subr.mxu0 %v548
    %1993 = vmatpush1.msra.mxu0 %v547
    %1994 = vmatprep.subr.mxu0 %v552
    %1995 = vmatpush1.msra.mxu0 %v551
    %1996 = vmatprep.subr.mxu0 %v556
    %1997 = vmatpush1.msra.mxu0 %v555
    %1998 = vmatprep.subr.mxu0 %v560
    %1999 = vmatpush1.msra.mxu0 %v559
    %2000 = vmatprep.subr.mxu0 %v564
    %2001 = vmatpush1.msra.mxu0 %v563
    %2002 = vmatprep.subr.mxu0 %v568
    %2003 = vmatpush1.msra.mxu0 %v567
    %2004 = vmatprep.subr.mxu0 %v572
    %2005 = vmatpush1.msra.mxu0 %v571
    %2006 = vmatprep.subr.mxu0 %v576
    %2007 = vmatpush1.msra.mxu0 %v575
    %2008 = vmatprep.subr.mxu0 %v580
    %2009 = vmatpush1.msra.mxu0 %v579
    %2010 = vmatprep.subr.mxu0 %v584
    %2011 = vmatpush1.msra.mxu0 %v583
    %2012 = vmatprep.subr.mxu0 %v588
    %2013 = vmatpush1.msra.mxu0 %v587
    %2014 = vmatprep.subr.mxu0 %v592
    %2015 = vmatpush1.msra.mxu0 %v591
    %2016 = vmatprep.subr.mxu0 %v596
    %2017 = vmatpush1.msra.mxu0 %v595
    %2018 = vmatprep.subr.mxu0 %v600
    %2019 = vmatpush1.msra.mxu0 %v599
    %2020 = vmatprep.subr.mxu0 %v604
    %2021 = vmatpush1.msra.mxu0 %v603
    %2022 = vmatprep.subr.mxu0 %v608
    %2023 = vmatpush1.msra.mxu0 %v607
    %2024 = vmatprep.subr.mxu0 %v612
    %2025 = vmatpush1.msra.mxu0 %v611
    %2026 = vmatprep.subr.mxu0 %v616
    %2027 = vmatpush1.msra.mxu0 %v615
    %2028 = vmatprep.subr.mxu0 %v620
    %2029 = vmatpush1.msra.mxu0 %v619
    %2030 = vmatprep.subr.mxu0 %v624
    %2031 = vmatpush1.msra.mxu0 %v623
    %2032 = vmatprep.subr.mxu0 %v628
    %2033 = vmatpush1.msra.mxu0 %v627
    %2034 = vmatprep.subr.mxu0 %v632
    %2035 = vmatpush1.msra.mxu0 %v631
    %2036 = vmatprep.mubr.f32.mxu0 %v1898
    %2037 = vmatmul.mubr.f32.gmra.mrb[0].mxu0 %v1897
    %v2038 = vpop.f32.mrb[0].mxu0
    %v2039 = vadd.f32 %v646, %v2038
    %v2040 = vpop.f32.mrb[0].mxu0
    %v2041 = vadd.f32 %v650, %v2040
    %2042 = vdwg.mxu0
    %v2043 = vxor.u32 %v1968, 2147483648
    %v2044 = vmul.f32 %v2043, 1.442695
    %v2045 = vpow.pop %v2044
    %v2046 = vadd.f32 %v2045, 1.0
    %v2047 = vrcp.pop %v2046
    %v2048 = vmul.f32 1.0, %v2047
    %v2049 = vxor.u32 %v1970, 2147483648
    %v2050 = vmul.f32 %v2049, 1.442695
    %v2051 = vpow.pop %v2050
    %v2052 = vadd.f32 %v2051, 1.0
    %v2053 = vrcp.pop %v2052
    %v2054 = vmul.f32 1.0, %v2053
    %v2055 = vtanh.pop %v2039
    %v2056 = vxor.u32 %v2041, 2147483648
    %v2057 = vmul.f32 %v2056, 1.442695
    %v2058 = vpow.pop %v2057
    %v2059 = vadd.f32 %v2058, 1.0
    %v2060 = vrcp.pop %v2059
    %v2061 = vmul.f32 1.0, %v2060
    %v2062 = vmul.f32 %v2054, %v1705
    %v2063 = vmul.f32 %v2048, %v2055
    %v2064 = vadd.f32 %v2062, %v2063
    %v2065 = vtanh.pop %v2064
    %v2066 = vmul.f32 %v2061, %v2065
    %v2067 = vmax.f32 %v1708, %v2066
    %2068 = vmatprep.subr.mxu0 %v442
    %2069 = vmatpush1.msra.mxu0 %v441
    %2070 = vmatprep.subr.mxu0 %v446
    %2071 = vmatpush1.msra.mxu0 %v445
    %2072 = vmatprep.subr.mxu0 %v450
    %2073 = vmatpush1.msra.mxu0 %v449
    %2074 = vmatprep.subr.mxu0 %v454
    %2075 = vmatpush1.msra.mxu0 %v453
    %2076 = vmatprep.subr.mxu0 %v458
    %2077 = vmatpush1.msra.mxu0 %v457
    %2078 = vmatprep.subr.mxu0 %v462
    %2079 = vmatpush1.msra.mxu0 %v461
    %2080 = vmatprep.subr.mxu0 %v466
    %2081 = vmatpush1.msra.mxu0 %v465
    %2082 = vmatprep.subr.mxu0 %v470
    %2083 = vmatpush1.msra.mxu0 %v469
    %2084 = vmatprep.subr.mxu0 %v474
    %2085 = vmatpush1.msra.mxu0 %v473
    %2086 = vmatprep.subr.mxu0 %v478
    %2087 = vmatpush1.msra.mxu0 %v477
    %2088 = vmatprep.subr.mxu0 %v482
    %2089 = vmatpush1.msra.mxu0 %v481
    %2090 = vmatprep.subr.mxu0 %v486
    %2091 = vmatpush1.msra.mxu0 %v485
    %2092 = vmatprep.subr.mxu0 %v490
    %2093 = vmatpush1.msra.mxu0 %v489
    %2094 = vmatprep.subr.mxu0 %v494
    %2095 = vmatpush1.msra.mxu0 %v493
    %2096 = vmatprep.subr.mxu0 %v498
    %2097 = vmatpush1.msra.mxu0 %v497
    %2098 = vmatprep.subr.mxu0 %v502
    %2099 = vmatpush1.msra.mxu0 %v501
    %2100 = vmatprep.subr.mxu0 0.0
    %2101 = vmatpush1.msra.mxu0 0.0
    %2102 = vmatprep.subr.mxu0 0.0
    %2103 = vmatpush1.msra.mxu0 0.0
    %2104 = vmatprep.subr.mxu0 0.0
    %2105 = vmatpush1.msra.mxu0 0.0
    %2106 = vmatprep.subr.mxu0 0.0
    %2107 = vmatpush1.msra.mxu0 0.0
    %2108 = vmatprep.subr.mxu0 0.0
    %2109 = vmatpush1.msra.mxu0 0.0
    %2110 = vmatprep.subr.mxu0 0.0
    %2111 = vmatpush1.msra.mxu0 0.0
    %2112 = vmatprep.subr.mxu0 0.0
    %2113 = vmatpush1.msra.mxu0 0.0
    %2114 = vmatprep.subr.mxu0 0.0
    %2115 = vmatpush1.msra.mxu0 0.0
    %2116 = vmatprep.subr.mxu0 0.0
    %2117 = vmatpush1.msra.mxu0 0.0
    %2118 = vmatprep.subr.mxu0 0.0
    %2119 = vmatpush1.msra.mxu0 0.0
    %2120 = vmatprep.subr.mxu0 0.0
    %2121 = vmatpush1.msra.mxu0 0.0
    %2122 = vmatprep.subr.mxu0 0.0
    %2123 = vmatpush1.msra.mxu0 0.0
    %2124 = vmatprep.subr.mxu0 0.0
    %2125 = vmatpush1.msra.mxu0 0.0
    %2126 = vmatprep.subr.mxu0 0.0
    %2127 = vmatpush1.msra.mxu0 0.0
    %2128 = vmatprep.subr.mxu0 0.0
    %2129 = vmatpush1.msra.mxu0 0.0
    %2130 = vmatprep.subr.mxu0 0.0
    %2131 = vmatpush1.msra.mxu0 0.0
    %2132 = vmatprep.mubr.f32.mxu0 0.0
    %2133 = vmatmul.mubr.f32.gmra.mrb[0].mxu0 %v1897
    %v2134 = vpop.f32.mrb[0].mxu0
    %v2135 = vadd.f32 0.0, %v2134
    %v2136 = vpop.f32.mrb[0].mxu0
    %v2137 = vadd.f32 0.0, %v2136
    %2138 = vdwg.mxu0
    %2139 = vmatprep.subr.mxu0 %v444
    %2140 = vmatpush1.msra.mxu0 %v443
    %2141 = vmatprep.subr.mxu0 %v448
    %2142 = vmatpush1.msra.mxu0 %v447
    %2143 = vmatprep.subr.mxu0 %v452
    %2144 = vmatpush1.msra.mxu0 %v451
    %2145 = vmatprep.subr.mxu0 %v456
    %2146 = vmatpush1.msra.mxu0 %v455
    %2147 = vmatprep.subr.mxu0 %v460
    %2148 = vmatpush1.msra.mxu0 %v459
    %2149 = vmatprep.subr.mxu0 %v464
    %2150 = vmatpush1.msra.mxu0 %v463
    %2151 = vmatprep.subr.mxu0 %v468
    %2152 = vmatpush1.msra.mxu0 %v467
    %2153 = vmatprep.subr.mxu0 %v472
    %2154 = vmatpush1.msra.mxu0 %v471
    %2155 = vmatprep.subr.mxu0 %v476
    %2156 = vmatpush1.msra.mxu0 %v475
    %2157 = vmatprep.subr.mxu0 %v480
    %2158 = vmatpush1.msra.mxu0 %v479
    %2159 = vmatprep.subr.mxu0 %v484
    %2160 = vmatpush1.msra.mxu0 %v483
    %2161 = vmatprep.subr.mxu0 %v488
    %2162 = vmatpush1.msra.mxu0 %v487
    %2163 = vmatprep.subr.mxu0 %v492
    %2164 = vmatpush1.msra.mxu0 %v491
    %2165 = vmatprep.subr.mxu0 %v496
    %2166 = vmatpush1.msra.mxu0 %v495
    %2167 = vmatprep.subr.mxu0 %v500
    %2168 = vmatpush1.msra.mxu0 %v499
    %2169 = vmatprep.subr.mxu0 %v504
    %2170 = vmatpush1.msra.mxu0 %v503
    %2171 = vmatprep.subr.mxu0 0.0
    %2172 = vmatpush1.msra.mxu0 0.0
    %2173 = vmatprep.subr.mxu0 0.0
    %2174 = vmatpush1.msra.mxu0 0.0
    %2175 = vmatprep.subr.mxu0 0.0
    %2176 = vmatpush1.msra.mxu0 0.0
    %2177 = vmatprep.subr.mxu0 0.0
    %2178 = vmatpush1.msra.mxu0 0.0
    %2179 = vmatprep.subr.mxu0 0.0
    %2180 = vmatpush1.msra.mxu0 0.0
    %2181 = vmatprep.subr.mxu0 0.0
    %2182 = vmatpush1.msra.mxu0 0.0
    %2183 = vmatprep.subr.mxu0 0.0
    %2184 = vmatpush1.msra.mxu0 0.0
    %2185 = vmatprep.subr.mxu0 0.0
    %2186 = vmatpush1.msra.mxu0 0.0
    %2187 = vmatprep.subr.mxu0 0.0
    %2188 = vmatpush1.msra.mxu0 0.0
    %2189 = vmatprep.subr.mxu0 0.0
    %2190 = vmatpush1.msra.mxu0 0.0
    %2191 = vmatprep.subr.mxu0 0.0
    %2192 = vmatpush1.msra.mxu0 0.0
    %2193 = vmatprep.subr.mxu0 0.0
    %2194 = vmatpush1.msra.mxu0 0.0
    %2195 = vmatprep.subr.mxu0 0.0
    %2196 = vmatpush1.msra.mxu0 0.0
    %2197 = vmatprep.subr.mxu0 0.0
    %2198 = vmatpush1.msra.mxu0 0.0
    %2199 = vmatprep.subr.mxu0 0.0
    %2200 = vmatpush1.msra.mxu0 0.0
    %2201 = vmatprep.subr.mxu0 0.0
    %2202 = vmatpush1.msra.mxu0 0.0
    %2203 = vmatprep.mubr.f32.mxu0 0.0
    %2204 = vmatmul.mubr.f32.gmra.mrb[0].mxu0 %v1897
    %v2205 = vpop.f32.mrb[0].mxu0
    %v2206 = vadd.f32 0.0, %v2205
    %v2207 = vpop.f32.mrb[0].mxu0
    %v2208 = vadd.f32 0.0, %v2207
    %2209 = vdwg.mxu0
    %v2210 = vadd.f32 %v360, %v2135
    %v2211 = vadd.f32 %v362, %v2137
    %v2212 = vadd.f32 %v437, %v2206
    %v2213 = vadd.f32 %v439, %v2208
    %v2214 = vxor.u32 %v2210, 2147483648
    %v2215 = vmul.f32 %v2214, 1.442695
    %v2216 = vpow.pop %v2215
    %v2217 = vadd.f32 %v2216, 1.0
    %v2218 = vrcp.pop %v2217
    %v2219 = vmul.f32 1.0, %v2218
    %v2220 = vxor.u32 %v2211, 2147483648
    %v2221 = vmul.f32 %v2220, 1.442695
    %v2222 = vpow.pop %v2221
    %v2223 = vadd.f32 %v2222, 1.0
    %v2224 = vrcp.pop %v2223
    %v2225 = vmul.f32 1.0, %v2224
    %v2226 = vtanh.pop %v2212
    %v2227 = vxor.u32 %v2213, 2147483648
    %v2228 = vmul.f32 %v2227, 1.442695
    %v2229 = vpow.pop %v2228
    %v2230 = vadd.f32 %v2229, 1.0
    %v2231 = vrcp.pop %v2230
    %v2232 = vmul.f32 1.0, %v2231
    %v2234 = vrot.slane %v1891, 6
    %v2236 = vmul.f32 %v2225, %v2234
    %v2237 = vmul.f32 %v2219, %v2226
    %v2238 = vadd.f32 %v2236, %v2237
    %v2239 = vtanh.pop %v2238
    %v2240 = vmul.f32 %v2232, %v2239
    %2241 = vmatprep.subr.mxu0 %v506
    %2242 = vmatpush1.msra.mxu0 %v505
    %2243 = vmatprep.subr.mxu0 %v510
    %2244 = vmatpush1.msra.mxu0 %v509
    %2245 = vmatprep.subr.mxu0 %v514
    %2246 = vmatpush1.msra.mxu0 %v513
    %2247 = vmatprep.subr.mxu0 %v518
    %2248 = vmatpush1.msra.mxu0 %v517
    %2249 = vmatprep.subr.mxu0 %v522
    %2250 = vmatpush1.msra.mxu0 %v521
    %2251 = vmatprep.subr.mxu0 %v526
    %2252 = vmatpush1.msra.mxu0 %v525
    %2253 = vmatprep.subr.mxu0 %v530
    %2254 = vmatpush1.msra.mxu0 %v529
    %2255 = vmatprep.subr.mxu0 %v534
    %2256 = vmatpush1.msra.mxu0 %v533
    %2257 = vmatprep.subr.mxu0 %v538
    %2258 = vmatpush1.msra.mxu0 %v537
    %2259 = vmatprep.subr.mxu0 %v542
    %2260 = vmatpush1.msra.mxu0 %v541
    %2261 = vmatprep.subr.mxu0 %v546
    %2262 = vmatpush1.msra.mxu0 %v545
    %2263 = vmatprep.subr.mxu0 %v550
    %2264 = vmatpush1.msra.mxu0 %v549
    %2265 = vmatprep.subr.mxu0 %v554
    %2266 = vmatpush1.msra.mxu0 %v553
    %2267 = vmatprep.subr.mxu0 %v558
    %2268 = vmatpush1.msra.mxu0 %v557
    %2269 = vmatprep.subr.mxu0 %v562
    %2270 = vmatpush1.msra.mxu0 %v561
    %2271 = vmatprep.subr.mxu0 %v566
    %2272 = vmatpush1.msra.mxu0 %v565
    %2273 = vmatprep.subr.mxu0 %v570
    %2274 = vmatpush1.msra.mxu0 %v569
    %2275 = vmatprep.subr.mxu0 %v574
    %2276 = vmatpush1.msra.mxu0 %v573
    %2277 = vmatprep.subr.mxu0 %v578
    %2278 = vmatpush1.msra.mxu0 %v577
    %2279 = vmatprep.subr.mxu0 %v582
    %2280 = vmatpush1.msra.mxu0 %v581
    %2281 = vmatprep.subr.mxu0 %v586
    %2282 = vmatpush1.msra.mxu0 %v585
    %2283 = vmatprep.subr.mxu0 %v590
    %2284 = vmatpush1.msra.mxu0 %v589
    %2285 = vmatprep.subr.mxu0 %v594
    %2286 = vmatpush1.msra.mxu0 %v593
    %2287 = vmatprep.subr.mxu0 %v598
    %2288 = vmatpush1.msra.mxu0 %v597
    %2289 = vmatprep.subr.mxu0 %v602
    %2290 = vmatpush1.msra.mxu0 %v601
    %2291 = vmatprep.subr.mxu0 %v606
    %2292 = vmatpush1.msra.mxu0 %v605
    %2293 = vmatprep.subr.mxu0 %v610
    %2294 = vmatpush1.msra.mxu0 %v609
    %2295 = vmatprep.subr.mxu0 %v614
    %2296 = vmatpush1.msra.mxu0 %v613
    %2297 = vmatprep.subr.mxu0 %v618
    %2298 = vmatpush1.msra.mxu0 %v617
    %2299 = vmatprep.subr.mxu0 %v622
    %2300 = vmatpush1.msra.mxu0 %v621
    %2301 = vmatprep.subr.mxu0 %v626
    %2302 = vmatpush1.msra.mxu0 %v625
    %2303 = vmatprep.subr.mxu0 %v630
    %2304 = vmatpush1.msra.mxu0 %v629
    %2305 = vmatprep.mubr.f32.mxu0 %v2066
    %2306 = vmatmul.mubr.f32.gmra.mrb[0].mxu0 %v2240
    %v2307 = vpop.f32.mrb[0].mxu0
    %v2308 = vadd.f32 %v638, %v2307
    %v2309 = vpop.f32.mrb[0].mxu0
    %v2310 = vadd.f32 %v642, %v2309
    %2311 = vdwg.mxu0
    %2312 = vmatprep.subr.mxu0 %v508
    %2313 = vmatpush1.msra.mxu0 %v507
    %2314 = vmatprep.subr.mxu0 %v512
    %2315 = vmatpush1.msra.mxu0 %v511
    %2316 = vmatprep.subr.mxu0 %v516
    %2317 = vmatpush1.msra.mxu0 %v515
    %2318 = vmatprep.subr.mxu0 %v520
    %2319 = vmatpush1.msra.mxu0 %v519
    %2320 = vmatprep.subr.mxu0 %v524
    %2321 = vmatpush1.msra.mxu0 %v523
    %2322 = vmatprep.subr.mxu0 %v528
    %2323 = vmatpush1.msra.mxu0 %v527
    %2324 = vmatprep.subr.mxu0 %v532
    %2325 = vmatpush1.msra.mxu0 %v531
    %2326 = vmatprep.subr.mxu0 %v536
    %2327 = vmatpush1.msra.mxu0 %v535
    %2328 = vmatprep.subr.mxu0 %v540
    %2329 = vmatpush1.msra.mxu0 %v539
    %2330 = vmatprep.subr.mxu0 %v544
    %2331 = vmatpush1.msra.mxu0 %v543
    %2332 = vmatprep.subr.mxu0 %v548
    %2333 = vmatpush1.msra.mxu0 %v547
    %2334 = vmatprep.subr.mxu0 %v552
    %2335 = vmatpush1.msra.mxu0 %v551
    %2336 = vmatprep.subr.mxu0 %v556
    %2337 = vmatpush1.msra.mxu0 %v555
    %2338 = vmatprep.subr.mxu0 %v560
    %2339 = vmatpush1.msra.mxu0 %v559
    %2340 = vmatprep.subr.mxu0 %v564
    %2341 = vmatpush1.msra.mxu0 %v563
    %2342 = vmatprep.subr.mxu0 %v568
    %2343 = vmatpush1.msra.mxu0 %v567
    %2344 = vmatprep.subr.mxu0 %v572
    %2345 = vmatpush1.msra.mxu0 %v571
    %2346 = vmatprep.subr.mxu0 %v576
    %2347 = vmatpush1.msra.mxu0 %v575
    %2348 = vmatprep.subr.mxu0 %v580
    %2349 = vmatpush1.msra.mxu0 %v579
    %2350 = vmatprep.subr.mxu0 %v584
    %2351 = vmatpush1.msra.mxu0 %v583
    %2352 = vmatprep.subr.mxu0 %v588
    %2353 = vmatpush1.msra.mxu0 %v587
    %2354 = vmatprep.subr.mxu0 %v592
    %2355 = vmatpush1.msra.mxu0 %v591
    %2356 = vmatprep.subr.mxu0 %v596
    %2357 = vmatpush1.msra.mxu0 %v595
    %2358 = vmatprep.subr.mxu0 %v600
    %2359 = vmatpush1.msra.mxu0 %v599
    %2360 = vmatprep.subr.mxu0 %v604
    %2361 = vmatpush1.msra.mxu0 %v603
    %2362 = vmatprep.subr.mxu0 %v608
    %2363 = vmatpush1.msra.mxu0 %v607
    %2364 = vmatprep.subr.mxu0 %v612
    %2365 = vmatpush1.msra.mxu0 %v611
    %2366 = vmatprep.subr.mxu0 %v616
    %2367 = vmatpush1.msra.mxu0 %v615
    %2368 = vmatprep.subr.mxu0 %v620
    %2369 = vmatpush1.msra.mxu0 %v619
    %2370 = vmatprep.subr.mxu0 %v624
    %2371 = vmatpush1.msra.mxu0 %v623
    %2372 = vmatprep.subr.mxu0 %v628
    %2373 = vmatpush1.msra.mxu0 %v627
    %2374 = vmatprep.subr.mxu0 %v632
    %2375 = vmatpush1.msra.mxu0 %v631
    %2376 = vmatprep.mubr.f32.mxu0 %v2066
    %2377 = vmatmul.mubr.f32.gmra.mrb[0].mxu0 %v2240
    %v2378 = vpop.f32.mrb[0].mxu0
    %v2379 = vadd.f32 %v646, %v2378
    %v2380 = vpop.f32.mrb[0].mxu0
    %v2381 = vadd.f32 %v650, %v2380
    %2382 = vdwg.mxu0
    %v2383 = vxor.u32 %v2308, 2147483648
    %v2384 = vmul.f32 %v2383, 1.442695
    %v2385 = vpow.pop %v2384
    %v2386 = vadd.f32 %v2385, 1.0
    %v2387 = vrcp.pop %v2386
    %v2388 = vmul.f32 1.0, %v2387
    %v2389 = vxor.u32 %v2310, 2147483648
    %v2390 = vmul.f32 %v2389, 1.442695
    %v2391 = vpow.pop %v2390
    %v2392 = vadd.f32 %v2391, 1.0
    %v2393 = vrcp.pop %v2392
    %v2394 = vmul.f32 1.0, %v2393
    %v2395 = vtanh.pop %v2379
    %v2396 = vxor.u32 %v2381, 2147483648
    %v2397 = vmul.f32 %v2396, 1.442695
    %v2398 = vpow.pop %v2397
    %v2399 = vadd.f32 %v2398, 1.0
    %v2400 = vrcp.pop %v2399
    %v2401 = vmul.f32 1.0, %v2400
    %v2402 = vmul.f32 %v2394, %v2064
    %v2403 = vmul.f32 %v2388, %v2395
    %v2404 = vadd.f32 %v2402, %v2403
    %v2405 = vtanh.pop %v2404
    %v2406 = vmul.f32 %v2401, %v2405
    %v2407 = vmax.f32 %v2067, %v2406
    %2408 = vmatprep.subr.mxu0 %v442
    %2409 = vmatpush1.msra.mxu0 %v441
    %2410 = vmatprep.subr.mxu0 %v446
    %2411 = vmatpush1.msra.mxu0 %v445
    %2412 = vmatprep.subr.mxu0 %v450
    %2413 = vmatpush1.msra.mxu0 %v449
    %2414 = vmatprep.subr.mxu0 %v454
    %2415 = vmatpush1.msra.mxu0 %v453
    %2416 = vmatprep.subr.mxu0 %v458
    %2417 = vmatpush1.msra.mxu0 %v457
    %2418 = vmatprep.subr.mxu0 %v462
    %2419 = vmatpush1.msra.mxu0 %v461
    %2420 = vmatprep.subr.mxu0 %v466
    %2421 = vmatpush1.msra.mxu0 %v465
    %2422 = vmatprep.subr.mxu0 %v470
    %2423 = vmatpush1.msra.mxu0 %v469
    %2424 = vmatprep.subr.mxu0 %v474
    %2425 = vmatpush1.msra.mxu0 %v473
    %2426 = vmatprep.subr.mxu0 %v478
    %2427 = vmatpush1.msra.mxu0 %v477
    %2428 = vmatprep.subr.mxu0 %v482
    %2429 = vmatpush1.msra.mxu0 %v481
    %2430 = vmatprep.subr.mxu0 %v486
    %2431 = vmatpush1.msra.mxu0 %v485
    %2432 = vmatprep.subr.mxu0 %v490
    %2433 = vmatpush1.msra.mxu0 %v489
    %2434 = vmatprep.subr.mxu0 %v494
    %2435 = vmatpush1.msra.mxu0 %v493
    %2436 = vmatprep.subr.mxu0 %v498
    %2437 = vmatpush1.msra.mxu0 %v497
    %2438 = vmatprep.subr.mxu0 %v502
    %2439 = vmatpush1.msra.mxu0 %v501
    %2440 = vmatprep.subr.mxu0 0.0
    %2441 = vmatpush1.msra.mxu0 0.0
    %2442 = vmatprep.subr.mxu0 0.0
    %2443 = vmatpush1.msra.mxu0 0.0
    %2444 = vmatprep.subr.mxu0 0.0
    %2445 = vmatpush1.msra.mxu0 0.0
    %2446 = vmatprep.subr.mxu0 0.0
    %2447 = vmatpush1.msra.mxu0 0.0
    %2448 = vmatprep.subr.mxu0 0.0
    %2449 = vmatpush1.msra.mxu0 0.0
    %2450 = vmatprep.subr.mxu0 0.0
    %2451 = vmatpush1.msra.mxu0 0.0
    %2452 = vmatprep.subr.mxu0 0.0
    %2453 = vmatpush1.msra.mxu0 0.0
    %2454 = vmatprep.subr.mxu0 0.0
    %2455 = vmatpush1.msra.mxu0 0.0
    %2456 = vmatprep.subr.mxu0 0.0
    %2457 = vmatpush1.msra.mxu0 0.0
    %2458 = vmatprep.subr.mxu0 0.0
    %2459 = vmatpush1.msra.mxu0 0.0
    %2460 = vmatprep.subr.mxu0 0.0
    %2461 = vmatpush1.msra.mxu0 0.0
    %2462 = vmatprep.subr.mxu0 0.0
    %2463 = vmatpush1.msra.mxu0 0.0
    %2464 = vmatprep.subr.mxu0 0.0
    %2465 = vmatpush1.msra.mxu0 0.0
    %2466 = vmatprep.subr.mxu0 0.0
    %2467 = vmatpush1.msra.mxu0 0.0
    %2468 = vmatprep.subr.mxu0 0.0
    %2469 = vmatpush1.msra.mxu0 0.0
    %2470 = vmatprep.subr.mxu0 0.0
    %2471 = vmatpush1.msra.mxu0 0.0
    %2472 = vmatprep.mubr.f32.mxu0 0.0
    %2473 = vmatmul.mubr.f32.gmra.mrb[0].mxu0 %v2240
    %v2474 = vpop.f32.mrb[0].mxu0
    %v2475 = vadd.f32 0.0, %v2474
    %v2476 = vpop.f32.mrb[0].mxu0
    %v2477 = vadd.f32 0.0, %v2476
    %2478 = vdwg.mxu0
    %2479 = vmatprep.subr.mxu0 %v444
    %2480 = vmatpush1.msra.mxu0 %v443
    %2481 = vmatprep.subr.mxu0 %v448
    %2482 = vmatpush1.msra.mxu0 %v447
    %2483 = vmatprep.subr.mxu0 %v452
    %2484 = vmatpush1.msra.mxu0 %v451
    %2485 = vmatprep.subr.mxu0 %v456
    %2486 = vmatpush1.msra.mxu0 %v455
    %2487 = vmatprep.subr.mxu0 %v460
    %2488 = vmatpush1.msra.mxu0 %v459
    %2489 = vmatprep.subr.mxu0 %v464
    %2490 = vmatpush1.msra.mxu0 %v463
    %2491 = vmatprep.subr.mxu0 %v468
    %2492 = vmatpush1.msra.mxu0 %v467
    %2493 = vmatprep.subr.mxu0 %v472
    %2494 = vmatpush1.msra.mxu0 %v471
    %2495 = vmatprep.subr.mxu0 %v476
    %2496 = vmatpush1.msra.mxu0 %v475
    %2497 = vmatprep.subr.mxu0 %v480
    %2498 = vmatpush1.msra.mxu0 %v479
    %2499 = vmatprep.subr.mxu0 %v484
    %2500 = vmatpush1.msra.mxu0 %v483
    %2501 = vmatprep.subr.mxu0 %v488
    %2502 = vmatpush1.msra.mxu0 %v487
    %2503 = vmatprep.subr.mxu0 %v492
    %2504 = vmatpush1.msra.mxu0 %v491
    %2505 = vmatprep.subr.mxu0 %v496
    %2506 = vmatpush1.msra.mxu0 %v495
    %2507 = vmatprep.subr.mxu0 %v500
    %2508 = vmatpush1.msra.mxu0 %v499
    %2509 = vmatprep.subr.mxu0 %v504
    %2510 = vmatpush1.msra.mxu0 %v503
    %2511 = vmatprep.subr.mxu0 0.0
    %2512 = vmatpush1.msra.mxu0 0.0
    %2513 = vmatprep.subr.mxu0 0.0
    %2514 = vmatpush1.msra.mxu0 0.0
    %2515 = vmatprep.subr.mxu0 0.0
    %2516 = vmatpush1.msra.mxu0 0.0
    %2517 = vmatprep.subr.mxu0 0.0
    %2518 = vmatpush1.msra.mxu0 0.0
    %2519 = vmatprep.subr.mxu0 0.0
    %2520 = vmatpush1.msra.mxu0 0.0
    %2521 = vmatprep.subr.mxu0 0.0
    %2522 = vmatpush1.msra.mxu0 0.0
    %2523 = vmatprep.subr.mxu0 0.0
    %2524 = vmatpush1.msra.mxu0 0.0
    %2525 = vmatprep.subr.mxu0 0.0
    %2526 = vmatpush1.msra.mxu0 0.0
    %2527 = vmatprep.subr.mxu0 0.0
    %2528 = vmatpush1.msra.mxu0 0.0
    %2529 = vmatprep.subr.mxu0 0.0
    %2530 = vmatpush1.msra.mxu0 0.0
    %2531 = vmatprep.subr.mxu0 0.0
    %2532 = vmatpush1.msra.mxu0 0.0
    %2533 = vmatprep.subr.mxu0 0.0
    %2534 = vmatpush1.msra.mxu0 0.0
    %2535 = vmatprep.subr.mxu0 0.0
    %2536 = vmatpush1.msra.mxu0 0.0
    %2537 = vmatprep.subr.mxu0 0.0
    %2538 = vmatpush1.msra.mxu0 0.0
    %2539 = vmatprep.subr.mxu0 0.0
    %2540 = vmatpush1.msra.mxu0 0.0
    %2541 = vmatprep.subr.mxu0 0.0
    %2542 = vmatpush1.msra.mxu0 0.0
    %2543 = vmatprep.mubr.f32.mxu0 0.0
    %2544 = vmatmul.mubr.f32.gmra.mrb[0].mxu0 %v2240
    %v2545 = vpop.f32.mrb[0].mxu0
    %v2546 = vadd.f32 0.0, %v2545
    %v2547 = vpop.f32.mrb[0].mxu0
    %v2548 = vadd.f32 0.0, %v2547
    %2549 = vdwg.mxu0
    %v2554 = vrot.slane %v2475, 6
    %v2555 = vrot.slane %v2477, 6
    %v2556 = vrot.slane %v2546, 6
    %v2557 = vrot.slane %v2548, 6
    %v2562 = vadd.f32 %v360, %v2554
    %v2563 = vadd.f32 %v362, %v2555
    %v2564 = vadd.f32 %v437, %v2556
    %v2565 = vadd.f32 %v439, %v2557
    %v2566 = vxor.u32 %v2562, 2147483648
    %v2567 = vmul.f32 %v2566, 1.442695
    %v2568 = vpow.pop %v2567
    %v2569 = vadd.f32 %v2568, 1.0
    %v2570 = vrcp.pop %v2569
    %v2571 = vmul.f32 1.0, %v2570
    %v2572 = vxor.u32 %v2563, 2147483648
    %v2573 = vmul.f32 %v2572, 1.442695
    %v2574 = vpow.pop %v2573
    %v2575 = vadd.f32 %v2574, 1.0
    %v2576 = vrcp.pop %v2575
    %v2577 = vmul.f32 1.0, %v2576
    %v2578 = vtanh.pop %v2564
    %v2579 = vxor.u32 %v2565, 2147483648
    %v2580 = vmul.f32 %v2579, 1.442695
    %v2581 = vpow.pop %v2580
    %v2582 = vadd.f32 %v2581, 1.0
    %v2583 = vrcp.pop %v2582
    %v2584 = vmul.f32 1.0, %v2583
    %v2586 = vrot.slane %v2238, 6
    %v2588 = vmul.f32 %v2577, %v2586
    %v2589 = vmul.f32 %v2571, %v2578
    %v2590 = vadd.f32 %v2588, %v2589
    %v2591 = vtanh.pop %v2590
    %v2592 = vmul.f32 %v2584, %v2591
    %v2594 = vrot.slane %v2406, 6
    %v2596 = vrot.slane %v2592, 2
    %v2597 = vrot.slane %v2594, 2
    %2600 = vmatprep.subr.mxu0 %v506
    %2601 = vmatpush1.msra.mxu0 %v505
    %2602 = vmatprep.subr.mxu0 %v510
    %2603 = vmatpush1.msra.mxu0 %v509
    %2604 = vmatprep.subr.mxu0 %v514
    %2605 = vmatpush1.msra.mxu0 %v513
    %2606 = vmatprep.subr.mxu0 %v518
    %2607 = vmatpush1.msra.mxu0 %v517
    %2608 = vmatprep.subr.mxu0 %v522
    %2609 = vmatpush1.msra.mxu0 %v521
    %2610 = vmatprep.subr.mxu0 %v526
    %2611 = vmatpush1.msra.mxu0 %v525
    %2612 = vmatprep.subr.mxu0 %v530
    %2613 = vmatpush1.msra.mxu0 %v529
    %2614 = vmatprep.subr.mxu0 %v534
    %2615 = vmatpush1.msra.mxu0 %v533
    %2616 = vmatprep.subr.mxu0 %v538
    %2617 = vmatpush1.msra.mxu0 %v537
    %2618 = vmatprep.subr.mxu0 %v542
    %2619 = vmatpush1.msra.mxu0 %v541
    %2620 = vmatprep.subr.mxu0 %v546
    %2621 = vmatpush1.msra.mxu0 %v545
    %2622 = vmatprep.subr.mxu0 %v550
    %2623 = vmatpush1.msra.mxu0 %v549
    %2624 = vmatprep.subr.mxu0 %v554
    %2625 = vmatpush1.msra.mxu0 %v553
    %2626 = vmatprep.subr.mxu0 %v558
    %2627 = vmatpush1.msra.mxu0 %v557
    %2628 = vmatprep.subr.mxu0 %v562
    %2629 = vmatpush1.msra.mxu0 %v561
    %2630 = vmatprep.subr.mxu0 %v566
    %2631 = vmatpush1.msra.mxu0 %v565
    %2632 = vmatprep.subr.mxu0 %v570
    %2633 = vmatpush1.msra.mxu0 %v569
    %2634 = vmatprep.subr.mxu0 %v574
    %2635 = vmatpush1.msra.mxu0 %v573
    %2636 = vmatprep.subr.mxu0 %v578
    %2637 = vmatpush1.msra.mxu0 %v577
    %2638 = vmatprep.subr.mxu0 %v582
    %2639 = vmatpush1.msra.mxu0 %v581
    %2640 = vmatprep.subr.mxu0 %v586
    %2641 = vmatpush1.msra.mxu0 %v585
    %2642 = vmatprep.subr.mxu0 %v590
    %2643 = vmatpush1.msra.mxu0 %v589
    %2644 = vmatprep.subr.mxu0 %v594
    %2645 = vmatpush1.msra.mxu0 %v593
    %2646 = vmatprep.subr.mxu0 %v598
    %2647 = vmatpush1.msra.mxu0 %v597
    %2648 = vmatprep.subr.mxu0 %v602
    %2649 = vmatpush1.msra.mxu0 %v601
    %2650 = vmatprep.subr.mxu0 %v606
    %2651 = vmatpush1.msra.mxu0 %v605
    %2652 = vmatprep.subr.mxu0 %v610
    %2653 = vmatpush1.msra.mxu0 %v609
    %2654 = vmatprep.subr.mxu0 %v614
    %2655 = vmatpush1.msra.mxu0 %v613
    %2656 = vmatprep.subr.mxu0 %v618
    %2657 = vmatpush1.msra.mxu0 %v617
    %2658 = vmatprep.subr.mxu0 %v622
    %2659 = vmatpush1.msra.mxu0 %v621
    %2660 = vmatprep.subr.mxu0 %v626
    %2661 = vmatpush1.msra.mxu0 %v625
    %2662 = vmatprep.subr.mxu0 %v630
    %2663 = vmatpush1.msra.mxu0 %v629
    %2664 = vmatprep.mubr.f32.mxu0 %v2597
    %2665 = vmatmul.mubr.f32.gmra.mrb[0].mxu0 %v2596
    %v2666 = vpop.f32.mrb[0].mxu0
    %v2667 = vadd.f32 %v638, %v2666
    %v2668 = vpop.f32.mrb[0].mxu0
    %v2669 = vadd.f32 %v642, %v2668
    %2670 = vdwg.mxu0
    %2671 = vmatprep.subr.mxu0 %v508
    %2672 = vmatpush1.msra.mxu0 %v507
    %2673 = vmatprep.subr.mxu0 %v512
    %2674 = vmatpush1.msra.mxu0 %v511
    %2675 = vmatprep.subr.mxu0 %v516
    %2676 = vmatpush1.msra.mxu0 %v515
    %2677 = vmatprep.subr.mxu0 %v520
    %2678 = vmatpush1.msra.mxu0 %v519
    %2679 = vmatprep.subr.mxu0 %v524
    %2680 = vmatpush1.msra.mxu0 %v523
    %2681 = vmatprep.subr.mxu0 %v528
    %2682 = vmatpush1.msra.mxu0 %v527
    %2683 = vmatprep.subr.mxu0 %v532
    %2684 = vmatpush1.msra.mxu0 %v531
    %2685 = vmatprep.subr.mxu0 %v536
    %2686 = vmatpush1.msra.mxu0 %v535
    %2687 = vmatprep.subr.mxu0 %v540
    %2688 = vmatpush1.msra.mxu0 %v539
    %2689 = vmatprep.subr.mxu0 %v544
    %2690 = vmatpush1.msra.mxu0 %v543
    %2691 = vmatprep.subr.mxu0 %v548
    %2692 = vmatpush1.msra.mxu0 %v547
    %2693 = vmatprep.subr.mxu0 %v552
    %2694 = vmatpush1.msra.mxu0 %v551
    %2695 = vmatprep.subr.mxu0 %v556
    %2696 = vmatpush1.msra.mxu0 %v555
    %2697 = vmatprep.subr.mxu0 %v560
    %2698 = vmatpush1.msra.mxu0 %v559
    %2699 = vmatprep.subr.mxu0 %v564
    %2700 = vmatpush1.msra.mxu0 %v563
    %2701 = vmatprep.subr.mxu0 %v568
    %2702 = vmatpush1.msra.mxu0 %v567
    %2703 = vmatprep.subr.mxu0 %v572
    %2704 = vmatpush1.msra.mxu0 %v571
    %2705 = vmatprep.subr.mxu0 %v576
    %2706 = vmatpush1.msra.mxu0 %v575
    %2707 = vmatprep.subr.mxu0 %v580
    %2708 = vmatpush1.msra.mxu0 %v579
    %2709 = vmatprep.subr.mxu0 %v584
    %2710 = vmatpush1.msra.mxu0 %v583
    %2711 = vmatprep.subr.mxu0 %v588
    %2712 = vmatpush1.msra.mxu0 %v587
    %2713 = vmatprep.subr.mxu0 %v592
    %2714 = vmatpush1.msra.mxu0 %v591
    %2715 = vmatprep.subr.mxu0 %v596
    %2716 = vmatpush1.msra.mxu0 %v595
    %2717 = vmatprep.subr.mxu0 %v600
    %2718 = vmatpush1.msra.mxu0 %v599
    %2719 = vmatprep.subr.mxu0 %v604
    %2720 = vmatpush1.msra.mxu0 %v603
    %2721 = vmatprep.subr.mxu0 %v608
    %2722 = vmatpush1.msra.mxu0 %v607
    %2723 = vmatprep.subr.mxu0 %v612
    %2724 = vmatpush1.msra.mxu0 %v611
    %2725 = vmatprep.subr.mxu0 %v616
    %2726 = vmatpush1.msra.mxu0 %v615
    %2727 = vmatprep.subr.mxu0 %v620
    %2728 = vmatpush1.msra.mxu0 %v619
    %2729 = vmatprep.subr.mxu0 %v624
    %2730 = vmatpush1.msra.mxu0 %v623
    %2731 = vmatprep.subr.mxu0 %v628
    %2732 = vmatpush1.msra.mxu0 %v627
    %2733 = vmatprep.subr.mxu0 %v632
    %2734 = vmatpush1.msra.mxu0 %v631
    %2735 = vmatprep.mubr.f32.mxu0 %v2597
    %2736 = vmatmul.mubr.f32.gmra.mrb[0].mxu0 %v2596
    %v2737 = vpop.f32.mrb[0].mxu0
    %v2738 = vadd.f32 %v646, %v2737
    %v2739 = vpop.f32.mrb[0].mxu0
    %v2740 = vadd.f32 %v650, %v2739
    %2741 = vdwg.mxu0
    %v2742 = vxor.u32 %v2667, 2147483648
    %v2743 = vmul.f32 %v2742, 1.442695
    %v2744 = vpow.pop %v2743
    %v2745 = vadd.f32 %v2744, 1.0
    %v2746 = vrcp.pop %v2745
    %v2747 = vmul.f32 1.0, %v2746
    %v2748 = vxor.u32 %v2669, 2147483648
    %v2749 = vmul.f32 %v2748, 1.442695
    %v2750 = vpow.pop %v2749
    %v2751 = vadd.f32 %v2750, 1.0
    %v2752 = vrcp.pop %v2751
    %v2753 = vmul.f32 1.0, %v2752
    %v2754 = vtanh.pop %v2738
    %v2755 = vxor.u32 %v2740, 2147483648
    %v2756 = vmul.f32 %v2755, 1.442695
    %v2757 = vpow.pop %v2756
    %v2758 = vadd.f32 %v2757, 1.0
    %v2759 = vrcp.pop %v2758
    %v2760 = vmul.f32 1.0, %v2759
    %v2761 = vmul.f32 %v2753, %v2404
    %v2762 = vmul.f32 %v2747, %v2754
    %v2763 = vadd.f32 %v2761, %v2762
    %v2764 = vtanh.pop %v2763
    %v2765 = vmul.f32 %v2760, %v2764
    %v2766 = vmax.f32 %v2407, %v2765
    %2767 = vmatprep.subr.mxu0 %v442
    %2768 = vmatpush1.msra.mxu0 %v441
    %2769 = vmatprep.subr.mxu0 %v446
    %2770 = vmatpush1.msra.mxu0 %v445
    %2771 = vmatprep.subr.mxu0 %v450
    %2772 = vmatpush1.msra.mxu0 %v449
    %2773 = vmatprep.subr.mxu0 %v454
    %2774 = vmatpush1.msra.mxu0 %v453
    %2775 = vmatprep.subr.mxu0 %v458
    %2776 = vmatpush1.msra.mxu0 %v457
    %2777 = vmatprep.subr.mxu0 %v462
    %2778 = vmatpush1.msra.mxu0 %v461
    %2779 = vmatprep.subr.mxu0 %v466
    %2780 = vmatpush1.msra.mxu0 %v465
    %2781 = vmatprep.subr.mxu0 %v470
    %2782 = vmatpush1.msra.mxu0 %v469
    %2783 = vmatprep.subr.mxu0 %v474
    %2784 = vmatpush1.msra.mxu0 %v473
    %2785 = vmatprep.subr.mxu0 %v478
    %2786 = vmatpush1.msra.mxu0 %v477
    %2787 = vmatprep.subr.mxu0 %v482
    %2788 = vmatpush1.msra.mxu0 %v481
    %2789 = vmatprep.subr.mxu0 %v486
    %2790 = vmatpush1.msra.mxu0 %v485
    %2791 = vmatprep.subr.mxu0 %v490
    %2792 = vmatpush1.msra.mxu0 %v489
    %2793 = vmatprep.subr.mxu0 %v494
    %2794 = vmatpush1.msra.mxu0 %v493
    %2795 = vmatprep.subr.mxu0 %v498
    %2796 = vmatpush1.msra.mxu0 %v497
    %2797 = vmatprep.subr.mxu0 %v502
    %2798 = vmatpush1.msra.mxu0 %v501
    %2799 = vmatprep.subr.mxu0 0.0
    %2800 = vmatpush1.msra.mxu0 0.0
    %2801 = vmatprep.subr.mxu0 0.0
    %2802 = vmatpush1.msra.mxu0 0.0
    %2803 = vmatprep.subr.mxu0 0.0
    %2804 = vmatpush1.msra.mxu0 0.0
    %2805 = vmatprep.subr.mxu0 0.0
    %2806 = vmatpush1.msra.mxu0 0.0
    %2807 = vmatprep.subr.mxu0 0.0
    %2808 = vmatpush1.msra.mxu0 0.0
    %2809 = vmatprep.subr.mxu0 0.0
    %2810 = vmatpush1.msra.mxu0 0.0
    %2811 = vmatprep.subr.mxu0 0.0
    %2812 = vmatpush1.msra.mxu0 0.0
    %2813 = vmatprep.subr.mxu0 0.0
    %2814 = vmatpush1.msra.mxu0 0.0
    %2815 = vmatprep.subr.mxu0 0.0
    %2816 = vmatpush1.msra.mxu0 0.0
    %2817 = vmatprep.subr.mxu0 0.0
    %2818 = vmatpush1.msra.mxu0 0.0
    %2819 = vmatprep.subr.mxu0 0.0
    %2820 = vmatpush1.msra.mxu0 0.0
    %2821 = vmatprep.subr.mxu0 0.0
    %2822 = vmatpush1.msra.mxu0 0.0
    %2823 = vmatprep.subr.mxu0 0.0
    %2824 = vmatpush1.msra.mxu0 0.0
    %2825 = vmatprep.subr.mxu0 0.0
    %2826 = vmatpush1.msra.mxu0 0.0
    %2827 = vmatprep.subr.mxu0 0.0
    %2828 = vmatpush1.msra.mxu0 0.0
    %2829 = vmatprep.subr.mxu0 0.0
    %2830 = vmatpush1.msra.mxu0 0.0
    %2831 = vmatprep.mubr.f32.mxu0 0.0
    %2832 = vmatmul.mubr.f32.gmra.mrb[0].mxu0 %v2596
    %v2833 = vpop.f32.mrb[0].mxu0
    %v2834 = vadd.f32 0.0, %v2833
    %v2835 = vpop.f32.mrb[0].mxu0
    %v2836 = vadd.f32 0.0, %v2835
    %2837 = vdwg.mxu0
    %2838 = vmatprep.subr.mxu0 %v444
    %2839 = vmatpush1.msra.mxu0 %v443
    %2840 = vmatprep.subr.mxu0 %v448
    %2841 = vmatpush1.msra.mxu0 %v447
    %2842 = vmatprep.subr.mxu0 %v452
    %2843 = vmatpush1.msra.mxu0 %v451
    %2844 = vmatprep.subr.mxu0 %v456
    %2845 = vmatpush1.msra.mxu0 %v455
    %2846 = vmatprep.subr.mxu0 %v460
    %2847 = vmatpush1.msra.mxu0 %v459
    %2848 = vmatprep.subr.mxu0 %v464
    %2849 = vmatpush1.msra.mxu0 %v463
    %2850 = vmatprep.subr.mxu0 %v468
    %2851 = vmatpush1.msra.mxu0 %v467
    %2852 = vmatprep.subr.mxu0 %v472
    %2853 = vmatpush1.msra.mxu0 %v471
    %2854 = vmatprep.subr.mxu0 %v476
    %2855 = vmatpush1.msra.mxu0 %v475
    %2856 = vmatprep.subr.mxu0 %v480
    %2857 = vmatpush1.msra.mxu0 %v479
    %2858 = vmatprep.subr.mxu0 %v484
    %2859 = vmatpush1.msra.mxu0 %v483
    %2860 = vmatprep.subr.mxu0 %v488
    %2861 = vmatpush1.msra.mxu0 %v487
    %2862 = vmatprep.subr.mxu0 %v492
    %2863 = vmatpush1.msra.mxu0 %v491
    %2864 = vmatprep.subr.mxu0 %v496
    %2865 = vmatpush1.msra.mxu0 %v495
    %2866 = vmatprep.subr.mxu0 %v500
    %2867 = vmatpush1.msra.mxu0 %v499
    %2868 = vmatprep.subr.mxu0 %v504
    %2869 = vmatpush1.msra.mxu0 %v503
    %2870 = vmatprep.subr.mxu0 0.0
    %2871 = vmatpush1.msra.mxu0 0.0
    %2872 = vmatprep.subr.mxu0 0.0
    %2873 = vmatpush1.msra.mxu0 0.0
    %2874 = vmatprep.subr.mxu0 0.0
    %2875 = vmatpush1.msra.mxu0 0.0
    %2876 = vmatprep.subr.mxu0 0.0
    %2877 = vmatpush1.msra.mxu0 0.0
    %2878 = vmatprep.subr.mxu0 0.0
    %2879 = vmatpush1.msra.mxu0 0.0
    %2880 = vmatprep.subr.mxu0 0.0
    %2881 = vmatpush1.msra.mxu0 0.0
    %2882 = vmatprep.subr.mxu0 0.0
    %2883 = vmatpush1.msra.mxu0 0.0
    %2884 = vmatprep.subr.mxu0 0.0
    %2885 = vmatpush1.msra.mxu0 0.0
    %2886 = vmatprep.subr.mxu0 0.0
    %2887 = vmatpush1.msra.mxu0 0.0
    %2888 = vmatprep.subr.mxu0 0.0
    %2889 = vmatpush1.msra.mxu0 0.0
    %2890 = vmatprep.subr.mxu0 0.0
    %2891 = vmatpush1.msra.mxu0 0.0
    %2892 = vmatprep.subr.mxu0 0.0
    %2893 = vmatpush1.msra.mxu0 0.0
    %2894 = vmatprep.subr.mxu0 0.0
    %2895 = vmatpush1.msra.mxu0 0.0
    %2896 = vmatprep.subr.mxu0 0.0
    %2897 = vmatpush1.msra.mxu0 0.0
    %2898 = vmatprep.subr.mxu0 0.0
    %2899 = vmatpush1.msra.mxu0 0.0
    %2900 = vmatprep.subr.mxu0 0.0
    %2901 = vmatpush1.msra.mxu0 0.0
    %2902 = vmatprep.mubr.f32.mxu0 0.0
    %2903 = vmatmul.mubr.f32.gmra.mrb[0].mxu0 %v2596
    %v2904 = vpop.f32.mrb[0].mxu0
    %v2905 = vadd.f32 0.0, %v2904
    %v2906 = vpop.f32.mrb[0].mxu0
    %v2907 = vadd.f32 0.0, %v2906
    %2908 = vdwg.mxu0
    %v2913 = vrot.slane %v2834, 4
    %v2914 = vrot.slane %v2836, 4
    %v2915 = vrot.slane %v2905, 4
    %v2916 = vrot.slane %v2907, 4
    %v2921 = vadd.f32 %v360, %v2913
    %v2922 = vadd.f32 %v362, %v2914
    %v2923 = vadd.f32 %v437, %v2915
    %v2924 = vadd.f32 %v439, %v2916
    %v2925 = vxor.u32 %v2921, 2147483648
    %v2926 = vmul.f32 %v2925, 1.442695
    %v2927 = vpow.pop %v2926
    %v2928 = vadd.f32 %v2927, 1.0
    %v2929 = vrcp.pop %v2928
    %v2930 = vmul.f32 1.0, %v2929
    %v2931 = vxor.u32 %v2922, 2147483648
    %v2932 = vmul.f32 %v2931, 1.442695
    %v2933 = vpow.pop %v2932
    %v2934 = vadd.f32 %v2933, 1.0
    %v2935 = vrcp.pop %v2934
    %v2936 = vmul.f32 1.0, %v2935
    %v2937 = vtanh.pop %v2923
    %v2938 = vxor.u32 %v2924, 2147483648
    %v2939 = vmul.f32 %v2938, 1.442695
    %v2940 = vpow.pop %v2939
    %v2941 = vadd.f32 %v2940, 1.0
    %v2942 = vrcp.pop %v2941
    %v2943 = vmul.f32 1.0, %v2942
    %v2945 = vrot.slane %v2590, 6
    %v2947 = vmul.f32 %v2936, %v2945
    %v2948 = vmul.f32 %v2930, %v2937
    %v2949 = vadd.f32 %v2947, %v2948
    %v2950 = vtanh.pop %v2949
    %v2951 = vmul.f32 %v2943, %v2950
    %v2953 = vrot.slane %v2765, 4
    %v2955 = vrot.slane %v2951, 4
    %v2956 = vrot.slane %v2953, 4
    %2959 = vmatprep.subr.mxu0 %v506
    %2960 = vmatpush1.msra.mxu0 %v505
    %2961 = vmatprep.subr.mxu0 %v510
    %2962 = vmatpush1.msra.mxu0 %v509
    %2963 = vmatprep.subr.mxu0 %v514
    %2964 = vmatpush1.msra.mxu0 %v513
    %2965 = vmatprep.subr.mxu0 %v518
    %2966 = vmatpush1.msra.mxu0 %v517
    %2967 = vmatprep.subr.mxu0 %v522
    %2968 = vmatpush1.msra.mxu0 %v521
    %2969 = vmatprep.subr.mxu0 %v526
    %2970 = vmatpush1.msra.mxu0 %v525
    %2971 = vmatprep.subr.mxu0 %v530
    %2972 = vmatpush1.msra.mxu0 %v529
    %2973 = vmatprep.subr.mxu0 %v534
    %2974 = vmatpush1.msra.mxu0 %v533
    %2975 = vmatprep.subr.mxu0 %v538
    %2976 = vmatpush1.msra.mxu0 %v537
    %2977 = vmatprep.subr.mxu0 %v542
    %2978 = vmatpush1.msra.mxu0 %v541
    %2979 = vmatprep.subr.mxu0 %v546
    %2980 = vmatpush1.msra.mxu0 %v545
    %2981 = vmatprep.subr.mxu0 %v550
    %2982 = vmatpush1.msra.mxu0 %v549
    %2983 = vmatprep.subr.mxu0 %v554
    %2984 = vmatpush1.msra.mxu0 %v553
    %2985 = vmatprep.subr.mxu0 %v558
    %2986 = vmatpush1.msra.mxu0 %v557
    %2987 = vmatprep.subr.mxu0 %v562
    %2988 = vmatpush1.msra.mxu0 %v561
    %2989 = vmatprep.subr.mxu0 %v566
    %2990 = vmatpush1.msra.mxu0 %v565
    %2991 = vmatprep.subr.mxu0 %v570
    %2992 = vmatpush1.msra.mxu0 %v569
    %2993 = vmatprep.subr.mxu0 %v574
    %2994 = vmatpush1.msra.mxu0 %v573
    %2995 = vmatprep.subr.mxu0 %v578
    %2996 = vmatpush1.msra.mxu0 %v577
    %2997 = vmatprep.subr.mxu0 %v582
    %2998 = vmatpush1.msra.mxu0 %v581
    %2999 = vmatprep.subr.mxu0 %v586
    %3000 = vmatpush1.msra.mxu0 %v585
    %3001 = vmatprep.subr.mxu0 %v590
    %3002 = vmatpush1.msra.mxu0 %v589
    %3003 = vmatprep.subr.mxu0 %v594
    %3004 = vmatpush1.msra.mxu0 %v593
    %3005 = vmatprep.subr.mxu0 %v598
    %3006 = vmatpush1.msra.mxu0 %v597
    %3007 = vmatprep.subr.mxu0 %v602
    %3008 = vmatpush1.msra.mxu0 %v601
    %3009 = vmatprep.subr.mxu0 %v606
    %3010 = vmatpush1.msra.mxu0 %v605
    %3011 = vmatprep.subr.mxu0 %v610
    %3012 = vmatpush1.msra.mxu0 %v609
    %3013 = vmatprep.subr.mxu0 %v614
    %3014 = vmatpush1.msra.mxu0 %v613
    %3015 = vmatprep.subr.mxu0 %v618
    %3016 = vmatpush1.msra.mxu0 %v617
    %3017 = vmatprep.subr.mxu0 %v622
    %3018 = vmatpush1.msra.mxu0 %v621
    %3019 = vmatprep.subr.mxu0 %v626
    %3020 = vmatpush1.msra.mxu0 %v625
    %3021 = vmatprep.subr.mxu0 %v630
    %3022 = vmatpush1.msra.mxu0 %v629
    %3023 = vmatprep.mubr.f32.mxu0 %v2956
    %3024 = vmatmul.mubr.f32.gmra.mrb[0].mxu0 %v2955
    %v3025 = vpop.f32.mrb[0].mxu0
    %v3026 = vadd.f32 %v638, %v3025
    %v3027 = vpop.f32.mrb[0].mxu0
    %v3028 = vadd.f32 %v642, %v3027
    %3029 = vdwg.mxu0
    %3030 = vmatprep.subr.mxu0 %v508
    %3031 = vmatpush1.msra.mxu0 %v507
    %3032 = vmatprep.subr.mxu0 %v512
    %3033 = vmatpush1.msra.mxu0 %v511
    %3034 = vmatprep.subr.mxu0 %v516
    %3035 = vmatpush1.msra.mxu0 %v515
    %3036 = vmatprep.subr.mxu0 %v520
    %3037 = vmatpush1.msra.mxu0 %v519
    %3038 = vmatprep.subr.mxu0 %v524
    %3039 = vmatpush1.msra.mxu0 %v523
    %3040 = vmatprep.subr.mxu0 %v528
    %3041 = vmatpush1.msra.mxu0 %v527
    %3042 = vmatprep.subr.mxu0 %v532
    %3043 = vmatpush1.msra.mxu0 %v531
    %3044 = vmatprep.subr.mxu0 %v536
    %3045 = vmatpush1.msra.mxu0 %v535
    %3046 = vmatprep.subr.mxu0 %v540
    %3047 = vmatpush1.msra.mxu0 %v539
    %3048 = vmatprep.subr.mxu0 %v544
    %3049 = vmatpush1.msra.mxu0 %v543
    %3050 = vmatprep.subr.mxu0 %v548
    %3051 = vmatpush1.msra.mxu0 %v547
    %3052 = vmatprep.subr.mxu0 %v552
    %3053 = vmatpush1.msra.mxu0 %v551
    %3054 = vmatprep.subr.mxu0 %v556
    %3055 = vmatpush1.msra.mxu0 %v555
    %3056 = vmatprep.subr.mxu0 %v560
    %3057 = vmatpush1.msra.mxu0 %v559
    %3058 = vmatprep.subr.mxu0 %v564
    %3059 = vmatpush1.msra.mxu0 %v563
    %3060 = vmatprep.subr.mxu0 %v568
    %3061 = vmatpush1.msra.mxu0 %v567
    %3062 = vmatprep.subr.mxu0 %v572
    %3063 = vmatpush1.msra.mxu0 %v571
    %3064 = vmatprep.subr.mxu0 %v576
    %3065 = vmatpush1.msra.mxu0 %v575
    %3066 = vmatprep.subr.mxu0 %v580
    %3067 = vmatpush1.msra.mxu0 %v579
    %3068 = vmatprep.subr.mxu0 %v584
    %3069 = vmatpush1.msra.mxu0 %v583
    %3070 = vmatprep.subr.mxu0 %v588
    %3071 = vmatpush1.msra.mxu0 %v587
    %3072 = vmatprep.subr.mxu0 %v592
    %3073 = vmatpush1.msra.mxu0 %v591
    %3074 = vmatprep.subr.mxu0 %v596
    %3075 = vmatpush1.msra.mxu0 %v595
    %3076 = vmatprep.subr.mxu0 %v600
    %3077 = vmatpush1.msra.mxu0 %v599
    %3078 = vmatprep.subr.mxu0 %v604
    %3079 = vmatpush1.msra.mxu0 %v603
    %3080 = vmatprep.subr.mxu0 %v608
    %3081 = vmatpush1.msra.mxu0 %v607
    %3082 = vmatprep.subr.mxu0 %v612
    %3083 = vmatpush1.msra.mxu0 %v611
    %3084 = vmatprep.subr.mxu0 %v616
    %3085 = vmatpush1.msra.mxu0 %v615
    %3086 = vmatprep.subr.mxu0 %v620
    %3087 = vmatpush1.msra.mxu0 %v619
    %3088 = vmatprep.subr.mxu0 %v624
    %3089 = vmatpush1.msra.mxu0 %v623
    %3090 = vmatprep.subr.mxu0 %v628
    %3091 = vmatpush1.msra.mxu0 %v627
    %3092 = vmatprep.subr.mxu0 %v632
    %3093 = vmatpush1.msra.mxu0 %v631
    %3094 = vmatprep.mubr.f32.mxu0 %v2956
    %3095 = vmatmul.mubr.f32.gmra.mrb[0].mxu0 %v2955
    %v3096 = vpop.f32.mrb[0].mxu0
    %v3097 = vadd.f32 %v646, %v3096
    %v3098 = vpop.f32.mrb[0].mxu0
    %v3099 = vadd.f32 %v650, %v3098
    %3100 = vdwg.mxu0
    %v3101 = vxor.u32 %v3026, 2147483648
    %v3102 = vmul.f32 %v3101, 1.442695
    %v3103 = vpow.pop %v3102
    %v3104 = vadd.f32 %v3103, 1.0
    %v3105 = vrcp.pop %v3104
    %v3106 = vmul.f32 1.0, %v3105
    %v3107 = vxor.u32 %v3028, 2147483648
    %v3108 = vmul.f32 %v3107, 1.442695
    %v3109 = vpow.pop %v3108
    %v3110 = vadd.f32 %v3109, 1.0
    %v3111 = vrcp.pop %v3110
    %v3112 = vmul.f32 1.0, %v3111
    %v3113 = vtanh.pop %v3097
    %v3114 = vxor.u32 %v3099, 2147483648
    %v3115 = vmul.f32 %v3114, 1.442695
    %v3116 = vpow.pop %v3115
    %v3117 = vadd.f32 %v3116, 1.0
    %v3118 = vrcp.pop %v3117
    %v3119 = vmul.f32 1.0, %v3118
    %v3120 = vmul.f32 %v3112, %v2763
    %v3121 = vmul.f32 %v3106, %v3113
    %v3122 = vadd.f32 %v3120, %v3121
    %v3123 = vtanh.pop %v3122
    %v3124 = vmul.f32 %v3119, %v3123
    %v3125 = vmax.f32 %v2766, %v3124
    %3126 = vmatprep.subr.mxu0 %v442
    %3127 = vmatpush1.msra.mxu0 %v441
    %3128 = vmatprep.subr.mxu0 %v446
    %3129 = vmatpush1.msra.mxu0 %v445
    %3130 = vmatprep.subr.mxu0 %v450
    %3131 = vmatpush1.msra.mxu0 %v449
    %3132 = vmatprep.subr.mxu0 %v454
    %3133 = vmatpush1.msra.mxu0 %v453
    %3134 = vmatprep.subr.mxu0 %v458
    %3135 = vmatpush1.msra.mxu0 %v457
    %3136 = vmatprep.subr.mxu0 %v462
    %3137 = vmatpush1.msra.mxu0 %v461
    %3138 = vmatprep.subr.mxu0 %v466
    %3139 = vmatpush1.msra.mxu0 %v465
    %3140 = vmatprep.subr.mxu0 %v470
    %3141 = vmatpush1.msra.mxu0 %v469
    %3142 = vmatprep.subr.mxu0 %v474
    %3143 = vmatpush1.msra.mxu0 %v473
    %3144 = vmatprep.subr.mxu0 %v478
    %3145 = vmatpush1.msra.mxu0 %v477
    %3146 = vmatprep.subr.mxu0 %v482
    %3147 = vmatpush1.msra.mxu0 %v481
    %3148 = vmatprep.subr.mxu0 %v486
    %3149 = vmatpush1.msra.mxu0 %v485
    %3150 = vmatprep.subr.mxu0 %v490
    %3151 = vmatpush1.msra.mxu0 %v489
    %3152 = vmatprep.subr.mxu0 %v494
    %3153 = vmatpush1.msra.mxu0 %v493
    %3154 = vmatprep.subr.mxu0 %v498
    %3155 = vmatpush1.msra.mxu0 %v497
    %3156 = vmatprep.subr.mxu0 %v502
    %3157 = vmatpush1.msra.mxu0 %v501
    %3158 = vmatprep.subr.mxu0 0.0
    %3159 = vmatpush1.msra.mxu0 0.0
    %3160 = vmatprep.subr.mxu0 0.0
    %3161 = vmatpush1.msra.mxu0 0.0
    %3162 = vmatprep.subr.mxu0 0.0
    %3163 = vmatpush1.msra.mxu0 0.0
    %3164 = vmatprep.subr.mxu0 0.0
    %3165 = vmatpush1.msra.mxu0 0.0
    %3166 = vmatprep.subr.mxu0 0.0
    %3167 = vmatpush1.msra.mxu0 0.0
    %3168 = vmatprep.subr.mxu0 0.0
    %3169 = vmatpush1.msra.mxu0 0.0
    %3170 = vmatprep.subr.mxu0 0.0
    %3171 = vmatpush1.msra.mxu0 0.0
    %3172 = vmatprep.subr.mxu0 0.0
    %3173 = vmatpush1.msra.mxu0 0.0
    %3174 = vmatprep.subr.mxu0 0.0
    %3175 = vmatpush1.msra.mxu0 0.0
    %3176 = vmatprep.subr.mxu0 0.0
    %3177 = vmatpush1.msra.mxu0 0.0
    %3178 = vmatprep.subr.mxu0 0.0
    %3179 = vmatpush1.msra.mxu0 0.0
    %3180 = vmatprep.subr.mxu0 0.0
    %3181 = vmatpush1.msra.mxu0 0.0
    %3182 = vmatprep.subr.mxu0 0.0
    %3183 = vmatpush1.msra.mxu0 0.0
    %3184 = vmatprep.subr.mxu0 0.0
    %3185 = vmatpush1.msra.mxu0 0.0
    %3186 = vmatprep.subr.mxu0 0.0
    %3187 = vmatpush1.msra.mxu0 0.0
    %3188 = vmatprep.subr.mxu0 0.0
    %3189 = vmatpush1.msra.mxu0 0.0
    %3190 = vmatprep.mubr.f32.mxu0 0.0
    %3191 = vmatmul.mubr.f32.gmra.mrb[0].mxu0 %v2955
    %v3192 = vpop.f32.mrb[0].mxu0
    %v3193 = vadd.f32 0.0, %v3192
    %v3194 = vpop.f32.mrb[0].mxu0
    %v3195 = vadd.f32 0.0, %v3194
    %3196 = vdwg.mxu0
    %3197 = vmatprep.subr.mxu0 %v444
    %3198 = vmatpush1.msra.mxu0 %v443
    %3199 = vmatprep.subr.mxu0 %v448
    %3200 = vmatpush1.msra.mxu0 %v447
    %3201 = vmatprep.subr.mxu0 %v452
    %3202 = vmatpush1.msra.mxu0 %v451
    %3203 = vmatprep.subr.mxu0 %v456
    %3204 = vmatpush1.msra.mxu0 %v455
    %3205 = vmatprep.subr.mxu0 %v460
    %3206 = vmatpush1.msra.mxu0 %v459
    %3207 = vmatprep.subr.mxu0 %v464
    %3208 = vmatpush1.msra.mxu0 %v463
    %3209 = vmatprep.subr.mxu0 %v468
    %3210 = vmatpush1.msra.mxu0 %v467
    %3211 = vmatprep.subr.mxu0 %v472
    %3212 = vmatpush1.msra.mxu0 %v471
    %3213 = vmatprep.subr.mxu0 %v476
    %3214 = vmatpush1.msra.mxu0 %v475
    %3215 = vmatprep.subr.mxu0 %v480
    %3216 = vmatpush1.msra.mxu0 %v479
    %3217 = vmatprep.subr.mxu0 %v484
    %3218 = vmatpush1.msra.mxu0 %v483
    %3219 = vmatprep.subr.mxu0 %v488
    %3220 = vmatpush1.msra.mxu0 %v487
    %3221 = vmatprep.subr.mxu0 %v492
    %3222 = vmatpush1.msra.mxu0 %v491
    %3223 = vmatprep.subr.mxu0 %v496
    %3224 = vmatpush1.msra.mxu0 %v495
    %3225 = vmatprep.subr.mxu0 %v500
    %3226 = vmatpush1.msra.mxu0 %v499
    %3227 = vmatprep.subr.mxu0 %v504
    %3228 = vmatpush1.msra.mxu0 %v503
    %3229 = vmatprep.subr.mxu0 0.0
    %3230 = vmatpush1.msra.mxu0 0.0
    %3231 = vmatprep.subr.mxu0 0.0
    %3232 = vmatpush1.msra.mxu0 0.0
    %3233 = vmatprep.subr.mxu0 0.0
    %3234 = vmatpush1.msra.mxu0 0.0
    %3235 = vmatprep.subr.mxu0 0.0
    %3236 = vmatpush1.msra.mxu0 0.0
    %3237 = vmatprep.subr.mxu0 0.0
    %3238 = vmatpush1.msra.mxu0 0.0
    %3239 = vmatprep.subr.mxu0 0.0
    %3240 = vmatpush1.msra.mxu0 0.0
    %3241 = vmatprep.subr.mxu0 0.0
    %3242 = vmatpush1.msra.mxu0 0.0
    %3243 = vmatprep.subr.mxu0 0.0
    %3244 = vmatpush1.msra.mxu0 0.0
    %3245 = vmatprep.subr.mxu0 0.0
    %3246 = vmatpush1.msra.mxu0 0.0
    %3247 = vmatprep.subr.mxu0 0.0
    %3248 = vmatpush1.msra.mxu0 0.0
    %3249 = vmatprep.subr.mxu0 0.0
    %3250 = vmatpush1.msra.mxu0 0.0
    %3251 = vmatprep.subr.mxu0 0.0
    %3252 = vmatpush1.msra.mxu0 0.0
    %3253 = vmatprep.subr.mxu0 0.0
    %3254 = vmatpush1.msra.mxu0 0.0
    %3255 = vmatprep.subr.mxu0 0.0
    %3256 = vmatpush1.msra.mxu0 0.0
    %3257 = vmatprep.subr.mxu0 0.0
    %3258 = vmatpush1.msra.mxu0 0.0
    %3259 = vmatprep.subr.mxu0 0.0
    %3260 = vmatpush1.msra.mxu0 0.0
    %3261 = vmatprep.mubr.f32.mxu0 0.0
    %3262 = vmatmul.mubr.f32.gmra.mrb[0].mxu0 %v2955
    %v3263 = vpop.f32.mrb[0].mxu0
    %v3264 = vadd.f32 0.0, %v3263
    %v3265 = vpop.f32.mrb[0].mxu0
    %v3266 = vadd.f32 0.0, %v3265
    %3267 = vdwg.mxu0
    %v3272 = vrot.slane %v3193, 2
    %v3273 = vrot.slane %v3195, 2
    %v3274 = vrot.slane %v3264, 2
    %v3275 = vrot.slane %v3266, 2
    %v3280 = vadd.f32 %v360, %v3272
    %v3281 = vadd.f32 %v362, %v3273
    %v3282 = vadd.f32 %v437, %v3274
    %v3283 = vadd.f32 %v439, %v3275
    %v3284 = vxor.u32 %v3280, 2147483648
    %v3285 = vmul.f32 %v3284, 1.442695
    %v3286 = vpow.pop %v3285
    %v3287 = vadd.f32 %v3286, 1.0
    %v3288 = vrcp.pop %v3287
    %v3289 = vmul.f32 1.0, %v3288
    %v3290 = vxor.u32 %v3281, 2147483648
    %v3291 = vmul.f32 %v3290, 1.442695
    %v3292 = vpow.pop %v3291
    %v3293 = vadd.f32 %v3292, 1.0
    %v3294 = vrcp.pop %v3293
    %v3295 = vmul.f32 1.0, %v3294
    %v3296 = vtanh.pop %v3282
    %v3297 = vxor.u32 %v3283, 2147483648
    %v3298 = vmul.f32 %v3297, 1.442695
    %v3299 = vpow.pop %v3298
    %v3300 = vadd.f32 %v3299, 1.0
    %v3301 = vrcp.pop %v3300
    %v3302 = vmul.f32 1.0, %v3301
    %v3304 = vrot.slane %v2949, 6
    %v3306 = vmul.f32 %v3295, %v3304
    %v3307 = vmul.f32 %v3289, %v3296
    %v3308 = vadd.f32 %v3306, %v3307
    %v3309 = vtanh.pop %v3308
    %v3310 = vmul.f32 %v3302, %v3309
    %v3312 = vrot.slane %v3124, 2
    %v3314 = vrot.slane %v3310, 6
    %v3315 = vrot.slane %v3312, 6
    %3318 = vmatprep.subr.mxu0 %v506
    %3319 = vmatpush1.msra.mxu0 %v505
    %3320 = vmatprep.subr.mxu0 %v510
    %3321 = vmatpush1.msra.mxu0 %v509
    %3322 = vmatprep.subr.mxu0 %v514
    %3323 = vmatpush1.msra.mxu0 %v513
    %3324 = vmatprep.subr.mxu0 %v518
    %3325 = vmatpush1.msra.mxu0 %v517
    %3326 = vmatprep.subr.mxu0 %v522
    %3327 = vmatpush1.msra.mxu0 %v521
    %3328 = vmatprep.subr.mxu0 %v526
    %3329 = vmatpush1.msra.mxu0 %v525
    %3330 = vmatprep.subr.mxu0 %v530
    %3331 = vmatpush1.msra.mxu0 %v529
    %3332 = vmatprep.subr.mxu0 %v534
    %3333 = vmatpush1.msra.mxu0 %v533
    %3334 = vmatprep.subr.mxu0 %v538
    %3335 = vmatpush1.msra.mxu0 %v537
    %3336 = vmatprep.subr.mxu0 %v542
    %3337 = vmatpush1.msra.mxu0 %v541
    %3338 = vmatprep.subr.mxu0 %v546
    %3339 = vmatpush1.msra.mxu0 %v545
    %3340 = vmatprep.subr.mxu0 %v550
    %3341 = vmatpush1.msra.mxu0 %v549
    %3342 = vmatprep.subr.mxu0 %v554
    %3343 = vmatpush1.msra.mxu0 %v553
    %3344 = vmatprep.subr.mxu0 %v558
    %3345 = vmatpush1.msra.mxu0 %v557
    %3346 = vmatprep.subr.mxu0 %v562
    %3347 = vmatpush1.msra.mxu0 %v561
    %3348 = vmatprep.subr.mxu0 %v566
    %3349 = vmatpush1.msra.mxu0 %v565
    %3350 = vmatprep.subr.mxu0 %v570
    %3351 = vmatpush1.msra.mxu0 %v569
    %3352 = vmatprep.subr.mxu0 %v574
    %3353 = vmatpush1.msra.mxu0 %v573
    %3354 = vmatprep.subr.mxu0 %v578
    %3355 = vmatpush1.msra.mxu0 %v577
    %3356 = vmatprep.subr.mxu0 %v582
    %3357 = vmatpush1.msra.mxu0 %v581
    %3358 = vmatprep.subr.mxu0 %v586
    %3359 = vmatpush1.msra.mxu0 %v585
    %3360 = vmatprep.subr.mxu0 %v590
    %3361 = vmatpush1.msra.mxu0 %v589
    %3362 = vmatprep.subr.mxu0 %v594
    %3363 = vmatpush1.msra.mxu0 %v593
    %3364 = vmatprep.subr.mxu0 %v598
    %3365 = vmatpush1.msra.mxu0 %v597
    %3366 = vmatprep.subr.mxu0 %v602
    %3367 = vmatpush1.msra.mxu0 %v601
    %3368 = vmatprep.subr.mxu0 %v606
    %3369 = vmatpush1.msra.mxu0 %v605
    %3370 = vmatprep.subr.mxu0 %v610
    %3371 = vmatpush1.msra.mxu0 %v609
    %3372 = vmatprep.subr.mxu0 %v614
    %3373 = vmatpush1.msra.mxu0 %v613
    %3374 = vmatprep.subr.mxu0 %v618
    %3375 = vmatpush1.msra.mxu0 %v617
    %3376 = vmatprep.subr.mxu0 %v622
    %3377 = vmatpush1.msra.mxu0 %v621
    %3378 = vmatprep.subr.mxu0 %v626
    %3379 = vmatpush1.msra.mxu0 %v625
    %3380 = vmatprep.subr.mxu0 %v630
    %3381 = vmatpush1.msra.mxu0 %v629
    %3382 = vmatprep.mubr.f32.mxu0 %v3315
    %3383 = vmatmul.mubr.f32.gmra.mrb[0].mxu0 %v3314
    %v3384 = vpop.f32.mrb[0].mxu0
    %v3385 = vadd.f32 %v638, %v3384
    %v3386 = vpop.f32.mrb[0].mxu0
    %v3387 = vadd.f32 %v642, %v3386
    %3388 = vdwg.mxu0
    %3389 = vmatprep.subr.mxu0 %v508
    %3390 = vmatpush1.msra.mxu0 %v507
    %3391 = vmatprep.subr.mxu0 %v512
    %3392 = vmatpush1.msra.mxu0 %v511
    %3393 = vmatprep.subr.mxu0 %v516
    %3394 = vmatpush1.msra.mxu0 %v515
    %3395 = vmatprep.subr.mxu0 %v520
    %3396 = vmatpush1.msra.mxu0 %v519
    %3397 = vmatprep.subr.mxu0 %v524
    %3398 = vmatpush1.msra.mxu0 %v523
    %3399 = vmatprep.subr.mxu0 %v528
    %3400 = vmatpush1.msra.mxu0 %v527
    %3401 = vmatprep.subr.mxu0 %v532
    %3402 = vmatpush1.msra.mxu0 %v531
    %3403 = vmatprep.subr.mxu0 %v536
    %3404 = vmatpush1.msra.mxu0 %v535
    %3405 = vmatprep.subr.mxu0 %v540
    %3406 = vmatpush1.msra.mxu0 %v539
    %3407 = vmatprep.subr.mxu0 %v544
    %3408 = vmatpush1.msra.mxu0 %v543
    %3409 = vmatprep.subr.mxu0 %v548
    %3410 = vmatpush1.msra.mxu0 %v547
    %3411 = vmatprep.subr.mxu0 %v552
    %3412 = vmatpush1.msra.mxu0 %v551
    %3413 = vmatprep.subr.mxu0 %v556
    %3414 = vmatpush1.msra.mxu0 %v555
    %3415 = vmatprep.subr.mxu0 %v560
    %3416 = vmatpush1.msra.mxu0 %v559
    %3417 = vmatprep.subr.mxu0 %v564
    %3418 = vmatpush1.msra.mxu0 %v563
    %3419 = vmatprep.subr.mxu0 %v568
    %3420 = vmatpush1.msra.mxu0 %v567
    %3421 = vmatprep.subr.mxu0 %v572
    %3422 = vmatpush1.msra.mxu0 %v571
    %3423 = vmatprep.subr.mxu0 %v576
    %3424 = vmatpush1.msra.mxu0 %v575
    %3425 = vmatprep.subr.mxu0 %v580
    %3426 = vmatpush1.msra.mxu0 %v579
    %3427 = vmatprep.subr.mxu0 %v584
    %3428 = vmatpush1.msra.mxu0 %v583
    %3429 = vmatprep.subr.mxu0 %v588
    %3430 = vmatpush1.msra.mxu0 %v587
    %3431 = vmatprep.subr.mxu0 %v592
    %3432 = vmatpush1.msra.mxu0 %v591
    %3433 = vmatprep.subr.mxu0 %v596
    %3434 = vmatpush1.msra.mxu0 %v595
    %3435 = vmatprep.subr.mxu0 %v600
    %3436 = vmatpush1.msra.mxu0 %v599
    %3437 = vmatprep.subr.mxu0 %v604
    %3438 = vmatpush1.msra.mxu0 %v603
    %3439 = vmatprep.subr.mxu0 %v608
    %3440 = vmatpush1.msra.mxu0 %v607
    %3441 = vmatprep.subr.mxu0 %v612
    %3442 = vmatpush1.msra.mxu0 %v611
    %3443 = vmatprep.subr.mxu0 %v616
    %3444 = vmatpush1.msra.mxu0 %v615
    %3445 = vmatprep.subr.mxu0 %v620
    %3446 = vmatpush1.msra.mxu0 %v619
    %3447 = vmatprep.subr.mxu0 %v624
    %3448 = vmatpush1.msra.mxu0 %v623
    %3449 = vmatprep.subr.mxu0 %v628
    %3450 = vmatpush1.msra.mxu0 %v627
    %3451 = vmatprep.subr.mxu0 %v632
    %3452 = vmatpush1.msra.mxu0 %v631
    %3453 = vmatprep.mubr.f32.mxu0 %v3315
    %3454 = vmatmul.mubr.f32.gmra.mrb[0].mxu0 %v3314
    %v3455 = vpop.f32.mrb[0].mxu0
    %v3456 = vadd.f32 %v646, %v3455
    %v3457 = vpop.f32.mrb[0].mxu0
    %v3458 = vadd.f32 %v650, %v3457
    %3459 = vdwg.mxu0
    %v3460 = vxor.u32 %v3385, 2147483648
    %v3461 = vmul.f32 %v3460, 1.442695
    %v3462 = vpow.pop %v3461
    %v3463 = vadd.f32 %v3462, 1.0
    %v3464 = vrcp.pop %v3463
    %v3465 = vmul.f32 1.0, %v3464
    %v3466 = vxor.u32 %v3387, 2147483648
    %v3467 = vmul.f32 %v3466, 1.442695
    %v3468 = vpow.pop %v3467
    %v3469 = vadd.f32 %v3468, 1.0
    %v3470 = vrcp.pop %v3469
    %v3471 = vmul.f32 1.0, %v3470
    %v3472 = vtanh.pop %v3456
    %v3473 = vxor.u32 %v3458, 2147483648
    %v3474 = vmul.f32 %v3473, 1.442695
    %v3475 = vpow.pop %v3474
    %v3476 = vadd.f32 %v3475, 1.0
    %v3477 = vrcp.pop %v3476
    %v3478 = vmul.f32 1.0, %v3477
    %v3479 = vmul.f32 %v3471, %v3122
    %v3480 = vmul.f32 %v3465, %v3472
    %v3481 = vadd.f32 %v3479, %v3480
    %v3482 = vtanh.pop %v3481
    %v3483 = vmul.f32 %v3478, %v3482
    %v3484 = vmax.f32 %v3125, %v3483
    %v3485 = vld [vmem:[%s10] sm:$0xff]
    %v3486 = vld [vmem:[%s10 + $0x8] sm:$0xff]
    %v3487 = vld [vmem:[%s10 + $0x10] sm:$0xff]
    %v3488 = vld [vmem:[%s10 + $0x18] sm:$0xff]
    %v3489 = vld [vmem:[%s10 + $0x20] sm:$0xff]
    %v3490 = vld [vmem:[%s10 + $0x28] sm:$0xff]
    %v3491 = vld [vmem:[%s10 + $0x30] sm:$0xff]
    %v3492 = vld [vmem:[%s10 + $0x38] sm:$0xff]
    %v3493 = vld [vmem:[%s10 + $0x40] sm:$0xff]
    %v3494 = vld [vmem:[%s10 + $0x48] sm:$0xff]
    %v3495 = vld [vmem:[%s10 + $0x50] sm:$0xff]
    %v3496 = vld [vmem:[%s10 + $0x58] sm:$0xff]
    %v3497 = vld [vmem:[%s10 + $0x60] sm:$0xff]
    %v3498 = vld [vmem:[%s10 + $0x68] sm:$0xff]
    %v3499 = vld [vmem:[%s10 + $0x70] sm:$0xff]
    %v3500 = vld [vmem:[%s10 + $0x78] sm:$0xff]
    %v3501 = vld [vmem:[%s11] sm:$0x1]
    %v3503 = vlaneseq
    %v3504 = vshrl.u32 %v3503, 7
    %v3505 = vsub.s32 0, %v3504
    %v3506 = vrot.slane %v3501, %v3505
    %3508 = vmatprep.subr.mxu0 0.0
    %3509 = vmatpush1.msra.mxu0 %v3485
    %3510 = vmatprep.subr.mxu0 0.0
    %3511 = vmatpush1.msra.mxu0 %v3486
    %3512 = vmatprep.subr.mxu0 0.0
    %3513 = vmatpush1.msra.mxu0 %v3487
    %3514 = vmatprep.subr.mxu0 0.0
    %3515 = vmatpush1.msra.mxu0 %v3488
    %3516 = vmatprep.subr.mxu0 0.0
    %3517 = vmatpush1.msra.mxu0 %v3489
    %3518 = vmatprep.subr.mxu0 0.0
    %3519 = vmatpush1.msra.mxu0 %v3490
    %3520 = vmatprep.subr.mxu0 0.0
    %3521 = vmatpush1.msra.mxu0 %v3491
    %3522 = vmatprep.subr.mxu0 0.0
    %3523 = vmatpush1.msra.mxu0 %v3492
    %3524 = vmatprep.subr.mxu0 0.0
    %3525 = vmatpush1.msra.mxu0 %v3493
    %3526 = vmatprep.subr.mxu0 0.0
    %3527 = vmatpush1.msra.mxu0 %v3494
    %3528 = vmatprep.subr.mxu0 0.0
    %3529 = vmatpush1.msra.mxu0 %v3495
    %3530 = vmatprep.subr.mxu0 0.0
    %3531 = vmatpush1.msra.mxu0 %v3496
    %3532 = vmatprep.subr.mxu0 0.0
    %3533 = vmatpush1.msra.mxu0 %v3497
    %3534 = vmatprep.subr.mxu0 0.0
    %3535 = vmatpush1.msra.mxu0 %v3498
    %3536 = vmatprep.subr.mxu0 0.0
    %3537 = vmatpush1.msra.mxu0 %v3499
    %3538 = vmatprep.subr.mxu0 0.0
    %3539 = vmatpush1.msra.mxu0 %v3500
    %3540 = vmatprep.subr.mxu0 0.0
    %3541 = vmatpush1.msra.mxu0 0.0
    %3542 = vmatprep.subr.mxu0 0.0
    %3543 = vmatpush1.msra.mxu0 0.0
    %3544 = vmatprep.subr.mxu0 0.0
    %3545 = vmatpush1.msra.mxu0 0.0
    %3546 = vmatprep.subr.mxu0 0.0
    %3547 = vmatpush1.msra.mxu0 0.0
    %3548 = vmatprep.subr.mxu0 0.0
    %3549 = vmatpush1.msra.mxu0 0.0
    %3550 = vmatprep.subr.mxu0 0.0
    %3551 = vmatpush1.msra.mxu0 0.0
    %3552 = vmatprep.subr.mxu0 0.0
    %3553 = vmatpush1.msra.mxu0 0.0
    %3554 = vmatprep.subr.mxu0 0.0
    %3555 = vmatpush1.msra.mxu0 0.0
    %3556 = vmatprep.subr.mxu0 0.0
    %3557 = vmatpush1.msra.mxu0 0.0
    %3558 = vmatprep.subr.mxu0 0.0
    %3559 = vmatpush1.msra.mxu0 0.0
    %3560 = vmatprep.subr.mxu0 0.0
    %3561 = vmatpush1.msra.mxu0 0.0
    %3562 = vmatprep.subr.mxu0 0.0
    %3563 = vmatpush1.msra.mxu0 0.0
    %3564 = vmatprep.subr.mxu0 0.0
    %3565 = vmatpush1.msra.mxu0 0.0
    %3566 = vmatprep.subr.mxu0 0.0
    %3567 = vmatpush1.msra.mxu0 0.0
    %3568 = vmatprep.subr.mxu0 0.0
    %3569 = vmatpush1.msra.mxu0 0.0
    %3570 = vmatprep.subr.mxu0 0.0
    %3571 = vmatpush1.msra.mxu0 0.0
    %3572 = vmatprep.mubr.f32.mxu0 0.0
    %3573 = vmatmul.mubr.f32.gmra.mrb[0].mxu0 %v3484
    %v3574 = vpop.f32.mrb[0].mxu0
    %v3575 = vadd.f32 %v3506, %v3574
    %v3576 = vpop.f32.mrb[0].mxu0
    %3577 = vdwg.mxu0
    %vm3578 = vcmask 320512
    %3579 = vst.msk [vmem:[#allocation8] sm:$0x3] %vm3578, %v3575
    // Predicated region
    $region62: #{lstm_mlp_forward.1} parent=1 // pred_check
      _
    $region63: #{lstm_mlp_forward.1} parent=1 // pred_check_branch
      %3581 = sbr.rel (0) target = $region65
    $region64: #{lstm_mlp_forward.1} parent=1 // pred_region
      %s3583 = ssub.s32 32, 32
      %3584 = vsyncadd [#allocation4], %s3583
      %s3586 = sshll.u32 [#allocation8], 4
      %s3587 = int_to_ptr.vmem [resolvable:$true] %s3586
      %3589 = dma.vmem_to_hbm [thread:$0]  %s3587, 32, %s12, [#allocation4]
    $region65: #{lstm_mlp_forward.1} parent=1 // pred_fallthru
      _
    // Predicated region
    $region66: #{lstm_mlp_forward.1} parent=1 // pred_check
      _
    $region67: #{lstm_mlp_forward.1} parent=1 // pred_check_branch
      %3591 = sbr.rel (0) target = $region69
    $region68: #{lstm_mlp_forward.1} parent=1 // pred_region
      %3592 = dma.done [#allocation4], 32
    $region69: #{lstm_mlp_forward.1} parent=1 // pred_fallthru
      _
    %3593 = vsyncpa [#allocation3], 1
    %3594 = vsyncpa [#allocation6], 1
    %3595 = vsyncpa [#allocation4], 1

</llo_original>
